<compile_context>
chip_gen: v7x
topology: tpu7x:2x2x1
jax: 0.10.0
libtpu: 0.0.40
codegen_flags: <defaults>
</compile_context>

<pallas_src>
import jax
import jax.numpy as jnp
from jax.experimental import pallas as pl
from jax.experimental.pallas import tpu as pltpu

INPUT_DIM = 784
HIDDEN_DIM = 264
OUTPUT_DIM = 10
SIDE_LAYERS = [128, 64]
BATCH = 8

HEAD_WIDTH = 128  # each log-softmax head is stored lane-dense, padded to 128


def _align128(n):
    return ((n + 127) // 128) * 128


HIDDEN_PAD = _align128(HIDDEN_DIM)  # 384: explicit zero-pad of the hidden width

# 128-aligned offsets inside the single packed bias vector.
OFF_B1 = 0
OFF_B2 = OFF_B1 + HIDDEN_PAD                   # 384
OFF_B3 = OFF_B2 + HIDDEN_PAD                   # 768
OFF_BS1 = OFF_B3 + _align128(OUTPUT_DIM)       # 896
OFF_BS2 = OFF_BS1 + _align128(SIDE_LAYERS[0])  # 1024
OFF_BS3 = OFF_BS2 + _align128(SIDE_LAYERS[1])  # 1152
BIAS_WIDTH = OFF_BS3 + _align128(OUTPUT_DIM)   # 1280


def _log_softmax(z):
    m = jnp.max(z, axis=1, keepdims=True)
    zs = z - m
    lse = jnp.log(jnp.sum(jnp.exp(zs), axis=1, keepdims=True))
    return zs - lse


def sidepass_kernel(
    x_ref,
    w1_ref, w2_ref, w3_ref,
    ws1x_ref, ws1h1_ref, ws1h2_ref,
    ws2_ref, ws3_ref,
    bias_ref,
    main_ref, side_ref,
):
    f32 = jnp.float32
    # f32 tile from HBM, bf16 cast on the VPU (hidden under MXU work).
    x = x_ref[...].astype(jnp.bfloat16)  # (TB, 784)

    # Static slices of the single packed f32 bias vector (zero-padded tails).
    b1 = bias_ref[:, OFF_B1:OFF_B1 + HIDDEN_PAD]
    b2 = bias_ref[:, OFF_B2:OFF_B2 + HIDDEN_PAD]
    b3 = bias_ref[:, OFF_B3:OFF_B3 + OUTPUT_DIM]
    bs1 = bias_ref[:, OFF_BS1:OFF_BS1 + SIDE_LAYERS[0]]   # already includes b3@ws1mo fold
    bs2 = bias_ref[:, OFF_BS2:OFF_BS2 + SIDE_LAYERS[1]]
    bs3 = bias_ref[:, OFF_BS3:OFF_BS3 + OUTPUT_DIM]

    # ---- main path: Linear -> Tanh -> Linear -> Tanh -> Linear ----
    # Hidden width is zero-padded 264 -> 384; padded columns are exactly
    # tanh(0 + 0) = 0, so all downstream matmuls are mathematically unchanged.
    h1 = jnp.tanh(jnp.dot(x, w1_ref[...], preferred_element_type=f32) + b1)
    h1b = h1.astype(jnp.bfloat16)
    h2 = jnp.tanh(jnp.dot(h1b, w2_ref[...], preferred_element_type=f32) + b2)
    h2b = h2.astype(jnp.bfloat16)
    main_out = jnp.dot(h2b, w3_ref[...], preferred_element_type=f32) + b3

    # ---- side path: first layer on concat([x, h1, h2, main_out]) expressed
    #      as block matmuls; the main_out block is folded into ws1h2/bs1 at
    #      prep time, so only three MXU pushes remain here ----
    s = (
        jnp.dot(x, ws1x_ref[...], preferred_element_type=f32)
        + jnp.dot(h1b, ws1h1_ref[...], preferred_element_type=f32)
        + jnp.dot(h2b, ws1h2_ref[...], preferred_element_type=f32)
        + bs1
    )
    s = jnp.tanh(s).astype(jnp.bfloat16)
    s = jnp.tanh(jnp.dot(s, ws2_ref[...], preferred_element_type=f32) + bs2)
    s = s.astype(jnp.bfloat16)
    side_out = jnp.dot(s, ws3_ref[...], preferred_element_type=f32) + bs3

    # ---- LogSoftmax(dim=1), one lane-dense 128-wide store per head ----
    main_lp = _log_softmax(main_out)
    side_lp = _log_softmax(side_out)
    tb = main_lp.shape[0]
    pad = jnp.zeros((tb, HEAD_WIDTH - OUTPUT_DIM), f32)
    main_ref[...] = jnp.concatenate([main_lp, pad], axis=1)
    side_ref[...] = jnp.concatenate([side_lp, pad], axis=1)


def make_params(key):
    """Deterministic f32 parameter init (shapes match the PyTorch module)."""
    dims_main = [(INPUT_DIM, HIDDEN_DIM), (HIDDEN_DIM, HIDDEN_DIM), (HIDDEN_DIM, OUTPUT_DIM)]
    main_features = INPUT_DIM + HIDDEN_DIM + HIDDEN_DIM + OUTPUT_DIM  # 1322
    side_dims = [main_features] + SIDE_LAYERS + [OUTPUT_DIM]
    dims_side = [(side_dims[i], side_dims[i + 1]) for i in range(len(side_dims) - 1)]

    params = {}
    keys = jax.random.split(key, 2 * (len(dims_main) + len(dims_side)))
    ki = 0

    def linear(din, dout):
        nonlocal ki
        bound = 1.0 / jnp.sqrt(jnp.float32(din))
        w = jax.random.uniform(keys[ki], (din, dout), jnp.float32, -bound, bound)
        ki += 1
        b = jax.random.uniform(keys[ki], (1, dout), jnp.float32, -bound, bound)
        ki += 1
        return w, b

    params["w1"], params["b1"] = linear(*dims_main[0])
    params["w2"], params["b2"] = linear(*dims_main[1])
    params["w3"], params["b3"] = linear(*dims_main[2])
    params["ws1"], params["bs1"] = linear(*dims_side[0])  # (1322, 128)
    params["ws2"], params["bs2"] = linear(*dims_side[1])  # (128, 64)
    params["ws3"], params["bs3"] = linear(*dims_side[2])  # (64, 10)
    return params


def prepare_params(params):
    """One-time prep: bf16 weights, ws1mo fold, 384-lane zero-pad, packed biases."""
    q = lambda w: w.astype(jnp.bfloat16).astype(jnp.float32)  # bf16-round in f32
    bf = lambda w: w.astype(jnp.bfloat16)

    ws1 = params["ws1"]
    ws1x = ws1[:INPUT_DIM]
    ws1h1 = ws1[INPUT_DIM:INPUT_DIM + HIDDEN_DIM]
    ws1h2 = ws1[INPUT_DIM + HIDDEN_DIM:INPUT_DIM + 2 * HIDDEN_DIM]
    ws1mo = ws1[INPUT_DIM + 2 * HIDDEN_DIM:]  # (10, 128)

    # Fold the K=10 main_out block of ws1 into the h2 block (exact for the
    # bf16-rounded reference weights, modulo one extra bf16 rounding).
    ws1h2_eff = q(ws1h2) + q(params["w3"]) @ q(ws1mo)          # (264, 128)
    bs1_eff = params["bs1"] + params["b3"] @ q(ws1mo)           # (1, 128)

    def pad_rows(w, rows):
        return jnp.pad(w, ((0, rows - w.shape[0]), (0, 0)))

    def pad_cols(w, cols):
        return jnp.pad(w, ((0, 0), (0, cols - w.shape[1])))

    w1 = pad_cols(params["w1"], HIDDEN_PAD)                       # (784, 384)
    w2 = pad_cols(pad_rows(params["w2"], HIDDEN_PAD), HIDDEN_PAD)  # (384, 384)
    w3 = pad_rows(params["w3"], HIDDEN_PAD)                        # (384, 10)
    ws1h1p = pad_rows(ws1h1, HIDDEN_PAD)                           # (384, 128)
    ws1h2p = pad_rows(ws1h2_eff, HIDDEN_PAD)                       # (384, 128)

    bias = jnp.zeros((1, BIAS_WIDTH), jnp.float32)
    bias = bias.at[:, OFF_B1:OFF_B1 + HIDDEN_DIM].set(params["b1"])
    bias = bias.at[:, OFF_B2:OFF_B2 + HIDDEN_DIM].set(params["b2"])
    bias = bias.at[:, OFF_B3:OFF_B3 + OUTPUT_DIM].set(params["b3"])
    bias = bias.at[:, OFF_BS1:OFF_BS1 + SIDE_LAYERS[0]].set(bs1_eff)
    bias = bias.at[:, OFF_BS2:OFF_BS2 + SIDE_LAYERS[1]].set(params["bs2"])
    bias = bias.at[:, OFF_BS3:OFF_BS3 + OUTPUT_DIM].set(params["bs3"])

    return {
        "w1": bf(w1), "w2": bf(w2), "w3": bf(w3),
        "ws1x": bf(ws1x), "ws1h1": bf(ws1h1p), "ws1h2": bf(ws1h2p),
        "ws2": bf(params["ws2"]), "ws3": bf(params["ws3"]),
        "bias": bias,
    }


def _pick_tile(batch):
    # Big batches: 128-multiple tiles up to 512, chosen so num_tiles >= 2
    # (keeps both v7x TensorCores busy).  Small batches: 16-row floor.
    if batch >= 256:
        return max(128, min(512, (batch // 2) // 128 * 128))
    if batch >= 128:
        return 128
    return max(16, -(-batch // 16) * 16)


@jax.jit
def sidepass_forward(x_img, prep):
    batch = x_img.shape[0]
    x = x_img.reshape(batch, -1).astype(jnp.float32)  # (B, 784) f32; bf16 cast in-kernel

    tb = _pick_tile(batch)
    padded = -(-batch // tb) * tb
    if padded != batch:
        x = jnp.pad(x, ((0, padded - batch), (0, 0)))
    num_tiles = padded // tb

    row_map = lambda i: (i, 0)
    const_map = lambda i: (0, 0)  # weights stay VMEM-resident across the grid
    w_spec = lambda a: pl.BlockSpec(a.shape, const_map)

    in_specs = [
        pl.BlockSpec((tb, INPUT_DIM), row_map),
        w_spec(prep["w1"]), w_spec(prep["w2"]), w_spec(prep["w3"]),
        w_spec(prep["ws1x"]), w_spec(prep["ws1h1"]), w_spec(prep["ws1h2"]),
        w_spec(prep["ws2"]), w_spec(prep["ws3"]),
        w_spec(prep["bias"]),
    ]

    main_packed, side_packed = pl.pallas_call(
        sidepass_kernel,
        out_shape=(
            jax.ShapeDtypeStruct((padded, HEAD_WIDTH), jnp.float32),
            jax.ShapeDtypeStruct((padded, HEAD_WIDTH), jnp.float32),
        ),
        grid=(num_tiles,),
        in_specs=in_specs,
        out_specs=(
            pl.BlockSpec((tb, HEAD_WIDTH), row_map),
            pl.BlockSpec((tb, HEAD_WIDTH), row_map),
        ),
        compiler_params=pltpu.CompilerParams(
            dimension_semantics=("parallel",),   # shards grid steps across TCs on v7x
            vmem_limit_bytes=32 << 20,
        ),
    )(
        x,
        prep["w1"], prep["w2"], prep["w3"],
        prep["ws1x"], prep["ws1h1"], prep["ws1h2"],
        prep["ws2"], prep["ws3"],
        prep["bias"],
    )

    main_logp = main_packed[:batch, :OUTPUT_DIM]
    side_logp = side_packed[:batch, :OUTPUT_DIM]
    return main_logp, side_logp


def sidepass_reference(x_img, params):
    """Plain-JAX reference matching the PyTorch forward (bf16-rounded weights)."""
    q = lambda w: w.astype(jnp.bfloat16).astype(jnp.float32)
    batch = x_img.shape[0]
    x = x_img.reshape(batch, -1).astype(jnp.bfloat16).astype(jnp.float32)
    h1 = jnp.tanh(x @ q(params["w1"]) + params["b1"])
    h2 = jnp.tanh(h1 @ q(params["w2"]) + params["b2"])
    mo = h2 @ q(params["w3"]) + params["b3"]
    feats = jnp.concatenate([x, h1, h2, mo], axis=1)
    s = jnp.tanh(feats @ q(params["ws1"]) + params["bs1"])
    s = jnp.tanh(s @ q(params["ws2"]) + params["bs2"])
    so = s @ q(params["ws3"]) + params["bs3"]
    return jax.nn.log_softmax(mo, axis=1), jax.nn.log_softmax(so, axis=1)


if __name__ == "__main__":
    key = jax.random.PRNGKey(0)
    k_param, k_x = jax.random.split(key)
    params = make_params(k_param)
    prep = prepare_params(params)  # one-time prep (fold + pad + bf16 cast + bias pack)

    # MNIST-style input (B, 1, 28, 28); flattened to (B, 784) in the wrapper.
    x_img = jax.random.normal(k_x, (BATCH, 1, 28, 28), dtype=jnp.float32)

    main_logp, side_logp = sidepass_forward(x_img, prep)
    jax.block_until_ready((main_logp, side_logp))

    ref_main, ref_side = sidepass_reference(x_img, params)
    assert main_logp.shape == (BATCH, OUTPUT_DIM) and side_logp.shape == (BATCH, OUTPUT_DIM)
    assert jnp.allclose(main_logp, ref_main, atol=2e-2, rtol=2e-2)
    assert jnp.allclose(side_logp, ref_side, atol=2e-2, rtol=2e-2)

    print("KERNEL_OK")
</pallas_src>

<mosaic_0001>
module attributes {stable_mosaic.version = 11 : i64} {
  func.func @sidepass_kernel(%arg0: i32, %arg1: memref<16x784xf32, #tpu.memory_space<vmem>>, %arg2: memref<784x384xbf16, #tpu.memory_space<vmem>>, %arg3: memref<384x384xbf16, #tpu.memory_space<vmem>>, %arg4: memref<384x10xbf16, #tpu.memory_space<vmem>>, %arg5: memref<784x128xbf16, #tpu.memory_space<vmem>>, %arg6: memref<384x128xbf16, #tpu.memory_space<vmem>>, %arg7: memref<384x128xbf16, #tpu.memory_space<vmem>>, %arg8: memref<128x64xbf16, #tpu.memory_space<vmem>>, %arg9: memref<64x10xbf16, #tpu.memory_space<vmem>>, %arg10: memref<1x1280xf32, #tpu.memory_space<vmem>>, %arg11: memref<16x128xf32, #tpu.memory_space<vmem>>, %arg12: memref<16x128xf32, #tpu.memory_space<vmem>>) attributes {dimension_semantics = [#tpu.dimension_semantics<parallel>], iteration_bounds = array<i64: 1>, scalar_prefetch = 0 : i64, scratch_operands = 0 : i64, tpu.core_type = #tpu.core_type<tc>, window_params = [{transform_indices = @transform_0, window_bounds = array<i64: 16, 784>}, {pipeline_mode = #tpu.pipeline_mode<synchronous>, transform_indices = @transform_1, window_bounds = array<i64: 784, 384>}, {pipeline_mode = #tpu.pipeline_mode<synchronous>, transform_indices = @transform_2, window_bounds = array<i64: 384, 384>}, {pipeline_mode = #tpu.pipeline_mode<synchronous>, transform_indices = @transform_3, window_bounds = array<i64: 384, 10>}, {pipeline_mode = #tpu.pipeline_mode<synchronous>, transform_indices = @transform_4, window_bounds = array<i64: 784, 128>}, {pipeline_mode = #tpu.pipeline_mode<synchronous>, transform_indices = @transform_5, window_bounds = array<i64: 384, 128>}, {pipeline_mode = #tpu.pipeline_mode<synchronous>, transform_indices = @transform_6, window_bounds = array<i64: 384, 128>}, {pipeline_mode = #tpu.pipeline_mode<synchronous>, transform_indices = @transform_7, window_bounds = array<i64: 128, 64>}, {pipeline_mode = #tpu.pipeline_mode<synchronous>, transform_indices = @transform_8, window_bounds = array<i64: 64, 10>}, {pipeline_mode = #tpu.pipeline_mode<synchronous>, transform_indices = @transform_9, window_bounds = array<i64: 1, 1280>}, {transform_indices = @transform_10, window_bounds = array<i64: 16, 128>}, {transform_indices = @transform_11, window_bounds = array<i64: 16, 128>}]} {
    %c0 = arith.constant 0 : index
    %c0_0 = arith.constant 0 : index
    %0 = vector.load %arg1[%c0, %c0_0] : memref<16x784xf32, #tpu.memory_space<vmem>>, vector<16x784xf32>
    %1 = arith.truncf %0 : vector<16x784xf32> to vector<16x784xbf16>
    %c0_1 = arith.constant 0 : index
    %c0_2 = arith.constant 0 : index
    %2 = vector.load %arg10[%c0_1, %c0_2] : memref<1x1280xf32, #tpu.memory_space<vmem>>, vector<1x384xf32>
    %c0_3 = arith.constant 0 : index
    %c384 = arith.constant 384 : index
    %3 = vector.load %arg10[%c0_3, %c384] : memref<1x1280xf32, #tpu.memory_space<vmem>>, vector<1x384xf32>
    %c0_4 = arith.constant 0 : index
    %c768 = arith.constant 768 : index
    %4 = vector.load %arg10[%c0_4, %c768] : memref<1x1280xf32, #tpu.memory_space<vmem>>, vector<1x10xf32>
    %c0_5 = arith.constant 0 : index
    %c896 = arith.constant 896 : index
    %5 = vector.load %arg10[%c0_5, %c896] : memref<1x1280xf32, #tpu.memory_space<vmem>>, vector<1x128xf32>
    %c0_6 = arith.constant 0 : index
    %c1024 = arith.constant 1024 : index
    %6 = vector.load %arg10[%c0_6, %c1024] : memref<1x1280xf32, #tpu.memory_space<vmem>>, vector<1x64xf32>
    %c0_7 = arith.constant 0 : index
    %c1152 = arith.constant 1152 : index
    %7 = vector.load %arg10[%c0_7, %c1152] : memref<1x1280xf32, #tpu.memory_space<vmem>>, vector<1x10xf32>
    %c0_8 = arith.constant 0 : index
    %c0_9 = arith.constant 0 : index
    %8 = vector.load %arg2[%c0_8, %c0_9] : memref<784x384xbf16, #tpu.memory_space<vmem>>, vector<784x384xbf16>
    %cst = arith.constant dense<0.000000e+00> : vector<16x384xf32>
    %9 = tpu.matmul %1, %8, %cst {dimension_numbers = #tpu.dot_dimension_numbers<[1], [0], [0], [1], [0, 0, 1, 1], [], []>} : vector<16x784xbf16>, vector<784x384xbf16>, vector<16x384xf32> -> vector<16x384xf32>
    %10 = vector.broadcast %2 : vector<1x384xf32> to vector<16x384xf32>
    %11 = arith.addf %9, %10 : vector<16x384xf32>
    %12 = math.tanh %11 : vector<16x384xf32>
    %13 = arith.truncf %12 : vector<16x384xf32> to vector<16x384xbf16>
    %c0_10 = arith.constant 0 : index
    %c0_11 = arith.constant 0 : index
    %14 = vector.load %arg3[%c0_10, %c0_11] : memref<384x384xbf16, #tpu.memory_space<vmem>>, vector<384x384xbf16>
    %cst_12 = arith.constant dense<0.000000e+00> : vector<16x384xf32>
    %15 = tpu.matmul %13, %14, %cst_12 {dimension_numbers = #tpu.dot_dimension_numbers<[1], [0], [0], [1], [0, 0, 1, 1], [], []>} : vector<16x384xbf16>, vector<384x384xbf16>, vector<16x384xf32> -> vector<16x384xf32>
    %16 = vector.broadcast %3 : vector<1x384xf32> to vector<16x384xf32>
    %17 = arith.addf %15, %16 : vector<16x384xf32>
    %18 = math.tanh %17 : vector<16x384xf32>
    %19 = arith.truncf %18 : vector<16x384xf32> to vector<16x384xbf16>
    %c0_13 = arith.constant 0 : index
    %c0_14 = arith.constant 0 : index
    %20 = vector.load %arg4[%c0_13, %c0_14] : memref<384x10xbf16, #tpu.memory_space<vmem>>, vector<384x10xbf16>
    %cst_15 = arith.constant dense<0.000000e+00> : vector<16x10xf32>
    %21 = tpu.matmul %19, %20, %cst_15 {dimension_numbers = #tpu.dot_dimension_numbers<[1], [0], [0], [1], [0, 0, 1, 1], [], []>} : vector<16x384xbf16>, vector<384x10xbf16>, vector<16x10xf32> -> vector<16x10xf32>
    %22 = vector.broadcast %4 : vector<1x10xf32> to vector<16x10xf32>
    %23 = arith.addf %21, %22 : vector<16x10xf32>
    %c0_16 = arith.constant 0 : index
    %c0_17 = arith.constant 0 : index
    %24 = vector.load %arg5[%c0_16, %c0_17] : memref<784x128xbf16, #tpu.memory_space<vmem>>, vector<784x128xbf16>
    %cst_18 = arith.constant dense<0.000000e+00> : vector<16x128xf32>
    %25 = tpu.matmul %1, %24, %cst_18 {dimension_numbers = #tpu.dot_dimension_numbers<[1], [0], [0], [1], [0, 0, 1, 1], [], []>} : vector<16x784xbf16>, vector<784x128xbf16>, vector<16x128xf32> -> vector<16x128xf32>
    %c0_19 = arith.constant 0 : index
    %c0_20 = arith.constant 0 : index
    %26 = vector.load %arg6[%c0_19, %c0_20] : memref<384x128xbf16, #tpu.memory_space<vmem>>, vector<384x128xbf16>
    %cst_21 = arith.constant dense<0.000000e+00> : vector<16x128xf32>
    %27 = tpu.matmul %13, %26, %cst_21 {dimension_numbers = #tpu.dot_dimension_numbers<[1], [0], [0], [1], [0, 0, 1, 1], [], []>} : vector<16x384xbf16>, vector<384x128xbf16>, vector<16x128xf32> -> vector<16x128xf32>
    %28 = arith.addf %25, %27 : vector<16x128xf32>
    %c0_22 = arith.constant 0 : index
    %c0_23 = arith.constant 0 : index
    %29 = vector.load %arg7[%c0_22, %c0_23] : memref<384x128xbf16, #tpu.memory_space<vmem>>, vector<384x128xbf16>
    %cst_24 = arith.constant dense<0.000000e+00> : vector<16x128xf32>
    %30 = tpu.matmul %19, %29, %cst_24 {dimension_numbers = #tpu.dot_dimension_numbers<[1], [0], [0], [1], [0, 0, 1, 1], [], []>} : vector<16x384xbf16>, vector<384x128xbf16>, vector<16x128xf32> -> vector<16x128xf32>
    %31 = arith.addf %28, %30 : vector<16x128xf32>
    %32 = vector.broadcast %5 : vector<1x128xf32> to vector<16x128xf32>
    %33 = arith.addf %31, %32 : vector<16x128xf32>
    %34 = math.tanh %33 : vector<16x128xf32>
    %35 = arith.truncf %34 : vector<16x128xf32> to vector<16x128xbf16>
    %c0_25 = arith.constant 0 : index
    %c0_26 = arith.constant 0 : index
    %36 = vector.load %arg8[%c0_25, %c0_26] : memref<128x64xbf16, #tpu.memory_space<vmem>>, vector<128x64xbf16>
    %cst_27 = arith.constant dense<0.000000e+00> : vector<16x64xf32>
    %37 = tpu.matmul %35, %36, %cst_27 {dimension_numbers = #tpu.dot_dimension_numbers<[1], [0], [0], [1], [0, 0, 1, 1], [], []>} : vector<16x128xbf16>, vector<128x64xbf16>, vector<16x64xf32> -> vector<16x64xf32>
    %38 = vector.broadcast %6 : vector<1x64xf32> to vector<16x64xf32>
    %39 = arith.addf %37, %38 : vector<16x64xf32>
    %40 = math.tanh %39 : vector<16x64xf32>
    %41 = arith.truncf %40 : vector<16x64xf32> to vector<16x64xbf16>
    %c0_28 = arith.constant 0 : index
    %c0_29 = arith.constant 0 : index
    %42 = vector.load %arg9[%c0_28, %c0_29] : memref<64x10xbf16, #tpu.memory_space<vmem>>, vector<64x10xbf16>
    %cst_30 = arith.constant dense<0.000000e+00> : vector<16x10xf32>
    %43 = tpu.matmul %41, %42, %cst_30 {dimension_numbers = #tpu.dot_dimension_numbers<[1], [0], [0], [1], [0, 0, 1, 1], [], []>} : vector<16x64xbf16>, vector<64x10xbf16>, vector<16x10xf32> -> vector<16x10xf32>
    %44 = vector.broadcast %7 : vector<1x10xf32> to vector<16x10xf32>
    %45 = arith.addf %43, %44 : vector<16x10xf32>
    %cst_31 = arith.constant dense<0xFF800000> : vector<16xf32>
    %46 = vector.multi_reduction <maximumf>, %23, %cst_31 [1] : vector<16x10xf32> to vector<16xf32>
    %47 = vector.shape_cast %46 : vector<16xf32> to vector<16x1xf32>
    %48 = vector.broadcast %47 : vector<16x1xf32> to vector<16x10xf32>
    %49 = arith.subf %23, %48 : vector<16x10xf32>
    %50 = math.exp %49 : vector<16x10xf32>
    %cst_32 = arith.constant dense<0.000000e+00> : vector<16xf32>
    %51 = vector.multi_reduction <add>, %50, %cst_32 [1] : vector<16x10xf32> to vector<16xf32>
    %52 = vector.shape_cast %51 : vector<16xf32> to vector<16x1xf32>
    %53 = math.log %52 : vector<16x1xf32>
    %54 = vector.broadcast %53 : vector<16x1xf32> to vector<16x10xf32>
    %55 = arith.subf %49, %54 : vector<16x10xf32>
    %cst_33 = arith.constant dense<0xFF800000> : vector<16xf32>
    %56 = vector.multi_reduction <maximumf>, %45, %cst_33 [1] : vector<16x10xf32> to vector<16xf32>
    %57 = vector.shape_cast %56 : vector<16xf32> to vector<16x1xf32>
    %58 = vector.broadcast %57 : vector<16x1xf32> to vector<16x10xf32>
    %59 = arith.subf %45, %58 : vector<16x10xf32>
    %60 = math.exp %59 : vector<16x10xf32>
    %cst_34 = arith.constant dense<0.000000e+00> : vector<16xf32>
    %61 = vector.multi_reduction <add>, %60, %cst_34 [1] : vector<16x10xf32> to vector<16xf32>
    %62 = vector.shape_cast %61 : vector<16xf32> to vector<16x1xf32>
    %63 = math.log %62 : vector<16x1xf32>
    %64 = vector.broadcast %63 : vector<16x1xf32> to vector<16x10xf32>
    %65 = arith.subf %59, %64 : vector<16x10xf32>
    %cst_35 = arith.constant 0.000000e+00 : f32
    %66 = vector.broadcast %cst_35 : f32 to vector<16x118xf32>
    %67 = tpu.concatenate %55, %66 in 1 : vector<16x10xf32>, vector<16x118xf32> -> vector<16x128xf32>
    %c0_36 = arith.constant 0 : index
    %c0_37 = arith.constant 0 : index
    %68 = vector.load %arg11[%c0_36, %c0_37] : memref<16x128xf32, #tpu.memory_space<vmem>>, vector<16x128xf32>
    tpu.vector_store %arg11[%c0_36, %c0_37], %67 {strides = array<i32>} : memref<16x128xf32, #tpu.memory_space<vmem>>, vector<16x128xf32>,
    %69 = tpu.concatenate %65, %66 in 1 : vector<16x10xf32>, vector<16x118xf32> -> vector<16x128xf32>
    %c0_38 = arith.constant 0 : index
    %c0_39 = arith.constant 0 : index
    %70 = vector.load %arg12[%c0_38, %c0_39] : memref<16x128xf32, #tpu.memory_space<vmem>>, vector<16x128xf32>
    tpu.vector_store %arg12[%c0_38, %c0_39], %69 {strides = array<i32>} : memref<16x128xf32, #tpu.memory_space<vmem>>, vector<16x128xf32>,
    return
  }
  func.func @transform_0(%arg0: i32) -> (i32, i32) {
    %c0_i32 = arith.constant 0 : i32
    %c0_i32_0 = arith.constant 0 : i32
    return %arg0, %c0_i32 : i32, i32
  }
  func.func @transform_1(%arg0: i32) -> (i32, i32) {
    %c0_i32 = arith.constant 0 : i32
    %c0_i32_0 = arith.constant 0 : i32
    %c0_i32_1 = arith.constant 0 : i32
    return %c0_i32, %c0_i32_0 : i32, i32
  }
  func.func @transform_2(%arg0: i32) -> (i32, i32) {
    %c0_i32 = arith.constant 0 : i32
    %c0_i32_0 = arith.constant 0 : i32
    %c0_i32_1 = arith.constant 0 : i32
    return %c0_i32, %c0_i32_0 : i32, i32
  }
  func.func @transform_3(%arg0: i32) -> (i32, i32) {
    %c0_i32 = arith.constant 0 : i32
    %c0_i32_0 = arith.constant 0 : i32
    %c0_i32_1 = arith.constant 0 : i32
    return %c0_i32, %c0_i32_0 : i32, i32
  }
  func.func @transform_4(%arg0: i32) -> (i32, i32) {
    %c0_i32 = arith.constant 0 : i32
    %c0_i32_0 = arith.constant 0 : i32
    %c0_i32_1 = arith.constant 0 : i32
    return %c0_i32, %c0_i32_0 : i32, i32
  }
  func.func @transform_5(%arg0: i32) -> (i32, i32) {
    %c0_i32 = arith.constant 0 : i32
    %c0_i32_0 = arith.constant 0 : i32
    %c0_i32_1 = arith.constant 0 : i32
    return %c0_i32, %c0_i32_0 : i32, i32
  }
  func.func @transform_6(%arg0: i32) -> (i32, i32) {
    %c0_i32 = arith.constant 0 : i32
    %c0_i32_0 = arith.constant 0 : i32
    %c0_i32_1 = arith.constant 0 : i32
    return %c0_i32, %c0_i32_0 : i32, i32
  }
  func.func @transform_7(%arg0: i32) -> (i32, i32) {
    %c0_i32 = arith.constant 0 : i32
    %c0_i32_0 = arith.constant 0 : i32
    %c0_i32_1 = arith.constant 0 : i32
    return %c0_i32, %c0_i32_0 : i32, i32
  }
  func.func @transform_8(%arg0: i32) -> (i32, i32) {
    %c0_i32 = arith.constant 0 : i32
    %c0_i32_0 = arith.constant 0 : i32
    %c0_i32_1 = arith.constant 0 : i32
    return %c0_i32, %c0_i32_0 : i32, i32
  }
  func.func @transform_9(%arg0: i32) -> (i32, i32) {
    %c0_i32 = arith.constant 0 : i32
    %c0_i32_0 = arith.constant 0 : i32
    %c0_i32_1 = arith.constant 0 : i32
    return %c0_i32, %c0_i32_0 : i32, i32
  }
  func.func @transform_10(%arg0: i32) -> (i32, i32) {
    %c0_i32 = arith.constant 0 : i32
    %c0_i32_0 = arith.constant 0 : i32
    return %arg0, %c0_i32 : i32, i32
  }
  func.func @transform_11(%arg0: i32) -> (i32, i32) {
    %c0_i32 = arith.constant 0 : i32
    %c0_i32_0 = arith.constant 0 : i32
    return %arg0, %c0_i32 : i32, i32
  }
}

</mosaic_0001>

<llo_original>
// kernel: sidepass_forward.1
$region0: #{sidepass_forward.1}
  #allocation0 [shape = 'u32[]', space=smem, size = 0x4, offset = 0x4, fixed_abs, tag = 'smem constant byte address 0x4 - core index']
  #allocation1 [shape = 'u32[144,128]{1,0:T(1,128)}', space=vmem, size = 0x12000, scoped, tag = 'internal scratch']
  %s0 = inlined_call_operand.vmem [shape: f32[16,784], index: 0, kind: input, shape index: {}]
  %s1 = inlined_call_operand.vmem [shape: bf16[784,384], index: 1, kind: input, shape index: {}]
  %s2 = inlined_call_operand.hbm [shape: bf16[384,384], index: 2, kind: input, shape index: {}]
  %s3 = inlined_call_operand.vmem [shape: bf16[384,10], index: 3, kind: input, shape index: {}]
  %s4 = inlined_call_operand.hbm [shape: bf16[784,128], index: 4, kind: input, shape index: {}]
  %s5 = inlined_call_operand.hbm [shape: bf16[384,128], index: 5, kind: input, shape index: {}]
  %s6 = inlined_call_operand.hbm [shape: bf16[384,128], index: 6, kind: input, shape index: {}]
  %s7 = inlined_call_operand.vmem [shape: bf16[128,64], index: 7, kind: input, shape index: {}]
  %s8 = inlined_call_operand.vmem [shape: bf16[64,10], index: 8, kind: input, shape index: {}]
  %s9 = inlined_call_operand.vmem [shape: f32[1,1280], index: 9, kind: input, shape index: {}]
  %s10 = inlined_call_operand.vmem [shape: f32[16,128], index: 10, kind: output, shape index: {0}]
  %s11 = inlined_call_operand.vmem [shape: f32[16,128], index: 11, kind: output, shape index: {1}]
  %12 = xla_tuple %s10, %s11
  %s13 = sld [smem:[#allocation0]]
  $region74: #{sidepass_forward.1} parent=0
    _
  %s15 = ssub.s32 1, %s13
  %s16 = scalar_select 0, %s15, %s13
  $region1: #{sidepass_forward.1} parent=0
    #allocation2 [shape = 'u8[294912]{0}', space=vmem, size = 0x48000, scoped, tag = 'input window, operand 2, single buffered']
    #allocation3 [shape = 's32[1]{0}', space=sflag, size = 0x4, scoped, tag = 'scoped memory for sidepass_forward.1']
    #allocation4 [shape = 'u8[200704]{0}', space=vmem, size = 0x31000, scoped, tag = 'input window, operand 4, single buffered']
    #allocation5 [shape = 's32[1]{0}', space=sflag, size = 0x4, scoped, tag = 'scoped memory for sidepass_forward.1']
    #allocation6 [shape = 'u8[98304]{0}', space=vmem, size = 0x18000, scoped, tag = 'input window, operand 5, single buffered']
    #allocation7 [shape = 'u8[98304]{0}', space=vmem, size = 0x18000, scoped, tag = 'input window, operand 6, single buffered']
    #allocation8 [shape = 's32[1]{0}', space=sflag, size = 0x4, scoped, tag = 'scoped memory for sidepass_forward.1']
    %17 = vsyncpa [#allocation3], 0
    %18 = vsyncpa [#allocation5], 0
    %19 = vsyncpa [#allocation8], 0
    // Predicated region
    $region2: #{sidepass_forward.1} parent=1 // pred_check
      _
    $region3: #{sidepass_forward.1} parent=1 // pred_check_branch
      %21 = sbr.rel (0) target = $region5
    $region4: #{sidepass_forward.1} parent=1 // pred_region
      _
    $region5: #{sidepass_forward.1} parent=1 // pred_fallthru
      _
    // Predicated region
    $region6: #{sidepass_forward.1} parent=1 // pred_check
      _
    $region7: #{sidepass_forward.1} parent=1 // pred_check_branch
      %23 = sbr.rel (0) target = $region9
    $region8: #{sidepass_forward.1} parent=1 // pred_region
      _
    $region9: #{sidepass_forward.1} parent=1 // pred_fallthru
      _
    // Predicated region
    $region10: #{sidepass_forward.1} parent=1 // pred_check
      _
    $region11: #{sidepass_forward.1} parent=1 // pred_check_branch
      %25 = sbr.rel (0) target = $region13
    $region12: #{sidepass_forward.1} parent=1 // pred_region
      %s27 = ssub.s32 9216, 9216
      %28 = vsyncadd [#allocation3], %s27
      %s29 = sshll.u32 [#allocation2], 4
      %s30 = int_to_ptr.vmem [resolvable:$true] %s29
      %35 = dma.hbm_to_vmem [thread:$0]  %s2, 9216, %s30, [#allocation3], 192, 192, 12
    $region13: #{sidepass_forward.1} parent=1 // pred_fallthru
      _
    // Predicated region
    $region14: #{sidepass_forward.1} parent=1 // pred_check
      _
    $region15: #{sidepass_forward.1} parent=1 // pred_check_branch
      %37 = sbr.rel (0) target = $region17
    $region16: #{sidepass_forward.1} parent=1 // pred_region
      _
    $region17: #{sidepass_forward.1} parent=1 // pred_fallthru
      _
    // Predicated region
    $region18: #{sidepass_forward.1} parent=1 // pred_check
      _
    $region19: #{sidepass_forward.1} parent=1 // pred_check_branch
      %39 = sbr.rel (0) target = $region21
    $region20: #{sidepass_forward.1} parent=1 // pred_region
      %s41 = ssub.s32 6272, 6272
      %42 = vsyncadd [#allocation5], %s41
      %s43 = sshll.u32 [#allocation4], 4
      %s44 = int_to_ptr.vmem [resolvable:$true] %s43
      %49 = dma.hbm_to_vmem [thread:$0]  %s4, 6272, %s44, [#allocation5], 64, 64, 4
    $region21: #{sidepass_forward.1} parent=1 // pred_fallthru
      _
    // Predicated region
    $region22: #{sidepass_forward.1} parent=1 // pred_check
      _
    $region23: #{sidepass_forward.1} parent=1 // pred_check_branch
      %51 = sbr.rel (0) target = $region25
    $region24: #{sidepass_forward.1} parent=1 // pred_region
      %s53 = ssub.s32 3072, 3072
      %54 = vsyncadd [#allocation5], %s53
      %s55 = sshll.u32 [#allocation6], 4
      %s56 = int_to_ptr.vmem [resolvable:$true] %s55
      %61 = dma.hbm_to_vmem [thread:$0]  %s5, 3072, %s56, [#allocation5], 64, 64, 4
    $region25: #{sidepass_forward.1} parent=1 // pred_fallthru
      _
    // Predicated region
    $region26: #{sidepass_forward.1} parent=1 // pred_check
      _
    $region27: #{sidepass_forward.1} parent=1 // pred_check_branch
      %63 = sbr.rel (0) target = $region29
    $region28: #{sidepass_forward.1} parent=1 // pred_region
      %s65 = ssub.s32 3072, 3072
      %66 = vsyncadd [#allocation8], %s65
      %s67 = sshll.u32 [#allocation7], 4
      %s68 = int_to_ptr.vmem [resolvable:$true] %s67
      %73 = dma.hbm_to_vmem [thread:$0]  %s6, 3072, %s68, [#allocation8], 64, 64, 4
    $region29: #{sidepass_forward.1} parent=1 // pred_fallthru
      _
    // Predicated region
    $region30: #{sidepass_forward.1} parent=1 // pred_check
      _
    $region31: #{sidepass_forward.1} parent=1 // pred_check_branch
      %75 = sbr.rel (0) target = $region33
    $region32: #{sidepass_forward.1} parent=1 // pred_region
      _
    $region33: #{sidepass_forward.1} parent=1 // pred_fallthru
      _
    // Predicated region
    $region34: #{sidepass_forward.1} parent=1 // pred_check
      _
    $region35: #{sidepass_forward.1} parent=1 // pred_check_branch
      %77 = sbr.rel (0) target = $region37
    $region36: #{sidepass_forward.1} parent=1 // pred_region
      _
    $region37: #{sidepass_forward.1} parent=1 // pred_fallthru
      _
    // Predicated region
    $region38: #{sidepass_forward.1} parent=1 // pred_check
      _
    $region39: #{sidepass_forward.1} parent=1 // pred_check_branch
      %79 = sbr.rel (0) target = $region41
    $region40: #{sidepass_forward.1} parent=1 // pred_region
      _
    $region41: #{sidepass_forward.1} parent=1 // pred_fallthru
      _
    // Predicated region
    $region42: #{sidepass_forward.1} parent=1 // pred_check
      _
    $region43: #{sidepass_forward.1} parent=1 // pred_check_branch
      %81 = sbr.rel (0) target = $region45
    $region44: #{sidepass_forward.1} parent=1 // pred_region
      %82 = dma.done [#allocation3], 9216
    $region45: #{sidepass_forward.1} parent=1 // pred_fallthru
      _
    // Predicated region
    $region46: #{sidepass_forward.1} parent=1 // pred_check
      _
    $region47: #{sidepass_forward.1} parent=1 // pred_check_branch
      %84 = sbr.rel (0) target = $region49
    $region48: #{sidepass_forward.1} parent=1 // pred_region
      %85 = dma.done [#allocation5], 6272
    $region49: #{sidepass_forward.1} parent=1 // pred_fallthru
      _
    // Predicated region
    $region50: #{sidepass_forward.1} parent=1 // pred_check
      _
    $region51: #{sidepass_forward.1} parent=1 // pred_check_branch
      %87 = sbr.rel (0) target = $region53
    $region52: #{sidepass_forward.1} parent=1 // pred_region
      %88 = dma.done [#allocation5], 3072
    $region53: #{sidepass_forward.1} parent=1 // pred_fallthru
      _
    // Predicated region
    $region54: #{sidepass_forward.1} parent=1 // pred_check
      _
    $region55: #{sidepass_forward.1} parent=1 // pred_check_branch
      %90 = sbr.rel (0) target = $region57
    $region56: #{sidepass_forward.1} parent=1 // pred_region
      %91 = dma.done [#allocation8], 3072
    $region57: #{sidepass_forward.1} parent=1 // pred_fallthru
      _
    %v93 = vld [vmem:[%s0] sm:$0xff]
    %v94 = vld [vmem:[%s0 + $0x8] sm:$0xff]
    %v95 = vld [vmem:[%s0 + $0x10] sm:$0xff]
    %v96 = vld [vmem:[%s0 + $0x18] sm:$0xff]
    %v97 = vld [vmem:[%s0 + $0x20] sm:$0xff]
    %v98 = vld [vmem:[%s0 + $0x28] sm:$0xff]
    %v99 = vld [vmem:[%s0 + $0x30] sm:$0xff]
    %v100 = vld [vmem:[%s0 + $0x38] sm:$0xff]
    %v101 = vld [vmem:[%s0 + $0x40] sm:$0xff]
    %v102 = vld [vmem:[%s0 + $0x48] sm:$0xff]
    %v103 = vld [vmem:[%s0 + $0x50] sm:$0xff]
    %v104 = vld [vmem:[%s0 + $0x58] sm:$0xff]
    %v105 = vld [vmem:[%s0 + $0x60] sm:$0xff]
    %v106 = vld [vmem:[%s0 + $0x68] sm:$0xff]
    %v107 = vpack.c.bf16 %v100, %v93
    %v108 = vpack.c.bf16 %v101, %v94
    %v109 = vpack.c.bf16 %v102, %v95
    %v110 = vpack.c.bf16 %v103, %v96
    %v111 = vpack.c.bf16 %v104, %v97
    %v112 = vpack.c.bf16 %v105, %v98
    %v113 = vpack.c.bf16 %v106, %v99
    %v114 = vld [vmem:[%s9] sm:$0x7]
    %v115 = vld [vmem:[%s9 + $0x3] sm:$0x7]
    %v116 = vld [vmem:[%s9 + $0x6] sm:$0x1]
    %v117 = vld [vmem:[%s9 + $0x7] sm:$0x1]
    %v118 = vld [vmem:[%s9 + $0x8] sm:$0x1]
    %v119 = vld [vmem:[%s9 + $0x9] sm:$0x1]
    %v120 = vld [vmem:[%s1] sm:$0xff]
    %v121 = vld [vmem:[%s1 + $0x8] sm:$0xf]
    %v122 = vld [vmem:[%s1 + $0xc] sm:$0xff]
    %v123 = vld [vmem:[%s1 + $0x14] sm:$0xf]
    %v124 = vld [vmem:[%s1 + $0x18] sm:$0xff]
    %v125 = vld [vmem:[%s1 + $0x20] sm:$0xf]
    %v126 = vld [vmem:[%s1 + $0x24] sm:$0xff]
    %v127 = vld [vmem:[%s1 + $0x2c] sm:$0xf]
    %v128 = vld [vmem:[%s1 + $0x30] sm:$0xff]
    %v129 = vld [vmem:[%s1 + $0x38] sm:$0xf]
    %v130 = vld [vmem:[%s1 + $0x3c] sm:$0xff]
    %v131 = vld [vmem:[%s1 + $0x44] sm:$0xf]
    %v132 = vld [vmem:[%s1 + $0x48] sm:$0xff]
    %v133 = vld [vmem:[%s1 + $0x50] sm:$0xf]
    %v134 = vld [vmem:[%s1 + $0x54] sm:$0xff]
    %v135 = vld [vmem:[%s1 + $0x5c] sm:$0xf]
    %v136 = vld [vmem:[%s1 + $0x60] sm:$0xff]
    %v137 = vld [vmem:[%s1 + $0x68] sm:$0xf]
    %v138 = vld [vmem:[%s1 + $0x6c] sm:$0xff]
    %v139 = vld [vmem:[%s1 + $0x74] sm:$0xf]
    %v140 = vld [vmem:[%s1 + $0x78] sm:$0xff]
    %v141 = vld [vmem:[%s1 + $0x80] sm:$0xf]
    %v142 = vld [vmem:[%s1 + $0x84] sm:$0xff]
    %v143 = vld [vmem:[%s1 + $0x8c] sm:$0xf]
    %v144 = vld [vmem:[%s1 + $0x90] sm:$0xff]
    %v145 = vld [vmem:[%s1 + $0x98] sm:$0xf]
    %v146 = vld [vmem:[%s1 + $0x9c] sm:$0xff]
    %v147 = vld [vmem:[%s1 + $0xa4] sm:$0xf]
    %v148 = vld [vmem:[%s1 + $0xa8] sm:$0xff]
    %v149 = vld [vmem:[%s1 + $0xb0] sm:$0xf]
    %v150 = vld [vmem:[%s1 + $0xb4] sm:$0xff]
    %v151 = vld [vmem:[%s1 + $0xbc] sm:$0xf]
    %v152 = vld [vmem:[%s1 + $0xc0] sm:$0xff]
    %v153 = vld [vmem:[%s1 + $0xc8] sm:$0xf]
    %v154 = vld [vmem:[%s1 + $0xcc] sm:$0xff]
    %v155 = vld [vmem:[%s1 + $0xd4] sm:$0xf]
    %v156 = vld [vmem:[%s1 + $0xd8] sm:$0xff]
    %v157 = vld [vmem:[%s1 + $0xe0] sm:$0xf]
    %v158 = vld [vmem:[%s1 + $0xe4] sm:$0xff]
    %v159 = vld [vmem:[%s1 + $0xec] sm:$0xf]
    %v160 = vld [vmem:[%s1 + $0xf0] sm:$0xff]
    %v161 = vld [vmem:[%s1 + $0xf8] sm:$0xf]
    %v162 = vld [vmem:[%s1 + $0xfc] sm:$0xff]
    %v163 = vld [vmem:[%s1 + $0x104] sm:$0xf]
    %v164 = vld [vmem:[%s1 + $0x108] sm:$0xff]
    %v165 = vld [vmem:[%s1 + $0x110] sm:$0xf]
    %v166 = vld [vmem:[%s1 + $0x114] sm:$0xff]
    %v167 = vld [vmem:[%s1 + $0x11c] sm:$0xf]
    %v168 = vld [vmem:[%s1 + $0x120] sm:$0xff]
    %v169 = vld [vmem:[%s1 + $0x128] sm:$0xf]
    %v170 = vld [vmem:[%s1 + $0x12c] sm:$0xff]
    %v171 = vld [vmem:[%s1 + $0x134] sm:$0xf]
    %v172 = vld [vmem:[%s1 + $0x138] sm:$0xff]
    %v173 = vld [vmem:[%s1 + $0x140] sm:$0xf]
    %v174 = vld [vmem:[%s1 + $0x144] sm:$0xff]
    %v175 = vld [vmem:[%s1 + $0x14c] sm:$0xf]
    %v176 = vld [vmem:[%s1 + $0x150] sm:$0xff]
    %v177 = vld [vmem:[%s1 + $0x158] sm:$0xf]
    %v178 = vld [vmem:[%s1 + $0x15c] sm:$0xff]
    %v179 = vld [vmem:[%s1 + $0x164] sm:$0xf]
    %v180 = vld [vmem:[%s1 + $0x168] sm:$0xff]
    %v181 = vld [vmem:[%s1 + $0x170] sm:$0xf]
    %v182 = vld [vmem:[%s1 + $0x174] sm:$0xff]
    %v183 = vld [vmem:[%s1 + $0x17c] sm:$0xf]
    %v184 = vld [vmem:[%s1 + $0x180] sm:$0xff]
    %v185 = vld [vmem:[%s1 + $0x188] sm:$0xf]
    %v186 = vld [vmem:[%s1 + $0x18c] sm:$0xff]
    %v187 = vld [vmem:[%s1 + $0x194] sm:$0xf]
    %v188 = vld [vmem:[%s1 + $0x198] sm:$0xff]
    %v189 = vld [vmem:[%s1 + $0x1a0] sm:$0xf]
    %v190 = vld [vmem:[%s1 + $0x1a4] sm:$0xff]
    %v191 = vld [vmem:[%s1 + $0x1ac] sm:$0xf]
    %v192 = vld [vmem:[%s1 + $0x1b0] sm:$0xff]
    %v193 = vld [vmem:[%s1 + $0x1b8] sm:$0xf]
    %v194 = vld [vmem:[%s1 + $0x1bc] sm:$0xff]
    %v195 = vld [vmem:[%s1 + $0x1c4] sm:$0xf]
    %v196 = vld [vmem:[%s1 + $0x1c8] sm:$0xff]
    %v197 = vld [vmem:[%s1 + $0x1d0] sm:$0xf]
    %v198 = vld [vmem:[%s1 + $0x1d4] sm:$0xff]
    %v199 = vld [vmem:[%s1 + $0x1dc] sm:$0xf]
    %v200 = vld [vmem:[%s1 + $0x1e0] sm:$0xff]
    %v201 = vld [vmem:[%s1 + $0x1e8] sm:$0xf]
    %v202 = vld [vmem:[%s1 + $0x1ec] sm:$0xff]
    %v203 = vld [vmem:[%s1 + $0x1f4] sm:$0xf]
    %v204 = vld [vmem:[%s1 + $0x1f8] sm:$0xff]
    %v205 = vld [vmem:[%s1 + $0x200] sm:$0xf]
    %v206 = vld [vmem:[%s1 + $0x204] sm:$0xff]
    %v207 = vld [vmem:[%s1 + $0x20c] sm:$0xf]
    %v208 = vld [vmem:[%s1 + $0x210] sm:$0xff]
    %v209 = vld [vmem:[%s1 + $0x218] sm:$0xf]
    %v210 = vld [vmem:[%s1 + $0x21c] sm:$0xff]
    %v211 = vld [vmem:[%s1 + $0x224] sm:$0xf]
    %v212 = vld [vmem:[%s1 + $0x228] sm:$0xff]
    %v213 = vld [vmem:[%s1 + $0x230] sm:$0xf]
    %v214 = vld [vmem:[%s1 + $0x234] sm:$0xff]
    %v215 = vld [vmem:[%s1 + $0x23c] sm:$0xf]
    %v216 = vld [vmem:[%s1 + $0x240] sm:$0xff]
    %v217 = vld [vmem:[%s1 + $0x248] sm:$0xf]
    %v218 = vld [vmem:[%s1 + $0x24c] sm:$0xff]
    %v219 = vld [vmem:[%s1 + $0x254] sm:$0xf]
    %v220 = vld [vmem:[%s1 + $0x258] sm:$0xff]
    %v221 = vld [vmem:[%s1 + $0x260] sm:$0xf]
    %v222 = vld [vmem:[%s1 + $0x264] sm:$0xff]
    %v223 = vld [vmem:[%s1 + $0x26c] sm:$0xf]
    %v224 = vld [vmem:[%s1 + $0x270] sm:$0xff]
    %v225 = vld [vmem:[%s1 + $0x278] sm:$0xf]
    %v226 = vld [vmem:[%s1 + $0x27c] sm:$0xff]
    %v227 = vld [vmem:[%s1 + $0x284] sm:$0xf]
    %v228 = vld [vmem:[%s1 + $0x288] sm:$0xff]
    %v229 = vld [vmem:[%s1 + $0x290] sm:$0xf]
    %v230 = vld [vmem:[%s1 + $0x294] sm:$0xff]
    %v231 = vld [vmem:[%s1 + $0x29c] sm:$0xf]
    %v232 = vld [vmem:[%s1 + $0x2a0] sm:$0xff]
    %v233 = vld [vmem:[%s1 + $0x2a8] sm:$0xf]
    %v234 = vld [vmem:[%s1 + $0x2ac] sm:$0xff]
    %v235 = vld [vmem:[%s1 + $0x2b4] sm:$0xf]
    %v236 = vld [vmem:[%s1 + $0x2b8] sm:$0xff]
    %v237 = vld [vmem:[%s1 + $0x2c0] sm:$0xf]
    %v238 = vld [vmem:[%s1 + $0x2c4] sm:$0xff]
    %v239 = vld [vmem:[%s1 + $0x2cc] sm:$0xf]
    %v240 = vld [vmem:[%s1 + $0x2d0] sm:$0xff]
    %v241 = vld [vmem:[%s1 + $0x2d8] sm:$0xf]
    %v242 = vld [vmem:[%s1 + $0x2dc] sm:$0xff]
    %v243 = vld [vmem:[%s1 + $0x2e4] sm:$0xf]
    %v244 = vld [vmem:[%s1 + $0x2e8] sm:$0xff]
    %v245 = vld [vmem:[%s1 + $0x2f0] sm:$0xf]
    %v246 = vld [vmem:[%s1 + $0x2f4] sm:$0xff]
    %v247 = vld [vmem:[%s1 + $0x2fc] sm:$0xf]
    %v248 = vld [vmem:[%s1 + $0x300] sm:$0xff]
    %v249 = vld [vmem:[%s1 + $0x308] sm:$0xf]
    %v250 = vld [vmem:[%s1 + $0x30c] sm:$0xff]
    %v251 = vld [vmem:[%s1 + $0x314] sm:$0xf]
    %v252 = vld [vmem:[%s1 + $0x318] sm:$0xff]
    %v253 = vld [vmem:[%s1 + $0x320] sm:$0xf]
    %v254 = vld [vmem:[%s1 + $0x324] sm:$0xff]
    %v255 = vld [vmem:[%s1 + $0x32c] sm:$0xf]
    %v256 = vld [vmem:[%s1 + $0x330] sm:$0xff]
    %v257 = vld [vmem:[%s1 + $0x338] sm:$0xf]
    %v258 = vld [vmem:[%s1 + $0x33c] sm:$0xff]
    %v259 = vld [vmem:[%s1 + $0x344] sm:$0xf]
    %v260 = vld [vmem:[%s1 + $0x348] sm:$0xff]
    %v261 = vld [vmem:[%s1 + $0x350] sm:$0xf]
    %v262 = vld [vmem:[%s1 + $0x354] sm:$0xff]
    %v263 = vld [vmem:[%s1 + $0x35c] sm:$0xf]
    %v264 = vld [vmem:[%s1 + $0x360] sm:$0xff]
    %v265 = vld [vmem:[%s1 + $0x368] sm:$0xf]
    %v266 = vld [vmem:[%s1 + $0x36c] sm:$0xff]
    %v267 = vld [vmem:[%s1 + $0x374] sm:$0xf]
    %v268 = vld [vmem:[%s1 + $0x378] sm:$0xff]
    %v269 = vld [vmem:[%s1 + $0x380] sm:$0xf]
    %v270 = vld [vmem:[%s1 + $0x384] sm:$0xff]
    %v271 = vld [vmem:[%s1 + $0x38c] sm:$0xf]
    %v272 = vld [vmem:[%s1 + $0x390] sm:$0xff]
    %v273 = vld [vmem:[%s1 + $0x398] sm:$0xf]
    %v274 = vld [vmem:[%s1 + $0x39c] sm:$0xff]
    %v275 = vld [vmem:[%s1 + $0x3a4] sm:$0xf]
    %v276 = vld [vmem:[%s1 + $0x3a8] sm:$0xff]
    %v277 = vld [vmem:[%s1 + $0x3b0] sm:$0xf]
    %v278 = vld [vmem:[%s1 + $0x3b4] sm:$0xff]
    %v279 = vld [vmem:[%s1 + $0x3bc] sm:$0xf]
    %v280 = vld [vmem:[%s1 + $0x3c0] sm:$0xff]
    %v281 = vld [vmem:[%s1 + $0x3c8] sm:$0xf]
    %v282 = vld [vmem:[%s1 + $0x3cc] sm:$0xff]
    %v283 = vld [vmem:[%s1 + $0x3d4] sm:$0xf]
    %v284 = vld [vmem:[%s1 + $0x3d8] sm:$0xff]
    %v285 = vld [vmem:[%s1 + $0x3e0] sm:$0xf]
    %v286 = vld [vmem:[%s1 + $0x3e4] sm:$0xff]
    %v287 = vld [vmem:[%s1 + $0x3ec] sm:$0xf]
    %v288 = vld [vmem:[%s1 + $0x3f0] sm:$0xff]
    %v289 = vld [vmem:[%s1 + $0x3f8] sm:$0xf]
    %v290 = vld [vmem:[%s1 + $0x3fc] sm:$0xff]
    %v291 = vld [vmem:[%s1 + $0x404] sm:$0xf]
    %v292 = vld [vmem:[%s1 + $0x408] sm:$0xff]
    %v293 = vld [vmem:[%s1 + $0x410] sm:$0xf]
    %v294 = vld [vmem:[%s1 + $0x414] sm:$0xff]
    %v295 = vld [vmem:[%s1 + $0x41c] sm:$0xf]
    %v296 = vld [vmem:[%s1 + $0x420] sm:$0xff]
    %v297 = vld [vmem:[%s1 + $0x428] sm:$0xf]
    %v298 = vld [vmem:[%s1 + $0x42c] sm:$0xff]
    %v299 = vld [vmem:[%s1 + $0x434] sm:$0xf]
    %v300 = vld [vmem:[%s1 + $0x438] sm:$0xff]
    %v301 = vld [vmem:[%s1 + $0x440] sm:$0xf]
    %v302 = vld [vmem:[%s1 + $0x444] sm:$0xff]
    %v303 = vld [vmem:[%s1 + $0x44c] sm:$0xf]
    %v304 = vld [vmem:[%s1 + $0x450] sm:$0xff]
    %v305 = vld [vmem:[%s1 + $0x458] sm:$0xf]
    %v306 = vld [vmem:[%s1 + $0x45c] sm:$0xff]
    %v307 = vld [vmem:[%s1 + $0x464] sm:$0xf]
    %v308 = vld [vmem:[%s1 + $0x468] sm:$0xff]
    %v309 = vld [vmem:[%s1 + $0x470] sm:$0xf]
    %v310 = vld [vmem:[%s1 + $0x474] sm:$0xff]
    %v311 = vld [vmem:[%s1 + $0x47c] sm:$0xf]
    %v312 = vld [vmem:[%s1 + $0x480] sm:$0xff]
    %v313 = vld [vmem:[%s1 + $0x488] sm:$0xf]
    %v314 = vld [vmem:[%s1 + $0x48c] sm:$0xff]
    %v315 = vld [vmem:[%s1 + $0x494] sm:$0xf]
    %v317 = vlaneseq
    %v318 = vshrl.u32 %v317, 7
    %v319 = vsub.s32 0, %v318
    %v320 = vrot.slane %v114, %v319
    %v321 = vlaneseq
    %v322 = vshrl.u32 %v321, 7
    %v323 = vsub.s32 1, %v322
    %v324 = vrot.slane %v114, %v323
    %v325 = vlaneseq
    %v326 = vshrl.u32 %v325, 7
    %v327 = vsub.s32 2, %v326
    %v328 = vrot.slane %v114, %v327
    %v528 = vunpack.c.l.b16 %v120
    %v529 = vunpack.c.h.b16 %v120
    %v530 = vunpack.c.l.b16 %v121
    %v531 = vunpack.c.l.b16 %v122
    %v532 = vunpack.c.h.b16 %v122
    %v533 = vunpack.c.l.b16 %v123
    %v534 = vunpack.c.l.b16 %v124
    %v535 = vunpack.c.h.b16 %v124
    %v536 = vunpack.c.l.b16 %v125
    %v537 = vunpack.c.l.b16 %v126
    %v538 = vunpack.c.h.b16 %v126
    %v539 = vunpack.c.l.b16 %v127
    %v540 = vunpack.c.l.b16 %v128
    %v541 = vunpack.c.h.b16 %v128
    %v542 = vunpack.c.l.b16 %v129
    %v543 = vunpack.c.l.b16 %v130
    %v544 = vunpack.c.h.b16 %v130
    %v545 = vunpack.c.l.b16 %v131
    %v546 = vunpack.c.l.b16 %v132
    %v547 = vunpack.c.h.b16 %v132
    %v548 = vunpack.c.l.b16 %v133
    %v549 = vunpack.c.l.b16 %v134
    %v550 = vunpack.c.h.b16 %v134
    %v551 = vunpack.c.l.b16 %v135
    %v552 = vunpack.c.l.b16 %v136
    %v553 = vunpack.c.h.b16 %v136
    %v554 = vunpack.c.l.b16 %v137
    %v555 = vunpack.c.l.b16 %v138
    %v556 = vunpack.c.h.b16 %v138
    %v557 = vunpack.c.l.b16 %v139
    %v558 = vunpack.c.l.b16 %v140
    %v559 = vunpack.c.h.b16 %v140
    %v560 = vunpack.c.l.b16 %v141
    %v561 = vunpack.c.l.b16 %v142
    %v562 = vunpack.c.h.b16 %v142
    %v563 = vunpack.c.l.b16 %v143
    %v564 = vunpack.c.l.b16 %v144
    %v565 = vunpack.c.h.b16 %v144
    %v566 = vunpack.c.l.b16 %v145
    %v567 = vunpack.c.l.b16 %v146
    %v568 = vunpack.c.h.b16 %v146
    %v569 = vunpack.c.l.b16 %v147
    %v570 = vunpack.c.l.b16 %v148
    %v571 = vunpack.c.h.b16 %v148
    %v572 = vunpack.c.l.b16 %v149
    %v573 = vunpack.c.l.b16 %v150
    %v574 = vunpack.c.h.b16 %v150
    %v575 = vunpack.c.l.b16 %v151
    %v576 = vunpack.c.l.b16 %v152
    %v577 = vunpack.c.h.b16 %v152
    %v578 = vunpack.c.l.b16 %v153
    %v579 = vunpack.c.l.b16 %v154
    %v580 = vunpack.c.h.b16 %v154
    %v581 = vunpack.c.l.b16 %v155
    %v582 = vunpack.c.l.b16 %v156
    %v583 = vunpack.c.h.b16 %v156
    %v584 = vunpack.c.l.b16 %v157
    %v585 = vunpack.c.l.b16 %v158
    %v586 = vunpack.c.h.b16 %v158
    %v587 = vunpack.c.l.b16 %v159
    %v588 = vunpack.c.l.b16 %v160
    %v589 = vunpack.c.h.b16 %v160
    %v590 = vunpack.c.l.b16 %v161
    %v591 = vunpack.c.l.b16 %v162
    %v592 = vunpack.c.h.b16 %v162
    %v593 = vunpack.c.l.b16 %v163
    %v594 = vunpack.c.l.b16 %v164
    %v595 = vunpack.c.h.b16 %v164
    %v596 = vunpack.c.l.b16 %v165
    %v597 = vunpack.c.l.b16 %v166
    %v598 = vunpack.c.h.b16 %v166
    %v599 = vunpack.c.l.b16 %v167
    %v600 = vunpack.c.l.b16 %v168
    %v601 = vunpack.c.h.b16 %v168
    %v602 = vunpack.c.l.b16 %v169
    %v603 = vunpack.c.l.b16 %v170
    %v604 = vunpack.c.h.b16 %v170
    %v605 = vunpack.c.l.b16 %v171
    %v606 = vunpack.c.l.b16 %v172
    %v607 = vunpack.c.h.b16 %v172
    %v608 = vunpack.c.l.b16 %v173
    %v609 = vunpack.c.l.b16 %v174
    %v610 = vunpack.c.h.b16 %v174
    %v611 = vunpack.c.l.b16 %v175
    %v612 = vunpack.c.l.b16 %v176
    %v613 = vunpack.c.h.b16 %v176
    %v614 = vunpack.c.l.b16 %v177
    %v615 = vunpack.c.l.b16 %v178
    %v616 = vunpack.c.h.b16 %v178
    %v617 = vunpack.c.l.b16 %v179
    %v618 = vunpack.c.l.b16 %v180
    %v619 = vunpack.c.h.b16 %v180
    %v620 = vunpack.c.l.b16 %v181
    %v621 = vunpack.c.l.b16 %v182
    %v622 = vunpack.c.h.b16 %v182
    %v623 = vunpack.c.l.b16 %v183
    %v624 = vunpack.c.l.b16 %v184
    %v625 = vunpack.c.h.b16 %v184
    %v626 = vunpack.c.l.b16 %v185
    %v627 = vunpack.c.l.b16 %v186
    %v628 = vunpack.c.h.b16 %v186
    %v629 = vunpack.c.l.b16 %v187
    %v630 = vunpack.c.l.b16 %v188
    %v631 = vunpack.c.h.b16 %v188
    %v632 = vunpack.c.l.b16 %v189
    %v633 = vunpack.c.l.b16 %v190
    %v634 = vunpack.c.h.b16 %v190
    %v635 = vunpack.c.l.b16 %v191
    %v636 = vunpack.c.l.b16 %v192
    %v637 = vunpack.c.h.b16 %v192
    %v638 = vunpack.c.l.b16 %v193
    %v639 = vunpack.c.l.b16 %v194
    %v640 = vunpack.c.h.b16 %v194
    %v641 = vunpack.c.l.b16 %v195
    %v642 = vunpack.c.l.b16 %v196
    %v643 = vunpack.c.h.b16 %v196
    %v644 = vunpack.c.l.b16 %v197
    %v645 = vunpack.c.l.b16 %v198
    %v646 = vunpack.c.h.b16 %v198
    %v647 = vunpack.c.l.b16 %v199
    %v648 = vunpack.c.l.b16 %v200
    %v649 = vunpack.c.h.b16 %v200
    %v650 = vunpack.c.l.b16 %v201
    %v651 = vunpack.c.l.b16 %v202
    %v652 = vunpack.c.h.b16 %v202
    %v653 = vunpack.c.l.b16 %v203
    %v654 = vunpack.c.l.b16 %v204
    %v655 = vunpack.c.h.b16 %v204
    %v656 = vunpack.c.l.b16 %v205
    %v657 = vunpack.c.l.b16 %v206
    %v658 = vunpack.c.h.b16 %v206
    %v659 = vunpack.c.l.b16 %v207
    %v660 = vunpack.c.l.b16 %v208
    %v661 = vunpack.c.h.b16 %v208
    %v662 = vunpack.c.l.b16 %v209
    %v663 = vunpack.c.l.b16 %v210
    %v664 = vunpack.c.h.b16 %v210
    %v665 = vunpack.c.l.b16 %v211
    %v666 = vunpack.c.l.b16 %v212
    %v667 = vunpack.c.h.b16 %v212
    %v668 = vunpack.c.l.b16 %v213
    %v669 = vunpack.c.l.b16 %v214
    %v670 = vunpack.c.h.b16 %v214
    %v671 = vunpack.c.l.b16 %v215
    %v672 = vunpack.c.l.b16 %v216
    %v673 = vunpack.c.h.b16 %v216
    %v674 = vunpack.c.l.b16 %v217
    %v675 = vunpack.c.l.b16 %v218
    %v676 = vunpack.c.h.b16 %v218
    %v677 = vunpack.c.l.b16 %v219
    %v678 = vunpack.c.l.b16 %v220
    %v679 = vunpack.c.h.b16 %v220
    %v680 = vunpack.c.l.b16 %v221
    %v681 = vunpack.c.l.b16 %v222
    %v682 = vunpack.c.h.b16 %v222
    %v683 = vunpack.c.l.b16 %v223
    %v684 = vunpack.c.l.b16 %v224
    %v685 = vunpack.c.h.b16 %v224
    %v686 = vunpack.c.l.b16 %v225
    %v687 = vunpack.c.l.b16 %v226
    %v688 = vunpack.c.h.b16 %v226
    %v689 = vunpack.c.l.b16 %v227
    %v690 = vunpack.c.l.b16 %v228
    %v691 = vunpack.c.h.b16 %v228
    %v692 = vunpack.c.l.b16 %v229
    %v693 = vunpack.c.l.b16 %v230
    %v694 = vunpack.c.h.b16 %v230
    %v695 = vunpack.c.l.b16 %v231
    %v696 = vunpack.c.l.b16 %v232
    %v697 = vunpack.c.h.b16 %v232
    %v698 = vunpack.c.l.b16 %v233
    %v699 = vunpack.c.l.b16 %v234
    %v700 = vunpack.c.h.b16 %v234
    %v701 = vunpack.c.l.b16 %v235
    %v702 = vunpack.c.l.b16 %v236
    %v703 = vunpack.c.h.b16 %v236
    %v704 = vunpack.c.l.b16 %v237
    %v705 = vunpack.c.l.b16 %v238
    %v706 = vunpack.c.h.b16 %v238
    %v707 = vunpack.c.l.b16 %v239
    %v708 = vunpack.c.l.b16 %v240
    %v709 = vunpack.c.h.b16 %v240
    %v710 = vunpack.c.l.b16 %v241
    %v711 = vunpack.c.l.b16 %v242
    %v712 = vunpack.c.h.b16 %v242
    %v713 = vunpack.c.l.b16 %v243
    %v714 = vunpack.c.l.b16 %v244
    %v715 = vunpack.c.h.b16 %v244
    %v716 = vunpack.c.l.b16 %v245
    %v717 = vunpack.c.l.b16 %v246
    %v718 = vunpack.c.h.b16 %v246
    %v719 = vunpack.c.l.b16 %v247
    %v720 = vunpack.c.l.b16 %v248
    %v721 = vunpack.c.h.b16 %v248
    %v722 = vunpack.c.l.b16 %v249
    %v723 = vunpack.c.l.b16 %v250
    %v724 = vunpack.c.h.b16 %v250
    %v725 = vunpack.c.l.b16 %v251
    %v726 = vunpack.c.l.b16 %v252
    %v727 = vunpack.c.h.b16 %v252
    %v728 = vunpack.c.l.b16 %v253
    %v729 = vunpack.c.l.b16 %v254
    %v730 = vunpack.c.h.b16 %v254
    %v731 = vunpack.c.l.b16 %v255
    %v732 = vunpack.c.l.b16 %v256
    %v733 = vunpack.c.h.b16 %v256
    %v734 = vunpack.c.l.b16 %v257
    %v735 = vunpack.c.l.b16 %v258
    %v736 = vunpack.c.h.b16 %v258
    %v737 = vunpack.c.l.b16 %v259
    %v738 = vunpack.c.l.b16 %v260
    %v739 = vunpack.c.h.b16 %v260
    %v740 = vunpack.c.l.b16 %v261
    %v741 = vunpack.c.l.b16 %v262
    %v742 = vunpack.c.h.b16 %v262
    %v743 = vunpack.c.l.b16 %v263
    %v744 = vunpack.c.l.b16 %v264
    %v745 = vunpack.c.h.b16 %v264
    %v746 = vunpack.c.l.b16 %v265
    %v747 = vunpack.c.l.b16 %v266
    %v748 = vunpack.c.h.b16 %v266
    %v749 = vunpack.c.l.b16 %v267
    %v750 = vunpack.c.l.b16 %v268
    %v751 = vunpack.c.h.b16 %v268
    %v752 = vunpack.c.l.b16 %v269
    %v753 = vunpack.c.l.b16 %v270
    %v754 = vunpack.c.h.b16 %v270
    %v755 = vunpack.c.l.b16 %v271
    %v756 = vunpack.c.l.b16 %v272
    %v757 = vunpack.c.h.b16 %v272
    %v758 = vunpack.c.l.b16 %v273
    %v759 = vunpack.c.l.b16 %v274
    %v760 = vunpack.c.h.b16 %v274
    %v761 = vunpack.c.l.b16 %v275
    %v762 = vunpack.c.l.b16 %v276
    %v763 = vunpack.c.h.b16 %v276
    %v764 = vunpack.c.l.b16 %v277
    %v765 = vunpack.c.l.b16 %v278
    %v766 = vunpack.c.h.b16 %v278
    %v767 = vunpack.c.l.b16 %v279
    %v768 = vunpack.c.l.b16 %v280
    %v769 = vunpack.c.h.b16 %v280
    %v770 = vunpack.c.l.b16 %v281
    %v771 = vunpack.c.l.b16 %v282
    %v772 = vunpack.c.h.b16 %v282
    %v773 = vunpack.c.l.b16 %v283
    %v774 = vunpack.c.l.b16 %v284
    %v775 = vunpack.c.h.b16 %v284
    %v776 = vunpack.c.l.b16 %v285
    %v777 = vunpack.c.l.b16 %v286
    %v778 = vunpack.c.h.b16 %v286
    %v779 = vunpack.c.l.b16 %v287
    %v780 = vunpack.c.l.b16 %v288
    %v781 = vunpack.c.h.b16 %v288
    %v782 = vunpack.c.l.b16 %v289
    %v783 = vunpack.c.l.b16 %v290
    %v784 = vunpack.c.h.b16 %v290
    %v785 = vunpack.c.l.b16 %v291
    %v786 = vunpack.c.l.b16 %v292
    %v787 = vunpack.c.h.b16 %v292
    %v788 = vunpack.c.l.b16 %v293
    %v789 = vunpack.c.l.b16 %v294
    %v790 = vunpack.c.h.b16 %v294
    %v791 = vunpack.c.l.b16 %v295
    %v792 = vunpack.c.l.b16 %v296
    %v793 = vunpack.c.h.b16 %v296
    %v794 = vunpack.c.l.b16 %v297
    %v795 = vunpack.c.l.b16 %v298
    %v796 = vunpack.c.h.b16 %v298
    %v797 = vunpack.c.l.b16 %v299
    %v798 = vunpack.c.l.b16 %v300
    %v799 = vunpack.c.h.b16 %v300
    %v800 = vunpack.c.l.b16 %v301
    %v801 = vunpack.c.l.b16 %v302
    %v802 = vunpack.c.h.b16 %v302
    %v803 = vunpack.c.l.b16 %v303
    %v804 = vunpack.c.l.b16 %v304
    %v805 = vunpack.c.h.b16 %v304
    %v806 = vunpack.c.l.b16 %v305
    %v807 = vunpack.c.l.b16 %v306
    %v808 = vunpack.c.h.b16 %v306
    %v809 = vunpack.c.l.b16 %v307
    %v810 = vunpack.c.l.b16 %v308
    %v811 = vunpack.c.h.b16 %v308
    %v812 = vunpack.c.l.b16 %v309
    %v813 = vunpack.c.l.b16 %v310
    %v814 = vunpack.c.h.b16 %v310
    %v815 = vunpack.c.l.b16 %v311
    %v816 = vunpack.c.l.b16 %v312
    %v817 = vunpack.c.h.b16 %v312
    %v818 = vunpack.c.l.b16 %v313
    %v819 = vunpack.c.l.b16 %v314
    %v820 = vunpack.c.h.b16 %v314
    %v821 = vunpack.c.l.b16 %v315
    %v822 = vpack.c.b16 %v531, %v528
    %v823 = vpack.c.b16 %v532, %v529
    %v824 = vpack.c.b16 %v533, %v530
    %v825 = vpack.c.b16 %v537, %v534
    %v826 = vpack.c.b16 %v538, %v535
    %v827 = vpack.c.b16 %v539, %v536
    %v828 = vpack.c.b16 %v543, %v540
    %v829 = vpack.c.b16 %v544, %v541
    %v830 = vpack.c.b16 %v545, %v542
    %v831 = vpack.c.b16 %v549, %v546
    %v832 = vpack.c.b16 %v550, %v547
    %v833 = vpack.c.b16 %v551, %v548
    %v834 = vpack.c.b16 %v555, %v552
    %v835 = vpack.c.b16 %v556, %v553
    %v836 = vpack.c.b16 %v557, %v554
    %v837 = vpack.c.b16 %v561, %v558
    %v838 = vpack.c.b16 %v562, %v559
    %v839 = vpack.c.b16 %v563, %v560
    %v840 = vpack.c.b16 %v567, %v564
    %v841 = vpack.c.b16 %v568, %v565
    %v842 = vpack.c.b16 %v569, %v566
    %v843 = vpack.c.b16 %v573, %v570
    %v844 = vpack.c.b16 %v574, %v571
    %v845 = vpack.c.b16 %v575, %v572
    %v846 = vpack.c.b16 %v579, %v576
    %v847 = vpack.c.b16 %v580, %v577
    %v848 = vpack.c.b16 %v581, %v578
    %v849 = vpack.c.b16 %v585, %v582
    %v850 = vpack.c.b16 %v586, %v583
    %v851 = vpack.c.b16 %v587, %v584
    %v852 = vpack.c.b16 %v591, %v588
    %v853 = vpack.c.b16 %v592, %v589
    %v854 = vpack.c.b16 %v593, %v590
    %v855 = vpack.c.b16 %v597, %v594
    %v856 = vpack.c.b16 %v598, %v595
    %v857 = vpack.c.b16 %v599, %v596
    %v858 = vpack.c.b16 %v603, %v600
    %v859 = vpack.c.b16 %v604, %v601
    %v860 = vpack.c.b16 %v605, %v602
    %v861 = vpack.c.b16 %v609, %v606
    %v862 = vpack.c.b16 %v610, %v607
    %v863 = vpack.c.b16 %v611, %v608
    %v864 = vpack.c.b16 %v615, %v612
    %v865 = vpack.c.b16 %v616, %v613
    %v866 = vpack.c.b16 %v617, %v614
    %v867 = vpack.c.b16 %v621, %v618
    %v868 = vpack.c.b16 %v622, %v619
    %v869 = vpack.c.b16 %v623, %v620
    %v870 = vpack.c.b16 %v627, %v624
    %v871 = vpack.c.b16 %v628, %v625
    %v872 = vpack.c.b16 %v629, %v626
    %v873 = vpack.c.b16 %v633, %v630
    %v874 = vpack.c.b16 %v634, %v631
    %v875 = vpack.c.b16 %v635, %v632
    %v876 = vpack.c.b16 %v639, %v636
    %v877 = vpack.c.b16 %v640, %v637
    %v878 = vpack.c.b16 %v641, %v638
    %v879 = vpack.c.b16 %v645, %v642
    %v880 = vpack.c.b16 %v646, %v643
    %v881 = vpack.c.b16 %v647, %v644
    %v882 = vpack.c.b16 %v651, %v648
    %v883 = vpack.c.b16 %v652, %v649
    %v884 = vpack.c.b16 %v653, %v650
    %v885 = vpack.c.b16 %v657, %v654
    %v886 = vpack.c.b16 %v658, %v655
    %v887 = vpack.c.b16 %v659, %v656
    %v888 = vpack.c.b16 %v663, %v660
    %v889 = vpack.c.b16 %v664, %v661
    %v890 = vpack.c.b16 %v665, %v662
    %v891 = vpack.c.b16 %v669, %v666
    %v892 = vpack.c.b16 %v670, %v667
    %v893 = vpack.c.b16 %v671, %v668
    %v894 = vpack.c.b16 %v675, %v672
    %v895 = vpack.c.b16 %v676, %v673
    %v896 = vpack.c.b16 %v677, %v674
    %v897 = vpack.c.b16 %v681, %v678
    %v898 = vpack.c.b16 %v682, %v679
    %v899 = vpack.c.b16 %v683, %v680
    %v900 = vpack.c.b16 %v687, %v684
    %v901 = vpack.c.b16 %v688, %v685
    %v902 = vpack.c.b16 %v689, %v686
    %v903 = vpack.c.b16 %v693, %v690
    %v904 = vpack.c.b16 %v694, %v691
    %v905 = vpack.c.b16 %v695, %v692
    %v906 = vpack.c.b16 %v699, %v696
    %v907 = vpack.c.b16 %v700, %v697
    %v908 = vpack.c.b16 %v701, %v698
    %v909 = vpack.c.b16 %v705, %v702
    %v910 = vpack.c.b16 %v706, %v703
    %v911 = vpack.c.b16 %v707, %v704
    %v912 = vpack.c.b16 %v711, %v708
    %v913 = vpack.c.b16 %v712, %v709
    %v914 = vpack.c.b16 %v713, %v710
    %v915 = vpack.c.b16 %v717, %v714
    %v916 = vpack.c.b16 %v718, %v715
    %v917 = vpack.c.b16 %v719, %v716
    %v918 = vpack.c.b16 %v723, %v720
    %v919 = vpack.c.b16 %v724, %v721
    %v920 = vpack.c.b16 %v725, %v722
    %v921 = vpack.c.b16 %v729, %v726
    %v922 = vpack.c.b16 %v730, %v727
    %v923 = vpack.c.b16 %v731, %v728
    %v924 = vpack.c.b16 %v735, %v732
    %v925 = vpack.c.b16 %v736, %v733
    %v926 = vpack.c.b16 %v737, %v734
    %v927 = vpack.c.b16 %v741, %v738
    %v928 = vpack.c.b16 %v742, %v739
    %v929 = vpack.c.b16 %v743, %v740
    %v930 = vpack.c.b16 %v747, %v744
    %v931 = vpack.c.b16 %v748, %v745
    %v932 = vpack.c.b16 %v749, %v746
    %v933 = vpack.c.b16 %v753, %v750
    %v934 = vpack.c.b16 %v754, %v751
    %v935 = vpack.c.b16 %v755, %v752
    %v936 = vpack.c.b16 %v759, %v756
    %v937 = vpack.c.b16 %v760, %v757
    %v938 = vpack.c.b16 %v761, %v758
    %v939 = vpack.c.b16 %v765, %v762
    %v940 = vpack.c.b16 %v766, %v763
    %v941 = vpack.c.b16 %v767, %v764
    %v942 = vpack.c.b16 %v771, %v768
    %v943 = vpack.c.b16 %v772, %v769
    %v944 = vpack.c.b16 %v773, %v770
    %v945 = vpack.c.b16 %v777, %v774
    %v946 = vpack.c.b16 %v778, %v775
    %v947 = vpack.c.b16 %v779, %v776
    %v948 = vpack.c.b16 %v783, %v780
    %v949 = vpack.c.b16 %v784, %v781
    %v950 = vpack.c.b16 %v785, %v782
    %v951 = vpack.c.b16 %v789, %v786
    %v952 = vpack.c.b16 %v790, %v787
    %v953 = vpack.c.b16 %v791, %v788
    %v954 = vpack.c.b16 %v795, %v792
    %v955 = vpack.c.b16 %v796, %v793
    %v956 = vpack.c.b16 %v797, %v794
    %v957 = vpack.c.b16 %v801, %v798
    %v958 = vpack.c.b16 %v802, %v799
    %v959 = vpack.c.b16 %v803, %v800
    %v960 = vpack.c.b16 %v807, %v804
    %v961 = vpack.c.b16 %v808, %v805
    %v962 = vpack.c.b16 %v809, %v806
    %v963 = vpack.c.b16 %v813, %v810
    %v964 = vpack.c.b16 %v814, %v811
    %v965 = vpack.c.b16 %v815, %v812
    %v966 = vpack.c.b16 %v819, %v816
    %v967 = vpack.c.b16 %v820, %v817
    %v968 = vpack.c.b16 %v821, %v818
    %vm1116 = vcmask 130048
    %v1118 = vsel %vm1116, %v113, 0
    %1120 = vmatprep.subr.bf16.mxu0 %v823
    %1121 = vmatpush1.bf16.msra.mxu0 %v822
    %1122 = vmatprep.subr.bf16.mxu0 %v826
    %1123 = vmatpush1.bf16.msra.mxu0 %v825
    %1124 = vmatprep.subr.bf16.mxu0 %v829
    %1125 = vmatpush1.bf16.msra.mxu0 %v828
    %1126 = vmatprep.subr.bf16.mxu0 %v832
    %1127 = vmatpush1.bf16.msra.mxu0 %v831
    %1128 = vmatprep.subr.bf16.mxu0 %v835
    %1129 = vmatpush1.bf16.msra.mxu0 %v834
    %1130 = vmatprep.subr.bf16.mxu0 %v838
    %1131 = vmatpush1.bf16.msra.mxu0 %v837
    %1132 = vmatprep.subr.bf16.mxu0 %v841
    %1133 = vmatpush1.bf16.msra.mxu0 %v840
    %1134 = vmatprep.subr.bf16.mxu0 %v844
    %1135 = vmatpush1.bf16.msra.mxu0 %v843
    %1136 = vmatprep.subr.bf16.mxu0 %v847
    %1137 = vmatpush1.bf16.msra.mxu0 %v846
    %1138 = vmatprep.subr.bf16.mxu0 %v850
    %1139 = vmatpush1.bf16.msra.mxu0 %v849
    %1140 = vmatprep.subr.bf16.mxu0 %v853
    %1141 = vmatpush1.bf16.msra.mxu0 %v852
    %1142 = vmatprep.subr.bf16.mxu0 %v856
    %1143 = vmatpush1.bf16.msra.mxu0 %v855
    %1144 = vmatprep.subr.bf16.mxu0 %v859
    %1145 = vmatpush1.bf16.msra.mxu0 %v858
    %1146 = vmatprep.subr.bf16.mxu0 %v862
    %1147 = vmatpush1.bf16.msra.mxu0 %v861
    %1148 = vmatprep.subr.bf16.mxu0 %v865
    %1149 = vmatpush1.bf16.msra.mxu0 %v864
    %1150 = vmatprep.subr.bf16.mxu0 %v868
    %1151 = vmatpush1.bf16.msra.mxu0 %v867
    %1152 = vmatprep.mubr.bf16.mxu0 %v108
    %1153 = vmatmul.mubr.bf16.gmra.mrb[0].mxu0 %v107
    %v1154 = vpop.f32.mrb[0].mxu0
    %v1155 = vadd.f32 %v320, %v1154
    %v1156 = vpop.f32.mrb[0].mxu0
    %v1157 = vadd.f32 %v324, %v1156
    %v1158 = vpop.f32.mrb[0].mxu0
    %v1159 = vadd.f32 %v320, %v1158
    %v1160 = vpop.f32.mrb[0].mxu0
    %v1161 = vadd.f32 %v324, %v1160
    %1162 = vdwg.mxu0
    %1163 = vmatprep.subr.bf16.mxu0 %v871
    %1164 = vmatpush1.bf16.msra.mxu0 %v870
    %1165 = vmatprep.subr.bf16.mxu0 %v874
    %1166 = vmatpush1.bf16.msra.mxu0 %v873
    %1167 = vmatprep.subr.bf16.mxu0 %v877
    %1168 = vmatpush1.bf16.msra.mxu0 %v876
    %1169 = vmatprep.subr.bf16.mxu0 %v880
    %1170 = vmatpush1.bf16.msra.mxu0 %v879
    %1171 = vmatprep.subr.bf16.mxu0 %v883
    %1172 = vmatpush1.bf16.msra.mxu0 %v882
    %1173 = vmatprep.subr.bf16.mxu0 %v886
    %1174 = vmatpush1.bf16.msra.mxu0 %v885
    %1175 = vmatprep.subr.bf16.mxu0 %v889
    %1176 = vmatpush1.bf16.msra.mxu0 %v888
    %1177 = vmatprep.subr.bf16.mxu0 %v892
    %1178 = vmatpush1.bf16.msra.mxu0 %v891
    %1179 = vmatprep.subr.bf16.mxu0 %v895
    %1180 = vmatpush1.bf16.msra.mxu0 %v894
    %1181 = vmatprep.subr.bf16.mxu0 %v898
    %1182 = vmatpush1.bf16.msra.mxu0 %v897
    %1183 = vmatprep.subr.bf16.mxu0 %v901
    %1184 = vmatpush1.bf16.msra.mxu0 %v900
    %1185 = vmatprep.subr.bf16.mxu0 %v904
    %1186 = vmatpush1.bf16.msra.mxu0 %v903
    %1187 = vmatprep.subr.bf16.mxu0 %v907
    %1188 = vmatpush1.bf16.msra.mxu0 %v906
    %1189 = vmatprep.subr.bf16.mxu0 %v910
    %1190 = vmatpush1.bf16.msra.mxu0 %v909
    %1191 = vmatprep.subr.bf16.mxu0 %v913
    %1192 = vmatpush1.bf16.msra.mxu0 %v912
    %1193 = vmatprep.subr.bf16.mxu0 %v916
    %1194 = vmatpush1.bf16.msra.mxu0 %v915
    %1195 = vmatprep.mubr.bf16.mxu0 %v110
    %1196 = vmatmul.mubr.bf16.gmra.mrb[0].mxu0 %v109
    %v1197 = vpop.f32.mrb[0].mxu0
    %v1198 = vadd.f32 %v1155, %v1197
    %v1199 = vpop.f32.mrb[0].mxu0
    %v1200 = vadd.f32 %v1157, %v1199
    %v1201 = vpop.f32.mrb[0].mxu0
    %v1202 = vadd.f32 %v1159, %v1201
    %v1203 = vpop.f32.mrb[0].mxu0
    %v1204 = vadd.f32 %v1161, %v1203
    %1205 = vdwg.mxu0
    %1206 = vmatprep.subr.bf16.mxu0 %v919
    %1207 = vmatpush1.bf16.msra.mxu0 %v918
    %1208 = vmatprep.subr.bf16.mxu0 %v922
    %1209 = vmatpush1.bf16.msra.mxu0 %v921
    %1210 = vmatprep.subr.bf16.mxu0 %v925
    %1211 = vmatpush1.bf16.msra.mxu0 %v924
    %1212 = vmatprep.subr.bf16.mxu0 %v928
    %1213 = vmatpush1.bf16.msra.mxu0 %v927
    %1214 = vmatprep.subr.bf16.mxu0 %v931
    %1215 = vmatpush1.bf16.msra.mxu0 %v930
    %1216 = vmatprep.subr.bf16.mxu0 %v934
    %1217 = vmatpush1.bf16.msra.mxu0 %v933
    %1218 = vmatprep.subr.bf16.mxu0 %v937
    %1219 = vmatpush1.bf16.msra.mxu0 %v936
    %1220 = vmatprep.subr.bf16.mxu0 %v940
    %1221 = vmatpush1.bf16.msra.mxu0 %v939
    %1222 = vmatprep.subr.bf16.mxu0 %v943
    %1223 = vmatpush1.bf16.msra.mxu0 %v942
    %1224 = vmatprep.subr.bf16.mxu0 %v946
    %1225 = vmatpush1.bf16.msra.mxu0 %v945
    %1226 = vmatprep.subr.bf16.mxu0 %v949
    %1227 = vmatpush1.bf16.msra.mxu0 %v948
    %1228 = vmatprep.subr.bf16.mxu0 %v952
    %1229 = vmatpush1.bf16.msra.mxu0 %v951
    %1230 = vmatprep.subr.bf16.mxu0 %v955
    %1231 = vmatpush1.bf16.msra.mxu0 %v954
    %1232 = vmatprep.subr.bf16.mxu0 %v958
    %1233 = vmatpush1.bf16.msra.mxu0 %v957
    %1234 = vmatprep.subr.bf16.mxu0 %v961
    %1235 = vmatpush1.bf16.msra.mxu0 %v960
    %1236 = vmatprep.subr.bf16.mxu0 %v964
    %1237 = vmatpush1.bf16.msra.mxu0 %v963
    %1238 = vmatprep.mubr.bf16.mxu0 %v112
    %1239 = vmatmul.mubr.bf16.gmra.mrb[0].mxu0 %v111
    %v1240 = vpop.f32.mrb[0].mxu0
    %v1241 = vadd.f32 %v1198, %v1240
    %v1242 = vpop.f32.mrb[0].mxu0
    %v1243 = vadd.f32 %v1200, %v1242
    %v1244 = vpop.f32.mrb[0].mxu0
    %v1245 = vadd.f32 %v1202, %v1244
    %v1246 = vpop.f32.mrb[0].mxu0
    %v1247 = vadd.f32 %v1204, %v1246
    %1248 = vdwg.mxu0
    %1249 = vmatprep.subr.bf16.mxu0 %v967
    %1250 = vmatpush1.bf16.msra.mxu0 %v966
    %1251 = vmatprep.subr.bf16.mxu0 0
    %1252 = vmatpush1.bf16.msra.mxu0 0
    %1253 = vmatprep.subr.bf16.mxu0 0
    %1254 = vmatpush1.bf16.msra.mxu0 0
    %1255 = vmatprep.subr.bf16.mxu0 0
    %1256 = vmatpush1.bf16.msra.mxu0 0
    %1257 = vmatprep.subr.bf16.mxu0 0
    %1258 = vmatpush1.bf16.msra.mxu0 0
    %1259 = vmatprep.subr.bf16.mxu0 0
    %1260 = vmatpush1.bf16.msra.mxu0 0
    %1261 = vmatprep.subr.bf16.mxu0 0
    %1262 = vmatpush1.bf16.msra.mxu0 0
    %1263 = vmatprep.subr.bf16.mxu0 0
    %1264 = vmatpush1.bf16.msra.mxu0 0
    %1265 = vmatprep.subr.bf16.mxu0 0
    %1266 = vmatpush1.bf16.msra.mxu0 0
    %1267 = vmatprep.subr.bf16.mxu0 0
    %1268 = vmatpush1.bf16.msra.mxu0 0
    %1269 = vmatprep.subr.bf16.mxu0 0
    %1270 = vmatpush1.bf16.msra.mxu0 0
    %1271 = vmatprep.subr.bf16.mxu0 0
    %1272 = vmatpush1.bf16.msra.mxu0 0
    %1273 = vmatprep.subr.bf16.mxu0 0
    %1274 = vmatpush1.bf16.msra.mxu0 0
    %1275 = vmatprep.subr.bf16.mxu0 0
    %1276 = vmatpush1.bf16.msra.mxu0 0
    %1277 = vmatprep.subr.bf16.mxu0 0
    %1278 = vmatpush1.bf16.msra.mxu0 0
    %1279 = vmatprep.subr.bf16.mxu0 0
    %1280 = vmatpush1.bf16.msra.mxu0 0
    %1281 = vmatprep.mubr.bf16.mxu0 0
    %1282 = vmatmul.mubr.bf16.gmra.mrb[0].mxu0 %v1118
    %v1283 = vpop.f32.mrb[0].mxu0
    %v1284 = vadd.f32 %v1241, %v1283
    %v1285 = vpop.f32.mrb[0].mxu0
    %v1286 = vadd.f32 %v1243, %v1285
    %v1287 = vpop.f32.mrb[0].mxu0
    %v1288 = vadd.f32 %v1245, %v1287
    %v1289 = vpop.f32.mrb[0].mxu0
    %v1290 = vadd.f32 %v1247, %v1289
    %1291 = vdwg.mxu0
    %1292 = vmatprep.subr.bf16.mxu0 0
    %1293 = vmatpush1.bf16.msra.mxu0 %v824
    %1294 = vmatprep.subr.bf16.mxu0 0
    %1295 = vmatpush1.bf16.msra.mxu0 %v827
    %1296 = vmatprep.subr.bf16.mxu0 0
    %1297 = vmatpush1.bf16.msra.mxu0 %v830
    %1298 = vmatprep.subr.bf16.mxu0 0
    %1299 = vmatpush1.bf16.msra.mxu0 %v833
    %1300 = vmatprep.subr.bf16.mxu0 0
    %1301 = vmatpush1.bf16.msra.mxu0 %v836
    %1302 = vmatprep.subr.bf16.mxu0 0
    %1303 = vmatpush1.bf16.msra.mxu0 %v839
    %1304 = vmatprep.subr.bf16.mxu0 0
    %1305 = vmatpush1.bf16.msra.mxu0 %v842
    %1306 = vmatprep.subr.bf16.mxu0 0
    %1307 = vmatpush1.bf16.msra.mxu0 %v845
    %1308 = vmatprep.subr.bf16.mxu0 0
    %1309 = vmatpush1.bf16.msra.mxu0 %v848
    %1310 = vmatprep.subr.bf16.mxu0 0
    %1311 = vmatpush1.bf16.msra.mxu0 %v851
    %1312 = vmatprep.subr.bf16.mxu0 0
    %1313 = vmatpush1.bf16.msra.mxu0 %v854
    %1314 = vmatprep.subr.bf16.mxu0 0
    %1315 = vmatpush1.bf16.msra.mxu0 %v857
    %1316 = vmatprep.subr.bf16.mxu0 0
    %1317 = vmatpush1.bf16.msra.mxu0 %v860
    %1318 = vmatprep.subr.bf16.mxu0 0
    %1319 = vmatpush1.bf16.msra.mxu0 %v863
    %1320 = vmatprep.subr.bf16.mxu0 0
    %1321 = vmatpush1.bf16.msra.mxu0 %v866
    %1322 = vmatprep.subr.bf16.mxu0 0
    %1323 = vmatpush1.bf16.msra.mxu0 %v869
    %1324 = vmatprep.mubr.bf16.mxu0 %v108
    %1325 = vmatmul.mubr.bf16.gmra.mrb[0].mxu0 %v107
    %v1326 = vpop.f32.mrb[0].mxu0
    %v1327 = vadd.f32 %v328, %v1326
    %v1328 = vpop.f32.mrb[0].mxu0
    %v1329 = vpop.f32.mrb[0].mxu0
    %v1330 = vadd.f32 %v328, %v1329
    %v1331 = vpop.f32.mrb[0].mxu0
    %1332 = vdwg.mxu0
    %1333 = vmatprep.subr.bf16.mxu0 0
    %1334 = vmatpush1.bf16.msra.mxu0 %v872
    %1335 = vmatprep.subr.bf16.mxu0 0
    %1336 = vmatpush1.bf16.msra.mxu0 %v875
    %1337 = vmatprep.subr.bf16.mxu0 0
    %1338 = vmatpush1.bf16.msra.mxu0 %v878
    %1339 = vmatprep.subr.bf16.mxu0 0
    %1340 = vmatpush1.bf16.msra.mxu0 %v881
    %1341 = vmatprep.subr.bf16.mxu0 0
    %1342 = vmatpush1.bf16.msra.mxu0 %v884
    %1343 = vmatprep.subr.bf16.mxu0 0
    %1344 = vmatpush1.bf16.msra.mxu0 %v887
    %1345 = vmatprep.subr.bf16.mxu0 0
    %1346 = vmatpush1.bf16.msra.mxu0 %v890
    %1347 = vmatprep.subr.bf16.mxu0 0
    %1348 = vmatpush1.bf16.msra.mxu0 %v893
    %1349 = vmatprep.subr.bf16.mxu0 0
    %1350 = vmatpush1.bf16.msra.mxu0 %v896
    %1351 = vmatprep.subr.bf16.mxu0 0
    %1352 = vmatpush1.bf16.msra.mxu0 %v899
    %1353 = vmatprep.subr.bf16.mxu0 0
    %1354 = vmatpush1.bf16.msra.mxu0 %v902
    %1355 = vmatprep.subr.bf16.mxu0 0
    %1356 = vmatpush1.bf16.msra.mxu0 %v905
    %1357 = vmatprep.subr.bf16.mxu0 0
    %1358 = vmatpush1.bf16.msra.mxu0 %v908
    %1359 = vmatprep.subr.bf16.mxu0 0
    %1360 = vmatpush1.bf16.msra.mxu0 %v911
    %1361 = vmatprep.subr.bf16.mxu0 0
    %1362 = vmatpush1.bf16.msra.mxu0 %v914
    %1363 = vmatprep.subr.bf16.mxu0 0
    %1364 = vmatpush1.bf16.msra.mxu0 %v917
    %1365 = vmatprep.mubr.bf16.mxu0 %v110
    %1366 = vmatmul.mubr.bf16.gmra.mrb[0].mxu0 %v109
    %v1367 = vpop.f32.mrb[0].mxu0
    %v1368 = vadd.f32 %v1327, %v1367
    %v1369 = vpop.f32.mrb[0].mxu0
    %v1370 = vpop.f32.mrb[0].mxu0
    %v1371 = vadd.f32 %v1330, %v1370
    %v1372 = vpop.f32.mrb[0].mxu0
    %1373 = vdwg.mxu0
    %1374 = vmatprep.subr.bf16.mxu0 0
    %1375 = vmatpush1.bf16.msra.mxu0 %v920
    %1376 = vmatprep.subr.bf16.mxu0 0
    %1377 = vmatpush1.bf16.msra.mxu0 %v923
    %1378 = vmatprep.subr.bf16.mxu0 0
    %1379 = vmatpush1.bf16.msra.mxu0 %v926
    %1380 = vmatprep.subr.bf16.mxu0 0
    %1381 = vmatpush1.bf16.msra.mxu0 %v929
    %1382 = vmatprep.subr.bf16.mxu0 0
    %1383 = vmatpush1.bf16.msra.mxu0 %v932
    %1384 = vmatprep.subr.bf16.mxu0 0
    %1385 = vmatpush1.bf16.msra.mxu0 %v935
    %1386 = vmatprep.subr.bf16.mxu0 0
    %1387 = vmatpush1.bf16.msra.mxu0 %v938
    %1388 = vmatprep.subr.bf16.mxu0 0
    %1389 = vmatpush1.bf16.msra.mxu0 %v941
    %1390 = vmatprep.subr.bf16.mxu0 0
    %1391 = vmatpush1.bf16.msra.mxu0 %v944
    %1392 = vmatprep.subr.bf16.mxu0 0
    %1393 = vmatpush1.bf16.msra.mxu0 %v947
    %1394 = vmatprep.subr.bf16.mxu0 0
    %1395 = vmatpush1.bf16.msra.mxu0 %v950
    %1396 = vmatprep.subr.bf16.mxu0 0
    %1397 = vmatpush1.bf16.msra.mxu0 %v953
    %1398 = vmatprep.subr.bf16.mxu0 0
    %1399 = vmatpush1.bf16.msra.mxu0 %v956
    %1400 = vmatprep.subr.bf16.mxu0 0
    %1401 = vmatpush1.bf16.msra.mxu0 %v959
    %1402 = vmatprep.subr.bf16.mxu0 0
    %1403 = vmatpush1.bf16.msra.mxu0 %v962
    %1404 = vmatprep.subr.bf16.mxu0 0
    %1405 = vmatpush1.bf16.msra.mxu0 %v965
    %1406 = vmatprep.mubr.bf16.mxu0 %v112
    %1407 = vmatmul.mubr.bf16.gmra.mrb[0].mxu0 %v111
    %v1408 = vpop.f32.mrb[0].mxu0
    %v1409 = vadd.f32 %v1368, %v1408
    %v1410 = vpop.f32.mrb[0].mxu0
    %v1411 = vpop.f32.mrb[0].mxu0
    %v1412 = vadd.f32 %v1371, %v1411
    %v1413 = vpop.f32.mrb[0].mxu0
    %1414 = vdwg.mxu0
    %1415 = vmatprep.subr.bf16.mxu0 0
    %1416 = vmatpush1.bf16.msra.mxu0 %v968
    %1417 = vmatprep.subr.bf16.mxu0 0
    %1418 = vmatpush1.bf16.msra.mxu0 0
    %1419 = vmatprep.subr.bf16.mxu0 0
    %1420 = vmatpush1.bf16.msra.mxu0 0
    %1421 = vmatprep.subr.bf16.mxu0 0
    %1422 = vmatpush1.bf16.msra.mxu0 0
    %1423 = vmatprep.subr.bf16.mxu0 0
    %1424 = vmatpush1.bf16.msra.mxu0 0
    %1425 = vmatprep.subr.bf16.mxu0 0
    %1426 = vmatpush1.bf16.msra.mxu0 0
    %1427 = vmatprep.subr.bf16.mxu0 0
    %1428 = vmatpush1.bf16.msra.mxu0 0
    %1429 = vmatprep.subr.bf16.mxu0 0
    %1430 = vmatpush1.bf16.msra.mxu0 0
    %1431 = vmatprep.subr.bf16.mxu0 0
    %1432 = vmatpush1.bf16.msra.mxu0 0
    %1433 = vmatprep.subr.bf16.mxu0 0
    %1434 = vmatpush1.bf16.msra.mxu0 0
    %1435 = vmatprep.subr.bf16.mxu0 0
    %1436 = vmatpush1.bf16.msra.mxu0 0
    %1437 = vmatprep.subr.bf16.mxu0 0
    %1438 = vmatpush1.bf16.msra.mxu0 0
    %1439 = vmatprep.subr.bf16.mxu0 0
    %1440 = vmatpush1.bf16.msra.mxu0 0
    %1441 = vmatprep.subr.bf16.mxu0 0
    %1442 = vmatpush1.bf16.msra.mxu0 0
    %1443 = vmatprep.subr.bf16.mxu0 0
    %1444 = vmatpush1.bf16.msra.mxu0 0
    %1445 = vmatprep.subr.bf16.mxu0 0
    %1446 = vmatpush1.bf16.msra.mxu0 0
    %1447 = vmatprep.mubr.bf16.mxu0 0
    %1448 = vmatmul.mubr.bf16.gmra.mrb[0].mxu0 %v1118
    %v1449 = vpop.f32.mrb[0].mxu0
    %v1450 = vadd.f32 %v1409, %v1449
    %v1451 = vpop.f32.mrb[0].mxu0
    %v1452 = vpop.f32.mrb[0].mxu0
    %v1453 = vadd.f32 %v1412, %v1452
    %v1454 = vpop.f32.mrb[0].mxu0
    %1455 = vdwg.mxu0
    %v1456 = vtanh.pop %v1284
    %v1457 = vtanh.pop %v1286
    %v1458 = vtanh.pop %v1450
    %v1459 = vtanh.pop %v1288
    %v1460 = vtanh.pop %v1290
    %v1461 = vtanh.pop %v1453
    %v1462 = vpack.c.bf16 %v1459, %v1456
    %v1463 = vpack.c.bf16 %v1460, %v1457
    %v1464 = vpack.c.bf16 %v1461, %v1458
    %v1465 = vld [vmem:[#allocation2] sm:$0xff]
    %v1466 = vld [vmem:[#allocation2 + $0x8] sm:$0xf]
    %v1467 = vld [vmem:[#allocation2 + $0xc] sm:$0xff]
    %v1468 = vld [vmem:[#allocation2 + $0x14] sm:$0xf]
    %v1469 = vld [vmem:[#allocation2 + $0x18] sm:$0xff]
    %v1470 = vld [vmem:[#allocation2 + $0x20] sm:$0xf]
    %v1471 = vld [vmem:[#allocation2 + $0x24] sm:$0xff]
    %v1472 = vld [vmem:[#allocation2 + $0x2c] sm:$0xf]
    %v1473 = vld [vmem:[#allocation2 + $0x30] sm:$0xff]
    %v1474 = vld [vmem:[#allocation2 + $0x38] sm:$0xf]
    %v1475 = vld [vmem:[#allocation2 + $0x3c] sm:$0xff]
    %v1476 = vld [vmem:[#allocation2 + $0x44] sm:$0xf]
    %v1477 = vld [vmem:[#allocation2 + $0x48] sm:$0xff]
    %v1478 = vld [vmem:[#allocation2 + $0x50] sm:$0xf]
    %v1479 = vld [vmem:[#allocation2 + $0x54] sm:$0xff]
    %v1480 = vld [vmem:[#allocation2 + $0x5c] sm:$0xf]
    %v1481 = vld [vmem:[#allocation2 + $0x60] sm:$0xff]
    %v1482 = vld [vmem:[#allocation2 + $0x68] sm:$0xf]
    %v1483 = vld [vmem:[#allocation2 + $0x6c] sm:$0xff]
    %v1484 = vld [vmem:[#allocation2 + $0x74] sm:$0xf]
    %v1485 = vld [vmem:[#allocation2 + $0x78] sm:$0xff]
    %v1486 = vld [vmem:[#allocation2 + $0x80] sm:$0xf]
    %v1487 = vld [vmem:[#allocation2 + $0x84] sm:$0xff]
    %v1488 = vld [vmem:[#allocation2 + $0x8c] sm:$0xf]
    %v1489 = vld [vmem:[#allocation2 + $0x90] sm:$0xff]
    %v1490 = vld [vmem:[#allocation2 + $0x98] sm:$0xf]
    %v1491 = vld [vmem:[#allocation2 + $0x9c] sm:$0xff]
    %v1492 = vld [vmem:[#allocation2 + $0xa4] sm:$0xf]
    %v1493 = vld [vmem:[#allocation2 + $0xa8] sm:$0xff]
    %v1494 = vld [vmem:[#allocation2 + $0xb0] sm:$0xf]
    %v1495 = vld [vmem:[#allocation2 + $0xb4] sm:$0xff]
    %v1496 = vld [vmem:[#allocation2 + $0xbc] sm:$0xf]
    %v1497 = vld [vmem:[#allocation2 + $0xc0] sm:$0xff]
    %v1498 = vld [vmem:[#allocation2 + $0xc8] sm:$0xf]
    %v1499 = vld [vmem:[#allocation2 + $0xcc] sm:$0xff]
    %v1500 = vld [vmem:[#allocation2 + $0xd4] sm:$0xf]
    %v1501 = vld [vmem:[#allocation2 + $0xd8] sm:$0xff]
    %v1502 = vld [vmem:[#allocation2 + $0xe0] sm:$0xf]
    %v1503 = vld [vmem:[#allocation2 + $0xe4] sm:$0xff]
    %v1504 = vld [vmem:[#allocation2 + $0xec] sm:$0xf]
    %v1505 = vld [vmem:[#allocation2 + $0xf0] sm:$0xff]
    %v1506 = vld [vmem:[#allocation2 + $0xf8] sm:$0xf]
    %v1507 = vld [vmem:[#allocation2 + $0xfc] sm:$0xff]
    %v1508 = vld [vmem:[#allocation2 + $0x104] sm:$0xf]
    %v1509 = vld [vmem:[#allocation2 + $0x108] sm:$0xff]
    %v1510 = vld [vmem:[#allocation2 + $0x110] sm:$0xf]
    %v1511 = vld [vmem:[#allocation2 + $0x114] sm:$0xff]
    %v1512 = vld [vmem:[#allocation2 + $0x11c] sm:$0xf]
    %v1513 = vld [vmem:[#allocation2 + $0x120] sm:$0xff]
    %v1514 = vld [vmem:[#allocation2 + $0x128] sm:$0xf]
    %v1515 = vld [vmem:[#allocation2 + $0x12c] sm:$0xff]
    %v1516 = vld [vmem:[#allocation2 + $0x134] sm:$0xf]
    %v1517 = vld [vmem:[#allocation2 + $0x138] sm:$0xff]
    %v1518 = vld [vmem:[#allocation2 + $0x140] sm:$0xf]
    %v1519 = vld [vmem:[#allocation2 + $0x144] sm:$0xff]
    %v1520 = vld [vmem:[#allocation2 + $0x14c] sm:$0xf]
    %v1521 = vld [vmem:[#allocation2 + $0x150] sm:$0xff]
    %v1522 = vld [vmem:[#allocation2 + $0x158] sm:$0xf]
    %v1523 = vld [vmem:[#allocation2 + $0x15c] sm:$0xff]
    %v1524 = vld [vmem:[#allocation2 + $0x164] sm:$0xf]
    %v1525 = vld [vmem:[#allocation2 + $0x168] sm:$0xff]
    %v1526 = vld [vmem:[#allocation2 + $0x170] sm:$0xf]
    %v1527 = vld [vmem:[#allocation2 + $0x174] sm:$0xff]
    %v1528 = vld [vmem:[#allocation2 + $0x17c] sm:$0xf]
    %v1529 = vld [vmem:[#allocation2 + $0x180] sm:$0xff]
    %v1530 = vld [vmem:[#allocation2 + $0x188] sm:$0xf]
    %v1531 = vld [vmem:[#allocation2 + $0x18c] sm:$0xff]
    %v1532 = vld [vmem:[#allocation2 + $0x194] sm:$0xf]
    %v1533 = vld [vmem:[#allocation2 + $0x198] sm:$0xff]
    %v1534 = vld [vmem:[#allocation2 + $0x1a0] sm:$0xf]
    %v1535 = vld [vmem:[#allocation2 + $0x1a4] sm:$0xff]
    %v1536 = vld [vmem:[#allocation2 + $0x1ac] sm:$0xf]
    %v1537 = vld [vmem:[#allocation2 + $0x1b0] sm:$0xff]
    %v1538 = vld [vmem:[#allocation2 + $0x1b8] sm:$0xf]
    %v1539 = vld [vmem:[#allocation2 + $0x1bc] sm:$0xff]
    %v1540 = vld [vmem:[#allocation2 + $0x1c4] sm:$0xf]
    %v1541 = vld [vmem:[#allocation2 + $0x1c8] sm:$0xff]
    %v1542 = vld [vmem:[#allocation2 + $0x1d0] sm:$0xf]
    %v1543 = vld [vmem:[#allocation2 + $0x1d4] sm:$0xff]
    %v1544 = vld [vmem:[#allocation2 + $0x1dc] sm:$0xf]
    %v1545 = vld [vmem:[#allocation2 + $0x1e0] sm:$0xff]
    %v1546 = vld [vmem:[#allocation2 + $0x1e8] sm:$0xf]
    %v1547 = vld [vmem:[#allocation2 + $0x1ec] sm:$0xff]
    %v1548 = vld [vmem:[#allocation2 + $0x1f4] sm:$0xf]
    %v1549 = vld [vmem:[#allocation2 + $0x1f8] sm:$0xff]
    %v1550 = vld [vmem:[#allocation2 + $0x200] sm:$0xf]
    %v1551 = vld [vmem:[#allocation2 + $0x204] sm:$0xff]
    %v1552 = vld [vmem:[#allocation2 + $0x20c] sm:$0xf]
    %v1553 = vld [vmem:[#allocation2 + $0x210] sm:$0xff]
    %v1554 = vld [vmem:[#allocation2 + $0x218] sm:$0xf]
    %v1555 = vld [vmem:[#allocation2 + $0x21c] sm:$0xff]
    %v1556 = vld [vmem:[#allocation2 + $0x224] sm:$0xf]
    %v1557 = vld [vmem:[#allocation2 + $0x228] sm:$0xff]
    %v1558 = vld [vmem:[#allocation2 + $0x230] sm:$0xf]
    %v1559 = vld [vmem:[#allocation2 + $0x234] sm:$0xff]
    %v1560 = vld [vmem:[#allocation2 + $0x23c] sm:$0xf]
    %v1562 = vlaneseq
    %v1563 = vshrl.u32 %v1562, 7
    %v1564 = vsub.s32 0, %v1563
    %v1565 = vrot.slane %v115, %v1564
    %v1566 = vlaneseq
    %v1567 = vshrl.u32 %v1566, 7
    %v1568 = vsub.s32 1, %v1567
    %v1569 = vrot.slane %v115, %v1568
    %v1570 = vlaneseq
    %v1571 = vshrl.u32 %v1570, 7
    %v1572 = vsub.s32 2, %v1571
    %v1573 = vrot.slane %v115, %v1572
    %v1673 = vunpack.c.l.b16 %v1465
    %v1674 = vunpack.c.h.b16 %v1465
    %v1675 = vunpack.c.l.b16 %v1466
    %v1676 = vunpack.c.l.b16 %v1467
    %v1677 = vunpack.c.h.b16 %v1467
    %v1678 = vunpack.c.l.b16 %v1468
    %v1679 = vunpack.c.l.b16 %v1469
    %v1680 = vunpack.c.h.b16 %v1469
    %v1681 = vunpack.c.l.b16 %v1470
    %v1682 = vunpack.c.l.b16 %v1471
    %v1683 = vunpack.c.h.b16 %v1471
    %v1684 = vunpack.c.l.b16 %v1472
    %v1685 = vunpack.c.l.b16 %v1473
    %v1686 = vunpack.c.h.b16 %v1473
    %v1687 = vunpack.c.l.b16 %v1474
    %v1688 = vunpack.c.l.b16 %v1475
    %v1689 = vunpack.c.h.b16 %v1475
    %v1690 = vunpack.c.l.b16 %v1476
    %v1691 = vunpack.c.l.b16 %v1477
    %v1692 = vunpack.c.h.b16 %v1477
    %v1693 = vunpack.c.l.b16 %v1478
    %v1694 = vunpack.c.l.b16 %v1479
    %v1695 = vunpack.c.h.b16 %v1479
    %v1696 = vunpack.c.l.b16 %v1480
    %v1697 = vunpack.c.l.b16 %v1481
    %v1698 = vunpack.c.h.b16 %v1481
    %v1699 = vunpack.c.l.b16 %v1482
    %v1700 = vunpack.c.l.b16 %v1483
    %v1701 = vunpack.c.h.b16 %v1483
    %v1702 = vunpack.c.l.b16 %v1484
    %v1703 = vunpack.c.l.b16 %v1485
    %v1704 = vunpack.c.h.b16 %v1485
    %v1705 = vunpack.c.l.b16 %v1486
    %v1706 = vunpack.c.l.b16 %v1487
    %v1707 = vunpack.c.h.b16 %v1487
    %v1708 = vunpack.c.l.b16 %v1488
    %v1709 = vunpack.c.l.b16 %v1489
    %v1710 = vunpack.c.h.b16 %v1489
    %v1711 = vunpack.c.l.b16 %v1490
    %v1712 = vunpack.c.l.b16 %v1491
    %v1713 = vunpack.c.h.b16 %v1491
    %v1714 = vunpack.c.l.b16 %v1492
    %v1715 = vunpack.c.l.b16 %v1493
    %v1716 = vunpack.c.h.b16 %v1493
    %v1717 = vunpack.c.l.b16 %v1494
    %v1718 = vunpack.c.l.b16 %v1495
    %v1719 = vunpack.c.h.b16 %v1495
    %v1720 = vunpack.c.l.b16 %v1496
    %v1721 = vunpack.c.l.b16 %v1497
    %v1722 = vunpack.c.h.b16 %v1497
    %v1723 = vunpack.c.l.b16 %v1498
    %v1724 = vunpack.c.l.b16 %v1499
    %v1725 = vunpack.c.h.b16 %v1499
    %v1726 = vunpack.c.l.b16 %v1500
    %v1727 = vunpack.c.l.b16 %v1501
    %v1728 = vunpack.c.h.b16 %v1501
    %v1729 = vunpack.c.l.b16 %v1502
    %v1730 = vunpack.c.l.b16 %v1503
    %v1731 = vunpack.c.h.b16 %v1503
    %v1732 = vunpack.c.l.b16 %v1504
    %v1733 = vunpack.c.l.b16 %v1505
    %v1734 = vunpack.c.h.b16 %v1505
    %v1735 = vunpack.c.l.b16 %v1506
    %v1736 = vunpack.c.l.b16 %v1507
    %v1737 = vunpack.c.h.b16 %v1507
    %v1738 = vunpack.c.l.b16 %v1508
    %v1739 = vunpack.c.l.b16 %v1509
    %v1740 = vunpack.c.h.b16 %v1509
    %v1741 = vunpack.c.l.b16 %v1510
    %v1742 = vunpack.c.l.b16 %v1511
    %v1743 = vunpack.c.h.b16 %v1511
    %v1744 = vunpack.c.l.b16 %v1512
    %v1745 = vunpack.c.l.b16 %v1513
    %v1746 = vunpack.c.h.b16 %v1513
    %v1747 = vunpack.c.l.b16 %v1514
    %v1748 = vunpack.c.l.b16 %v1515
    %v1749 = vunpack.c.h.b16 %v1515
    %v1750 = vunpack.c.l.b16 %v1516
    %v1751 = vunpack.c.l.b16 %v1517
    %v1752 = vunpack.c.h.b16 %v1517
    %v1753 = vunpack.c.l.b16 %v1518
    %v1754 = vunpack.c.l.b16 %v1519
    %v1755 = vunpack.c.h.b16 %v1519
    %v1756 = vunpack.c.l.b16 %v1520
    %v1757 = vunpack.c.l.b16 %v1521
    %v1758 = vunpack.c.h.b16 %v1521
    %v1759 = vunpack.c.l.b16 %v1522
    %v1760 = vunpack.c.l.b16 %v1523
    %v1761 = vunpack.c.h.b16 %v1523
    %v1762 = vunpack.c.l.b16 %v1524
    %v1763 = vunpack.c.l.b16 %v1525
    %v1764 = vunpack.c.h.b16 %v1525
    %v1765 = vunpack.c.l.b16 %v1526
    %v1766 = vunpack.c.l.b16 %v1527
    %v1767 = vunpack.c.h.b16 %v1527
    %v1768 = vunpack.c.l.b16 %v1528
    %v1769 = vunpack.c.l.b16 %v1529
    %v1770 = vunpack.c.h.b16 %v1529
    %v1771 = vunpack.c.l.b16 %v1530
    %v1772 = vunpack.c.l.b16 %v1531
    %v1773 = vunpack.c.h.b16 %v1531
    %v1774 = vunpack.c.l.b16 %v1532
    %v1775 = vunpack.c.l.b16 %v1533
    %v1776 = vunpack.c.h.b16 %v1533
    %v1777 = vunpack.c.l.b16 %v1534
    %v1778 = vunpack.c.l.b16 %v1535
    %v1779 = vunpack.c.h.b16 %v1535
    %v1780 = vunpack.c.l.b16 %v1536
    %v1781 = vunpack.c.l.b16 %v1537
    %v1782 = vunpack.c.h.b16 %v1537
    %v1783 = vunpack.c.l.b16 %v1538
    %v1784 = vunpack.c.l.b16 %v1539
    %v1785 = vunpack.c.h.b16 %v1539
    %v1786 = vunpack.c.l.b16 %v1540
    %v1787 = vunpack.c.l.b16 %v1541
    %v1788 = vunpack.c.h.b16 %v1541
    %v1789 = vunpack.c.l.b16 %v1542
    %v1790 = vunpack.c.l.b16 %v1543
    %v1791 = vunpack.c.h.b16 %v1543
    %v1792 = vunpack.c.l.b16 %v1544
    %v1793 = vunpack.c.l.b16 %v1545
    %v1794 = vunpack.c.h.b16 %v1545
    %v1795 = vunpack.c.l.b16 %v1546
    %v1796 = vunpack.c.l.b16 %v1547
    %v1797 = vunpack.c.h.b16 %v1547
    %v1798 = vunpack.c.l.b16 %v1548
    %v1799 = vunpack.c.l.b16 %v1549
    %v1800 = vunpack.c.h.b16 %v1549
    %v1801 = vunpack.c.l.b16 %v1550
    %v1802 = vunpack.c.l.b16 %v1551
    %v1803 = vunpack.c.h.b16 %v1551
    %v1804 = vunpack.c.l.b16 %v1552
    %v1805 = vunpack.c.l.b16 %v1553
    %v1806 = vunpack.c.h.b16 %v1553
    %v1807 = vunpack.c.l.b16 %v1554
    %v1808 = vunpack.c.l.b16 %v1555
    %v1809 = vunpack.c.h.b16 %v1555
    %v1810 = vunpack.c.l.b16 %v1556
    %v1811 = vunpack.c.l.b16 %v1557
    %v1812 = vunpack.c.h.b16 %v1557
    %v1813 = vunpack.c.l.b16 %v1558
    %v1814 = vunpack.c.l.b16 %v1559
    %v1815 = vunpack.c.h.b16 %v1559
    %v1816 = vunpack.c.l.b16 %v1560
    %v1817 = vpack.c.b16 %v1676, %v1673
    %v1818 = vpack.c.b16 %v1677, %v1674
    %v1819 = vpack.c.b16 %v1678, %v1675
    %v1820 = vpack.c.b16 %v1682, %v1679
    %v1821 = vpack.c.b16 %v1683, %v1680
    %v1822 = vpack.c.b16 %v1684, %v1681
    %v1823 = vpack.c.b16 %v1688, %v1685
    %v1824 = vpack.c.b16 %v1689, %v1686
    %v1825 = vpack.c.b16 %v1690, %v1687
    %v1826 = vpack.c.b16 %v1694, %v1691
    %v1827 = vpack.c.b16 %v1695, %v1692
    %v1828 = vpack.c.b16 %v1696, %v1693
    %v1829 = vpack.c.b16 %v1700, %v1697
    %v1830 = vpack.c.b16 %v1701, %v1698
    %v1831 = vpack.c.b16 %v1702, %v1699
    %v1832 = vpack.c.b16 %v1706, %v1703
    %v1833 = vpack.c.b16 %v1707, %v1704
    %v1834 = vpack.c.b16 %v1708, %v1705
    %v1835 = vpack.c.b16 %v1712, %v1709
    %v1836 = vpack.c.b16 %v1713, %v1710
    %v1837 = vpack.c.b16 %v1714, %v1711
    %v1838 = vpack.c.b16 %v1718, %v1715
    %v1839 = vpack.c.b16 %v1719, %v1716
    %v1840 = vpack.c.b16 %v1720, %v1717
    %v1841 = vpack.c.b16 %v1724, %v1721
    %v1842 = vpack.c.b16 %v1725, %v1722
    %v1843 = vpack.c.b16 %v1726, %v1723
    %v1844 = vpack.c.b16 %v1730, %v1727
    %v1845 = vpack.c.b16 %v1731, %v1728
    %v1846 = vpack.c.b16 %v1732, %v1729
    %v1847 = vpack.c.b16 %v1736, %v1733
    %v1848 = vpack.c.b16 %v1737, %v1734
    %v1849 = vpack.c.b16 %v1738, %v1735
    %v1850 = vpack.c.b16 %v1742, %v1739
    %v1851 = vpack.c.b16 %v1743, %v1740
    %v1852 = vpack.c.b16 %v1744, %v1741
    %v1853 = vpack.c.b16 %v1748, %v1745
    %v1854 = vpack.c.b16 %v1749, %v1746
    %v1855 = vpack.c.b16 %v1750, %v1747
    %v1856 = vpack.c.b16 %v1754, %v1751
    %v1857 = vpack.c.b16 %v1755, %v1752
    %v1858 = vpack.c.b16 %v1756, %v1753
    %v1859 = vpack.c.b16 %v1760, %v1757
    %v1860 = vpack.c.b16 %v1761, %v1758
    %v1861 = vpack.c.b16 %v1762, %v1759
    %v1862 = vpack.c.b16 %v1766, %v1763
    %v1863 = vpack.c.b16 %v1767, %v1764
    %v1864 = vpack.c.b16 %v1768, %v1765
    %v1865 = vpack.c.b16 %v1772, %v1769
    %v1866 = vpack.c.b16 %v1773, %v1770
    %v1867 = vpack.c.b16 %v1774, %v1771
    %v1868 = vpack.c.b16 %v1778, %v1775
    %v1869 = vpack.c.b16 %v1779, %v1776
    %v1870 = vpack.c.b16 %v1780, %v1777
    %v1871 = vpack.c.b16 %v1784, %v1781
    %v1872 = vpack.c.b16 %v1785, %v1782
    %v1873 = vpack.c.b16 %v1786, %v1783
    %v1874 = vpack.c.b16 %v1790, %v1787
    %v1875 = vpack.c.b16 %v1791, %v1788
    %v1876 = vpack.c.b16 %v1792, %v1789
    %v1877 = vpack.c.b16 %v1796, %v1793
    %v1878 = vpack.c.b16 %v1797, %v1794
    %v1879 = vpack.c.b16 %v1798, %v1795
    %v1880 = vpack.c.b16 %v1802, %v1799
    %v1881 = vpack.c.b16 %v1803, %v1800
    %v1882 = vpack.c.b16 %v1804, %v1801
    %v1883 = vpack.c.b16 %v1808, %v1805
    %v1884 = vpack.c.b16 %v1809, %v1806
    %v1885 = vpack.c.b16 %v1810, %v1807
    %v1886 = vpack.c.b16 %v1814, %v1811
    %v1887 = vpack.c.b16 %v1815, %v1812
    %v1888 = vpack.c.b16 %v1816, %v1813
    %1961 = vmatprep.subr.bf16.mxu0 %v1818
    %1962 = vmatpush1.bf16.msra.mxu0 %v1817
    %1963 = vmatprep.subr.bf16.mxu0 %v1821
    %1964 = vmatpush1.bf16.msra.mxu0 %v1820
    %1965 = vmatprep.subr.bf16.mxu0 %v1824
    %1966 = vmatpush1.bf16.msra.mxu0 %v1823
    %1967 = vmatprep.subr.bf16.mxu0 %v1827
    %1968 = vmatpush1.bf16.msra.mxu0 %v1826
    %1969 = vmatprep.subr.bf16.mxu0 %v1830
    %1970 = vmatpush1.bf16.msra.mxu0 %v1829
    %1971 = vmatprep.subr.bf16.mxu0 %v1833
    %1972 = vmatpush1.bf16.msra.mxu0 %v1832
    %1973 = vmatprep.subr.bf16.mxu0 %v1836
    %1974 = vmatpush1.bf16.msra.mxu0 %v1835
    %1975 = vmatprep.subr.bf16.mxu0 %v1839
    %1976 = vmatpush1.bf16.msra.mxu0 %v1838
    %1977 = vmatprep.subr.bf16.mxu0 %v1842
    %1978 = vmatpush1.bf16.msra.mxu0 %v1841
    %1979 = vmatprep.subr.bf16.mxu0 %v1845
    %1980 = vmatpush1.bf16.msra.mxu0 %v1844
    %1981 = vmatprep.subr.bf16.mxu0 %v1848
    %1982 = vmatpush1.bf16.msra.mxu0 %v1847
    %1983 = vmatprep.subr.bf16.mxu0 %v1851
    %1984 = vmatpush1.bf16.msra.mxu0 %v1850
    %1985 = vmatprep.subr.bf16.mxu0 %v1854
    %1986 = vmatpush1.bf16.msra.mxu0 %v1853
    %1987 = vmatprep.subr.bf16.mxu0 %v1857
    %1988 = vmatpush1.bf16.msra.mxu0 %v1856
    %1989 = vmatprep.subr.bf16.mxu0 %v1860
    %1990 = vmatpush1.bf16.msra.mxu0 %v1859
    %1991 = vmatprep.subr.bf16.mxu0 %v1863
    %1992 = vmatpush1.bf16.msra.mxu0 %v1862
    %1993 = vmatprep.mubr.bf16.mxu0 %v1463
    %1994 = vmatmul.mubr.bf16.gmra.mrb[0].mxu0 %v1462
    %v1995 = vpop.f32.mrb[0].mxu0
    %v1996 = vadd.f32 %v1565, %v1995
    %v1997 = vpop.f32.mrb[0].mxu0
    %v1998 = vadd.f32 %v1569, %v1997
    %v1999 = vpop.f32.mrb[0].mxu0
    %v2000 = vadd.f32 %v1565, %v1999
    %v2001 = vpop.f32.mrb[0].mxu0
    %v2002 = vadd.f32 %v1569, %v2001
    %2003 = vdwg.mxu0
    %2004 = vmatprep.subr.bf16.mxu0 %v1866
    %2005 = vmatpush1.bf16.msra.mxu0 %v1865
    %2006 = vmatprep.subr.bf16.mxu0 %v1869
    %2007 = vmatpush1.bf16.msra.mxu0 %v1868
    %2008 = vmatprep.subr.bf16.mxu0 %v1872
    %2009 = vmatpush1.bf16.msra.mxu0 %v1871
    %2010 = vmatprep.subr.bf16.mxu0 %v1875
    %2011 = vmatpush1.bf16.msra.mxu0 %v1874
    %2012 = vmatprep.subr.bf16.mxu0 %v1878
    %2013 = vmatpush1.bf16.msra.mxu0 %v1877
    %2014 = vmatprep.subr.bf16.mxu0 %v1881
    %2015 = vmatpush1.bf16.msra.mxu0 %v1880
    %2016 = vmatprep.subr.bf16.mxu0 %v1884
    %2017 = vmatpush1.bf16.msra.mxu0 %v1883
    %2018 = vmatprep.subr.bf16.mxu0 %v1887
    %2019 = vmatpush1.bf16.msra.mxu0 %v1886
    %2020 = vmatprep.subr.bf16.mxu0 0
    %2021 = vmatpush1.bf16.msra.mxu0 0
    %2022 = vmatprep.subr.bf16.mxu0 0
    %2023 = vmatpush1.bf16.msra.mxu0 0
    %2024 = vmatprep.subr.bf16.mxu0 0
    %2025 = vmatpush1.bf16.msra.mxu0 0
    %2026 = vmatprep.subr.bf16.mxu0 0
    %2027 = vmatpush1.bf16.msra.mxu0 0
    %2028 = vmatprep.subr.bf16.mxu0 0
    %2029 = vmatpush1.bf16.msra.mxu0 0
    %2030 = vmatprep.subr.bf16.mxu0 0
    %2031 = vmatpush1.bf16.msra.mxu0 0
    %2032 = vmatprep.subr.bf16.mxu0 0
    %2033 = vmatpush1.bf16.msra.mxu0 0
    %2034 = vmatprep.subr.bf16.mxu0 0
    %2035 = vmatpush1.bf16.msra.mxu0 0
    %2036 = vmatprep.mubr.bf16.mxu0 0
    %2037 = vmatmul.mubr.bf16.gmra.mrb[0].mxu0 %v1464
    %v2038 = vpop.f32.mrb[0].mxu0
    %v2039 = vadd.f32 %v1996, %v2038
    %v2040 = vpop.f32.mrb[0].mxu0
    %v2041 = vadd.f32 %v1998, %v2040
    %v2042 = vpop.f32.mrb[0].mxu0
    %v2043 = vadd.f32 %v2000, %v2042
    %v2044 = vpop.f32.mrb[0].mxu0
    %v2045 = vadd.f32 %v2002, %v2044
    %2046 = vdwg.mxu0
    %2047 = vmatprep.subr.bf16.mxu0 0
    %2048 = vmatpush1.bf16.msra.mxu0 %v1819
    %2049 = vmatprep.subr.bf16.mxu0 0
    %2050 = vmatpush1.bf16.msra.mxu0 %v1822
    %2051 = vmatprep.subr.bf16.mxu0 0
    %2052 = vmatpush1.bf16.msra.mxu0 %v1825
    %2053 = vmatprep.subr.bf16.mxu0 0
    %2054 = vmatpush1.bf16.msra.mxu0 %v1828
    %2055 = vmatprep.subr.bf16.mxu0 0
    %2056 = vmatpush1.bf16.msra.mxu0 %v1831
    %2057 = vmatprep.subr.bf16.mxu0 0
    %2058 = vmatpush1.bf16.msra.mxu0 %v1834
    %2059 = vmatprep.subr.bf16.mxu0 0
    %2060 = vmatpush1.bf16.msra.mxu0 %v1837
    %2061 = vmatprep.subr.bf16.mxu0 0
    %2062 = vmatpush1.bf16.msra.mxu0 %v1840
    %2063 = vmatprep.subr.bf16.mxu0 0
    %2064 = vmatpush1.bf16.msra.mxu0 %v1843
    %2065 = vmatprep.subr.bf16.mxu0 0
    %2066 = vmatpush1.bf16.msra.mxu0 %v1846
    %2067 = vmatprep.subr.bf16.mxu0 0
    %2068 = vmatpush1.bf16.msra.mxu0 %v1849
    %2069 = vmatprep.subr.bf16.mxu0 0
    %2070 = vmatpush1.bf16.msra.mxu0 %v1852
    %2071 = vmatprep.subr.bf16.mxu0 0
    %2072 = vmatpush1.bf16.msra.mxu0 %v1855
    %2073 = vmatprep.subr.bf16.mxu0 0
    %2074 = vmatpush1.bf16.msra.mxu0 %v1858
    %2075 = vmatprep.subr.bf16.mxu0 0
    %2076 = vmatpush1.bf16.msra.mxu0 %v1861
    %2077 = vmatprep.subr.bf16.mxu0 0
    %2078 = vmatpush1.bf16.msra.mxu0 %v1864
    %2079 = vmatprep.mubr.bf16.mxu0 %v1463
    %2080 = vmatmul.mubr.bf16.gmra.mrb[0].mxu0 %v1462
    %v2081 = vpop.f32.mrb[0].mxu0
    %v2082 = vadd.f32 %v1573, %v2081
    %v2083 = vpop.f32.mrb[0].mxu0
    %v2084 = vpop.f32.mrb[0].mxu0
    %v2085 = vadd.f32 %v1573, %v2084
    %v2086 = vpop.f32.mrb[0].mxu0
    %2087 = vdwg.mxu0
    %2088 = vmatprep.subr.bf16.mxu0 0
    %2089 = vmatpush1.bf16.msra.mxu0 %v1867
    %2090 = vmatprep.subr.bf16.mxu0 0
    %2091 = vmatpush1.bf16.msra.mxu0 %v1870
    %2092 = vmatprep.subr.bf16.mxu0 0
    %2093 = vmatpush1.bf16.msra.mxu0 %v1873
    %2094 = vmatprep.subr.bf16.mxu0 0
    %2095 = vmatpush1.bf16.msra.mxu0 %v1876
    %2096 = vmatprep.subr.bf16.mxu0 0
    %2097 = vmatpush1.bf16.msra.mxu0 %v1879
    %2098 = vmatprep.subr.bf16.mxu0 0
    %2099 = vmatpush1.bf16.msra.mxu0 %v1882
    %2100 = vmatprep.subr.bf16.mxu0 0
    %2101 = vmatpush1.bf16.msra.mxu0 %v1885
    %2102 = vmatprep.subr.bf16.mxu0 0
    %2103 = vmatpush1.bf16.msra.mxu0 %v1888
    %2104 = vmatprep.subr.bf16.mxu0 0
    %2105 = vmatpush1.bf16.msra.mxu0 0
    %2106 = vmatprep.subr.bf16.mxu0 0
    %2107 = vmatpush1.bf16.msra.mxu0 0
    %2108 = vmatprep.subr.bf16.mxu0 0
    %2109 = vmatpush1.bf16.msra.mxu0 0
    %2110 = vmatprep.subr.bf16.mxu0 0
    %2111 = vmatpush1.bf16.msra.mxu0 0
    %2112 = vmatprep.subr.bf16.mxu0 0
    %2113 = vmatpush1.bf16.msra.mxu0 0
    %2114 = vmatprep.subr.bf16.mxu0 0
    %2115 = vmatpush1.bf16.msra.mxu0 0
    %2116 = vmatprep.subr.bf16.mxu0 0
    %2117 = vmatpush1.bf16.msra.mxu0 0
    %2118 = vmatprep.subr.bf16.mxu0 0
    %2119 = vmatpush1.bf16.msra.mxu0 0
    %2120 = vmatprep.mubr.bf16.mxu0 0
    %2121 = vmatmul.mubr.bf16.gmra.mrb[0].mxu0 %v1464
    %v2122 = vpop.f32.mrb[0].mxu0
    %v2123 = vadd.f32 %v2082, %v2122
    %v2124 = vpop.f32.mrb[0].mxu0
    %v2125 = vpop.f32.mrb[0].mxu0
    %v2126 = vadd.f32 %v2085, %v2125
    %v2127 = vpop.f32.mrb[0].mxu0
    %2128 = vdwg.mxu0
    %v2129 = vtanh.pop %v2039
    %v2130 = vtanh.pop %v2041
    %v2131 = vtanh.pop %v2123
    %v2132 = vtanh.pop %v2043
    %v2133 = vtanh.pop %v2045
    %v2134 = vtanh.pop %v2126
    %v2135 = vpack.c.bf16 %v2132, %v2129
    %v2136 = vpack.c.bf16 %v2133, %v2130
    %v2137 = vpack.c.bf16 %v2134, %v2131
    %v2138 = vld [vmem:[%s3] sm:$0xf]
    %v2139 = vld [vmem:[%s3 + $0x4] sm:$0xf]
    %v2140 = vld [vmem:[%s3 + $0x8] sm:$0xf]
    %v2141 = vld [vmem:[%s3 + $0xc] sm:$0xf]
    %v2142 = vld [vmem:[%s3 + $0x10] sm:$0xf]
    %v2143 = vld [vmem:[%s3 + $0x14] sm:$0xf]
    %v2144 = vld [vmem:[%s3 + $0x18] sm:$0xf]
    %v2145 = vld [vmem:[%s3 + $0x1c] sm:$0xf]
    %v2146 = vld [vmem:[%s3 + $0x20] sm:$0xf]
    %v2147 = vld [vmem:[%s3 + $0x24] sm:$0xf]
    %v2148 = vld [vmem:[%s3 + $0x28] sm:$0xf]
    %v2149 = vld [vmem:[%s3 + $0x2c] sm:$0xf]
    %v2150 = vld [vmem:[%s3 + $0x30] sm:$0xf]
    %v2151 = vld [vmem:[%s3 + $0x34] sm:$0xf]
    %v2152 = vld [vmem:[%s3 + $0x38] sm:$0xf]
    %v2153 = vld [vmem:[%s3 + $0x3c] sm:$0xf]
    %v2154 = vld [vmem:[%s3 + $0x40] sm:$0xf]
    %v2155 = vld [vmem:[%s3 + $0x44] sm:$0xf]
    %v2156 = vld [vmem:[%s3 + $0x48] sm:$0xf]
    %v2157 = vld [vmem:[%s3 + $0x4c] sm:$0xf]
    %v2158 = vld [vmem:[%s3 + $0x50] sm:$0xf]
    %v2159 = vld [vmem:[%s3 + $0x54] sm:$0xf]
    %v2160 = vld [vmem:[%s3 + $0x58] sm:$0xf]
    %v2161 = vld [vmem:[%s3 + $0x5c] sm:$0xf]
    %v2162 = vld [vmem:[%s3 + $0x60] sm:$0xf]
    %v2163 = vld [vmem:[%s3 + $0x64] sm:$0xf]
    %v2164 = vld [vmem:[%s3 + $0x68] sm:$0xf]
    %v2165 = vld [vmem:[%s3 + $0x6c] sm:$0xf]
    %v2166 = vld [vmem:[%s3 + $0x70] sm:$0xf]
    %v2167 = vld [vmem:[%s3 + $0x74] sm:$0xf]
    %v2168 = vld [vmem:[%s3 + $0x78] sm:$0xf]
    %v2169 = vld [vmem:[%s3 + $0x7c] sm:$0xf]
    %v2170 = vld [vmem:[%s3 + $0x80] sm:$0xf]
    %v2171 = vld [vmem:[%s3 + $0x84] sm:$0xf]
    %v2172 = vld [vmem:[%s3 + $0x88] sm:$0xf]
    %v2173 = vld [vmem:[%s3 + $0x8c] sm:$0xf]
    %v2174 = vld [vmem:[%s3 + $0x90] sm:$0xf]
    %v2175 = vld [vmem:[%s3 + $0x94] sm:$0xf]
    %v2176 = vld [vmem:[%s3 + $0x98] sm:$0xf]
    %v2177 = vld [vmem:[%s3 + $0x9c] sm:$0xf]
    %v2178 = vld [vmem:[%s3 + $0xa0] sm:$0xf]
    %v2179 = vld [vmem:[%s3 + $0xa4] sm:$0xf]
    %v2180 = vld [vmem:[%s3 + $0xa8] sm:$0xf]
    %v2181 = vld [vmem:[%s3 + $0xac] sm:$0xf]
    %v2182 = vld [vmem:[%s3 + $0xb0] sm:$0xf]
    %v2183 = vld [vmem:[%s3 + $0xb4] sm:$0xf]
    %v2184 = vld [vmem:[%s3 + $0xb8] sm:$0xf]
    %v2185 = vld [vmem:[%s3 + $0xbc] sm:$0xf]
    %v2187 = vlaneseq
    %v2188 = vshrl.u32 %v2187, 7
    %v2189 = vsub.s32 0, %v2188
    %v2190 = vrot.slane %v116, %v2189
    %v2240 = vunpack.c.l.b16 %v2138
    %v2241 = vunpack.c.l.b16 %v2139
    %v2242 = vunpack.c.l.b16 %v2140
    %v2243 = vunpack.c.l.b16 %v2141
    %v2244 = vunpack.c.l.b16 %v2142
    %v2245 = vunpack.c.l.b16 %v2143
    %v2246 = vunpack.c.l.b16 %v2144
    %v2247 = vunpack.c.l.b16 %v2145
    %v2248 = vunpack.c.l.b16 %v2146
    %v2249 = vunpack.c.l.b16 %v2147
    %v2250 = vunpack.c.l.b16 %v2148
    %v2251 = vunpack.c.l.b16 %v2149
    %v2252 = vunpack.c.l.b16 %v2150
    %v2253 = vunpack.c.l.b16 %v2151
    %v2254 = vunpack.c.l.b16 %v2152
    %v2255 = vunpack.c.l.b16 %v2153
    %v2256 = vunpack.c.l.b16 %v2154
    %v2257 = vunpack.c.l.b16 %v2155
    %v2258 = vunpack.c.l.b16 %v2156
    %v2259 = vunpack.c.l.b16 %v2157
    %v2260 = vunpack.c.l.b16 %v2158
    %v2261 = vunpack.c.l.b16 %v2159
    %v2262 = vunpack.c.l.b16 %v2160
    %v2263 = vunpack.c.l.b16 %v2161
    %v2264 = vunpack.c.l.b16 %v2162
    %v2265 = vunpack.c.l.b16 %v2163
    %v2266 = vunpack.c.l.b16 %v2164
    %v2267 = vunpack.c.l.b16 %v2165
    %v2268 = vunpack.c.l.b16 %v2166
    %v2269 = vunpack.c.l.b16 %v2167
    %v2270 = vunpack.c.l.b16 %v2168
    %v2271 = vunpack.c.l.b16 %v2169
    %v2272 = vunpack.c.l.b16 %v2170
    %v2273 = vunpack.c.l.b16 %v2171
    %v2274 = vunpack.c.l.b16 %v2172
    %v2275 = vunpack.c.l.b16 %v2173
    %v2276 = vunpack.c.l.b16 %v2174
    %v2277 = vunpack.c.l.b16 %v2175
    %v2278 = vunpack.c.l.b16 %v2176
    %v2279 = vunpack.c.l.b16 %v2177
    %v2280 = vunpack.c.l.b16 %v2178
    %v2281 = vunpack.c.l.b16 %v2179
    %v2282 = vunpack.c.l.b16 %v2180
    %v2283 = vunpack.c.l.b16 %v2181
    %v2284 = vunpack.c.l.b16 %v2182
    %v2285 = vunpack.c.l.b16 %v2183
    %v2286 = vunpack.c.l.b16 %v2184
    %v2287 = vunpack.c.l.b16 %v2185
    %v2288 = vpack.c.b16 %v2241, %v2240
    %v2289 = vpack.c.b16 %v2243, %v2242
    %v2290 = vpack.c.b16 %v2245, %v2244
    %v2291 = vpack.c.b16 %v2247, %v2246
    %v2292 = vpack.c.b16 %v2249, %v2248
    %v2293 = vpack.c.b16 %v2251, %v2250
    %v2294 = vpack.c.b16 %v2253, %v2252
    %v2295 = vpack.c.b16 %v2255, %v2254
    %v2296 = vpack.c.b16 %v2257, %v2256
    %v2297 = vpack.c.b16 %v2259, %v2258
    %v2298 = vpack.c.b16 %v2261, %v2260
    %v2299 = vpack.c.b16 %v2263, %v2262
    %v2300 = vpack.c.b16 %v2265, %v2264
    %v2301 = vpack.c.b16 %v2267, %v2266
    %v2302 = vpack.c.b16 %v2269, %v2268
    %v2303 = vpack.c.b16 %v2271, %v2270
    %v2304 = vpack.c.b16 %v2273, %v2272
    %v2305 = vpack.c.b16 %v2275, %v2274
    %v2306 = vpack.c.b16 %v2277, %v2276
    %v2307 = vpack.c.b16 %v2279, %v2278
    %v2308 = vpack.c.b16 %v2281, %v2280
    %v2309 = vpack.c.b16 %v2283, %v2282
    %v2310 = vpack.c.b16 %v2285, %v2284
    %v2311 = vpack.c.b16 %v2287, %v2286
    %2336 = vmatprep.subr.bf16.mxu0 0
    %2337 = vmatpush1.bf16.msra.mxu0 %v2288
    %2338 = vmatprep.subr.bf16.mxu0 0
    %2339 = vmatpush1.bf16.msra.mxu0 %v2289
    %2340 = vmatprep.subr.bf16.mxu0 0
    %2341 = vmatpush1.bf16.msra.mxu0 %v2290
    %2342 = vmatprep.subr.bf16.mxu0 0
    %2343 = vmatpush1.bf16.msra.mxu0 %v2291
    %2344 = vmatprep.subr.bf16.mxu0 0
    %2345 = vmatpush1.bf16.msra.mxu0 %v2292
    %2346 = vmatprep.subr.bf16.mxu0 0
    %2347 = vmatpush1.bf16.msra.mxu0 %v2293
    %2348 = vmatprep.subr.bf16.mxu0 0
    %2349 = vmatpush1.bf16.msra.mxu0 %v2294
    %2350 = vmatprep.subr.bf16.mxu0 0
    %2351 = vmatpush1.bf16.msra.mxu0 %v2295
    %2352 = vmatprep.subr.bf16.mxu0 0
    %2353 = vmatpush1.bf16.msra.mxu0 %v2296
    %2354 = vmatprep.subr.bf16.mxu0 0
    %2355 = vmatpush1.bf16.msra.mxu0 %v2297
    %2356 = vmatprep.subr.bf16.mxu0 0
    %2357 = vmatpush1.bf16.msra.mxu0 %v2298
    %2358 = vmatprep.subr.bf16.mxu0 0
    %2359 = vmatpush1.bf16.msra.mxu0 %v2299
    %2360 = vmatprep.subr.bf16.mxu0 0
    %2361 = vmatpush1.bf16.msra.mxu0 %v2300
    %2362 = vmatprep.subr.bf16.mxu0 0
    %2363 = vmatpush1.bf16.msra.mxu0 %v2301
    %2364 = vmatprep.subr.bf16.mxu0 0
    %2365 = vmatpush1.bf16.msra.mxu0 %v2302
    %2366 = vmatprep.subr.bf16.mxu0 0
    %2367 = vmatpush1.bf16.msra.mxu0 %v2303
    %2368 = vmatprep.mubr.bf16.mxu0 %v2136
    %2369 = vmatmul.mubr.bf16.gmra.mrb[0].mxu0 %v2135
    %v2370 = vpop.f32.mrb[0].mxu0
    %v2371 = vadd.f32 %v2190, %v2370
    %v2372 = vpop.f32.mrb[0].mxu0
    %v2373 = vpop.f32.mrb[0].mxu0
    %v2374 = vadd.f32 %v2190, %v2373
    %v2375 = vpop.f32.mrb[0].mxu0
    %2376 = vdwg.mxu0
    %2377 = vmatprep.subr.bf16.mxu0 0
    %2378 = vmatpush1.bf16.msra.mxu0 %v2304
    %2379 = vmatprep.subr.bf16.mxu0 0
    %2380 = vmatpush1.bf16.msra.mxu0 %v2305
    %2381 = vmatprep.subr.bf16.mxu0 0
    %2382 = vmatpush1.bf16.msra.mxu0 %v2306
    %2383 = vmatprep.subr.bf16.mxu0 0
    %2384 = vmatpush1.bf16.msra.mxu0 %v2307
    %2385 = vmatprep.subr.bf16.mxu0 0
    %2386 = vmatpush1.bf16.msra.mxu0 %v2308
    %2387 = vmatprep.subr.bf16.mxu0 0
    %2388 = vmatpush1.bf16.msra.mxu0 %v2309
    %2389 = vmatprep.subr.bf16.mxu0 0
    %2390 = vmatpush1.bf16.msra.mxu0 %v2310
    %2391 = vmatprep.subr.bf16.mxu0 0
    %2392 = vmatpush1.bf16.msra.mxu0 %v2311
    %2393 = vmatprep.subr.bf16.mxu0 0
    %2394 = vmatpush1.bf16.msra.mxu0 0
    %2395 = vmatprep.subr.bf16.mxu0 0
    %2396 = vmatpush1.bf16.msra.mxu0 0
    %2397 = vmatprep.subr.bf16.mxu0 0
    %2398 = vmatpush1.bf16.msra.mxu0 0
    %2399 = vmatprep.subr.bf16.mxu0 0
    %2400 = vmatpush1.bf16.msra.mxu0 0
    %2401 = vmatprep.subr.bf16.mxu0 0
    %2402 = vmatpush1.bf16.msra.mxu0 0
    %2403 = vmatprep.subr.bf16.mxu0 0
    %2404 = vmatpush1.bf16.msra.mxu0 0
    %2405 = vmatprep.subr.bf16.mxu0 0
    %2406 = vmatpush1.bf16.msra.mxu0 0
    %2407 = vmatprep.subr.bf16.mxu0 0
    %2408 = vmatpush1.bf16.msra.mxu0 0
    %2409 = vmatprep.mubr.bf16.mxu0 0
    %2410 = vmatmul.mubr.bf16.gmra.mrb[0].mxu0 %v2137
    %v2411 = vpop.f32.mrb[0].mxu0
    %v2412 = vadd.f32 %v2371, %v2411
    %v2413 = vpop.f32.mrb[0].mxu0
    %v2414 = vpop.f32.mrb[0].mxu0
    %v2415 = vadd.f32 %v2374, %v2414
    %v2416 = vpop.f32.mrb[0].mxu0
    %2417 = vdwg.mxu0
    %v2418 = vld [vmem:[#allocation4] sm:$0xf]
    %v2419 = vld [vmem:[#allocation4 + $0x4] sm:$0xf]
    %v2420 = vld [vmem:[#allocation4 + $0x8] sm:$0xf]
    %v2421 = vld [vmem:[#allocation4 + $0xc] sm:$0xf]
    %v2422 = vld [vmem:[#allocation4 + $0x10] sm:$0xf]
    %v2423 = vld [vmem:[#allocation4 + $0x14] sm:$0xf]
    %v2424 = vld [vmem:[#allocation4 + $0x18] sm:$0xf]
    %v2425 = vld [vmem:[#allocation4 + $0x1c] sm:$0xf]
    %v2426 = vld [vmem:[#allocation4 + $0x20] sm:$0xf]
    %v2427 = vld [vmem:[#allocation4 + $0x24] sm:$0xf]
    %v2428 = vld [vmem:[#allocation4 + $0x28] sm:$0xf]
    %v2429 = vld [vmem:[#allocation4 + $0x2c] sm:$0xf]
    %v2430 = vld [vmem:[#allocation4 + $0x30] sm:$0xf]
    %v2431 = vld [vmem:[#allocation4 + $0x34] sm:$0xf]
    %v2432 = vld [vmem:[#allocation4 + $0x38] sm:$0xf]
    %v2433 = vld [vmem:[#allocation4 + $0x3c] sm:$0xf]
    %v2434 = vld [vmem:[#allocation4 + $0x40] sm:$0xf]
    %v2435 = vld [vmem:[#allocation4 + $0x44] sm:$0xf]
    %v2436 = vld [vmem:[#allocation4 + $0x48] sm:$0xf]
    %v2437 = vld [vmem:[#allocation4 + $0x4c] sm:$0xf]
    %v2438 = vld [vmem:[#allocation4 + $0x50] sm:$0xf]
    %v2439 = vld [vmem:[#allocation4 + $0x54] sm:$0xf]
    %v2440 = vld [vmem:[#allocation4 + $0x58] sm:$0xf]
    %v2441 = vld [vmem:[#allocation4 + $0x5c] sm:$0xf]
    %v2442 = vld [vmem:[#allocation4 + $0x60] sm:$0xf]
    %v2443 = vld [vmem:[#allocation4 + $0x64] sm:$0xf]
    %v2444 = vld [vmem:[#allocation4 + $0x68] sm:$0xf]
    %v2445 = vld [vmem:[#allocation4 + $0x6c] sm:$0xf]
    %v2446 = vld [vmem:[#allocation4 + $0x70] sm:$0xf]
    %v2447 = vld [vmem:[#allocation4 + $0x74] sm:$0xf]
    %v2448 = vld [vmem:[#allocation4 + $0x78] sm:$0xf]
    %v2449 = vld [vmem:[#allocation4 + $0x7c] sm:$0xf]
    %v2450 = vld [vmem:[#allocation4 + $0x80] sm:$0xf]
    %v2451 = vld [vmem:[#allocation4 + $0x84] sm:$0xf]
    %v2452 = vld [vmem:[#allocation4 + $0x88] sm:$0xf]
    %v2453 = vld [vmem:[#allocation4 + $0x8c] sm:$0xf]
    %v2454 = vld [vmem:[#allocation4 + $0x90] sm:$0xf]
    %v2455 = vld [vmem:[#allocation4 + $0x94] sm:$0xf]
    %v2456 = vld [vmem:[#allocation4 + $0x98] sm:$0xf]
    %v2457 = vld [vmem:[#allocation4 + $0x9c] sm:$0xf]
    %v2458 = vld [vmem:[#allocation4 + $0xa0] sm:$0xf]
    %v2459 = vld [vmem:[#allocation4 + $0xa4] sm:$0xf]
    %v2460 = vld [vmem:[#allocation4 + $0xa8] sm:$0xf]
    %v2461 = vld [vmem:[#allocation4 + $0xac] sm:$0xf]
    %v2462 = vld [vmem:[#allocation4 + $0xb0] sm:$0xf]
    %v2463 = vld [vmem:[#allocation4 + $0xb4] sm:$0xf]
    %v2464 = vld [vmem:[#allocation4 + $0xb8] sm:$0xf]
    %v2465 = vld [vmem:[#allocation4 + $0xbc] sm:$0xf]
    %v2466 = vld [vmem:[#allocation4 + $0xc0] sm:$0xf]
    %v2467 = vld [vmem:[#allocation4 + $0xc4] sm:$0xf]
    %v2468 = vld [vmem:[#allocation4 + $0xc8] sm:$0xf]
    %v2469 = vld [vmem:[#allocation4 + $0xcc] sm:$0xf]
    %v2470 = vld [vmem:[#allocation4 + $0xd0] sm:$0xf]
    %v2471 = vld [vmem:[#allocation4 + $0xd4] sm:$0xf]
    %v2472 = vld [vmem:[#allocation4 + $0xd8] sm:$0xf]
    %v2473 = vld [vmem:[#allocation4 + $0xdc] sm:$0xf]
    %v2474 = vld [vmem:[#allocation4 + $0xe0] sm:$0xf]
    %v2475 = vld [vmem:[#allocation4 + $0xe4] sm:$0xf]
    %v2476 = vld [vmem:[#allocation4 + $0xe8] sm:$0xf]
    %v2477 = vld [vmem:[#allocation4 + $0xec] sm:$0xf]
    %v2478 = vld [vmem:[#allocation4 + $0xf0] sm:$0xf]
    %v2479 = vld [vmem:[#allocation4 + $0xf4] sm:$0xf]
    %v2480 = vld [vmem:[#allocation4 + $0xf8] sm:$0xf]
    %v2481 = vld [vmem:[#allocation4 + $0xfc] sm:$0xf]
    %v2482 = vld [vmem:[#allocation4 + $0x100] sm:$0xf]
    %v2483 = vld [vmem:[#allocation4 + $0x104] sm:$0xf]
    %v2484 = vld [vmem:[#allocation4 + $0x108] sm:$0xf]
    %v2485 = vld [vmem:[#allocation4 + $0x10c] sm:$0xf]
    %v2486 = vld [vmem:[#allocation4 + $0x110] sm:$0xf]
    %v2487 = vld [vmem:[#allocation4 + $0x114] sm:$0xf]
    %v2488 = vld [vmem:[#allocation4 + $0x118] sm:$0xf]
    %v2489 = vld [vmem:[#allocation4 + $0x11c] sm:$0xf]
    %v2490 = vld [vmem:[#allocation4 + $0x120] sm:$0xf]
    %v2491 = vld [vmem:[#allocation4 + $0x124] sm:$0xf]
    %v2492 = vld [vmem:[#allocation4 + $0x128] sm:$0xf]
    %v2493 = vld [vmem:[#allocation4 + $0x12c] sm:$0xf]
    %v2494 = vld [vmem:[#allocation4 + $0x130] sm:$0xf]
    %v2495 = vld [vmem:[#allocation4 + $0x134] sm:$0xf]
    %v2496 = vld [vmem:[#allocation4 + $0x138] sm:$0xf]
    %v2497 = vld [vmem:[#allocation4 + $0x13c] sm:$0xf]
    %v2498 = vld [vmem:[#allocation4 + $0x140] sm:$0xf]
    %v2499 = vld [vmem:[#allocation4 + $0x144] sm:$0xf]
    %v2500 = vld [vmem:[#allocation4 + $0x148] sm:$0xf]
    %v2501 = vld [vmem:[#allocation4 + $0x14c] sm:$0xf]
    %v2502 = vld [vmem:[#allocation4 + $0x150] sm:$0xf]
    %v2503 = vld [vmem:[#allocation4 + $0x154] sm:$0xf]
    %v2504 = vld [vmem:[#allocation4 + $0x158] sm:$0xf]
    %v2505 = vld [vmem:[#allocation4 + $0x15c] sm:$0xf]
    %v2506 = vld [vmem:[#allocation4 + $0x160] sm:$0xf]
    %v2507 = vld [vmem:[#allocation4 + $0x164] sm:$0xf]
    %v2508 = vld [vmem:[#allocation4 + $0x168] sm:$0xf]
    %v2509 = vld [vmem:[#allocation4 + $0x16c] sm:$0xf]
    %v2510 = vld [vmem:[#allocation4 + $0x170] sm:$0xf]
    %v2511 = vld [vmem:[#allocation4 + $0x174] sm:$0xf]
    %v2512 = vld [vmem:[#allocation4 + $0x178] sm:$0xf]
    %v2513 = vld [vmem:[#allocation4 + $0x17c] sm:$0xf]
    %v2514 = vld [vmem:[#allocation4 + $0x180] sm:$0xf]
    %v2515 = vld [vmem:[#allocation4 + $0x184] sm:$0xf]
    %v2516 = vld [vmem:[#allocation6] sm:$0xf]
    %v2517 = vld [vmem:[#allocation6 + $0x4] sm:$0xf]
    %v2518 = vld [vmem:[#allocation6 + $0x8] sm:$0xf]
    %v2519 = vld [vmem:[#allocation6 + $0xc] sm:$0xf]
    %v2520 = vld [vmem:[#allocation6 + $0x10] sm:$0xf]
    %v2521 = vld [vmem:[#allocation6 + $0x14] sm:$0xf]
    %v2522 = vld [vmem:[#allocation6 + $0x18] sm:$0xf]
    %v2523 = vld [vmem:[#allocation6 + $0x1c] sm:$0xf]
    %v2524 = vld [vmem:[#allocation6 + $0x20] sm:$0xf]
    %v2525 = vld [vmem:[#allocation6 + $0x24] sm:$0xf]
    %v2526 = vld [vmem:[#allocation6 + $0x28] sm:$0xf]
    %v2527 = vld [vmem:[#allocation6 + $0x2c] sm:$0xf]
    %v2528 = vld [vmem:[#allocation6 + $0x30] sm:$0xf]
    %v2529 = vld [vmem:[#allocation6 + $0x34] sm:$0xf]
    %v2530 = vld [vmem:[#allocation6 + $0x38] sm:$0xf]
    %v2531 = vld [vmem:[#allocation6 + $0x3c] sm:$0xf]
    %v2532 = vld [vmem:[#allocation6 + $0x40] sm:$0xf]
    %v2533 = vld [vmem:[#allocation6 + $0x44] sm:$0xf]
    %v2534 = vld [vmem:[#allocation6 + $0x48] sm:$0xf]
    %v2535 = vld [vmem:[#allocation6 + $0x4c] sm:$0xf]
    %v2536 = vld [vmem:[#allocation6 + $0x50] sm:$0xf]
    %v2537 = vld [vmem:[#allocation6 + $0x54] sm:$0xf]
    %v2538 = vld [vmem:[#allocation6 + $0x58] sm:$0xf]
    %v2539 = vld [vmem:[#allocation6 + $0x5c] sm:$0xf]
    %v2540 = vld [vmem:[#allocation6 + $0x60] sm:$0xf]
    %v2541 = vld [vmem:[#allocation6 + $0x64] sm:$0xf]
    %v2542 = vld [vmem:[#allocation6 + $0x68] sm:$0xf]
    %v2543 = vld [vmem:[#allocation6 + $0x6c] sm:$0xf]
    %v2544 = vld [vmem:[#allocation6 + $0x70] sm:$0xf]
    %v2545 = vld [vmem:[#allocation6 + $0x74] sm:$0xf]
    %v2546 = vld [vmem:[#allocation6 + $0x78] sm:$0xf]
    %v2547 = vld [vmem:[#allocation6 + $0x7c] sm:$0xf]
    %v2548 = vld [vmem:[#allocation6 + $0x80] sm:$0xf]
    %v2549 = vld [vmem:[#allocation6 + $0x84] sm:$0xf]
    %v2550 = vld [vmem:[#allocation6 + $0x88] sm:$0xf]
    %v2551 = vld [vmem:[#allocation6 + $0x8c] sm:$0xf]
    %v2552 = vld [vmem:[#allocation6 + $0x90] sm:$0xf]
    %v2553 = vld [vmem:[#allocation6 + $0x94] sm:$0xf]
    %v2554 = vld [vmem:[#allocation6 + $0x98] sm:$0xf]
    %v2555 = vld [vmem:[#allocation6 + $0x9c] sm:$0xf]
    %v2556 = vld [vmem:[#allocation6 + $0xa0] sm:$0xf]
    %v2557 = vld [vmem:[#allocation6 + $0xa4] sm:$0xf]
    %v2558 = vld [vmem:[#allocation6 + $0xa8] sm:$0xf]
    %v2559 = vld [vmem:[#allocation6 + $0xac] sm:$0xf]
    %v2560 = vld [vmem:[#allocation6 + $0xb0] sm:$0xf]
    %v2561 = vld [vmem:[#allocation6 + $0xb4] sm:$0xf]
    %v2562 = vld [vmem:[#allocation6 + $0xb8] sm:$0xf]
    %v2563 = vld [vmem:[#allocation6 + $0xbc] sm:$0xf]
    %v2612 = vunpack.c.l.b16 %v2516
    %v2613 = vunpack.c.l.b16 %v2517
    %v2614 = vunpack.c.l.b16 %v2518
    %v2615 = vunpack.c.l.b16 %v2519
    %v2616 = vunpack.c.l.b16 %v2520
    %v2617 = vunpack.c.l.b16 %v2521
    %v2618 = vunpack.c.l.b16 %v2522
    %v2619 = vunpack.c.l.b16 %v2523
    %v2620 = vunpack.c.l.b16 %v2524
    %v2621 = vunpack.c.l.b16 %v2525
    %v2622 = vunpack.c.l.b16 %v2526
    %v2623 = vunpack.c.l.b16 %v2527
    %v2624 = vunpack.c.l.b16 %v2528
    %v2625 = vunpack.c.l.b16 %v2529
    %v2626 = vunpack.c.l.b16 %v2530
    %v2627 = vunpack.c.l.b16 %v2531
    %v2628 = vunpack.c.l.b16 %v2532
    %v2629 = vunpack.c.l.b16 %v2533
    %v2630 = vunpack.c.l.b16 %v2534
    %v2631 = vunpack.c.l.b16 %v2535
    %v2632 = vunpack.c.l.b16 %v2536
    %v2633 = vunpack.c.l.b16 %v2537
    %v2634 = vunpack.c.l.b16 %v2538
    %v2635 = vunpack.c.l.b16 %v2539
    %v2636 = vunpack.c.l.b16 %v2540
    %v2637 = vunpack.c.l.b16 %v2541
    %v2638 = vunpack.c.l.b16 %v2542
    %v2639 = vunpack.c.l.b16 %v2543
    %v2640 = vunpack.c.l.b16 %v2544
    %v2641 = vunpack.c.l.b16 %v2545
    %v2642 = vunpack.c.l.b16 %v2546
    %v2643 = vunpack.c.l.b16 %v2547
    %v2644 = vunpack.c.l.b16 %v2548
    %v2645 = vunpack.c.l.b16 %v2549
    %v2646 = vunpack.c.l.b16 %v2550
    %v2647 = vunpack.c.l.b16 %v2551
    %v2648 = vunpack.c.l.b16 %v2552
    %v2649 = vunpack.c.l.b16 %v2553
    %v2650 = vunpack.c.l.b16 %v2554
    %v2651 = vunpack.c.l.b16 %v2555
    %v2652 = vunpack.c.l.b16 %v2556
    %v2653 = vunpack.c.l.b16 %v2557
    %v2654 = vunpack.c.l.b16 %v2558
    %v2655 = vunpack.c.l.b16 %v2559
    %v2656 = vunpack.c.l.b16 %v2560
    %v2657 = vunpack.c.l.b16 %v2561
    %v2658 = vunpack.c.l.b16 %v2562
    %v2659 = vunpack.c.l.b16 %v2563
    %v2660 = vpack.c.b16 %v2613, %v2612
    %v2661 = vpack.c.b16 %v2615, %v2614
    %v2662 = vpack.c.b16 %v2617, %v2616
    %v2663 = vpack.c.b16 %v2619, %v2618
    %v2664 = vpack.c.b16 %v2621, %v2620
    %v2665 = vpack.c.b16 %v2623, %v2622
    %v2666 = vpack.c.b16 %v2625, %v2624
    %v2667 = vpack.c.b16 %v2627, %v2626
    %v2668 = vpack.c.b16 %v2629, %v2628
    %v2669 = vpack.c.b16 %v2631, %v2630
    %v2670 = vpack.c.b16 %v2633, %v2632
    %v2671 = vpack.c.b16 %v2635, %v2634
    %v2672 = vpack.c.b16 %v2637, %v2636
    %v2673 = vpack.c.b16 %v2639, %v2638
    %v2674 = vpack.c.b16 %v2641, %v2640
    %v2675 = vpack.c.b16 %v2643, %v2642
    %v2676 = vpack.c.b16 %v2645, %v2644
    %v2677 = vpack.c.b16 %v2647, %v2646
    %v2678 = vpack.c.b16 %v2649, %v2648
    %v2679 = vpack.c.b16 %v2651, %v2650
    %v2680 = vpack.c.b16 %v2653, %v2652
    %v2681 = vpack.c.b16 %v2655, %v2654
    %v2682 = vpack.c.b16 %v2657, %v2656
    %v2683 = vpack.c.b16 %v2659, %v2658
    %2708 = vmatprep.subr.bf16.mxu0 0
    %2709 = vmatpush1.bf16.msra.mxu0 %v2660
    %2710 = vmatprep.subr.bf16.mxu0 0
    %2711 = vmatpush1.bf16.msra.mxu0 %v2661
    %2712 = vmatprep.subr.bf16.mxu0 0
    %2713 = vmatpush1.bf16.msra.mxu0 %v2662
    %2714 = vmatprep.subr.bf16.mxu0 0
    %2715 = vmatpush1.bf16.msra.mxu0 %v2663
    %2716 = vmatprep.subr.bf16.mxu0 0
    %2717 = vmatpush1.bf16.msra.mxu0 %v2664
    %2718 = vmatprep.subr.bf16.mxu0 0
    %2719 = vmatpush1.bf16.msra.mxu0 %v2665
    %2720 = vmatprep.subr.bf16.mxu0 0
    %2721 = vmatpush1.bf16.msra.mxu0 %v2666
    %2722 = vmatprep.subr.bf16.mxu0 0
    %2723 = vmatpush1.bf16.msra.mxu0 %v2667
    %2724 = vmatprep.subr.bf16.mxu0 0
    %2725 = vmatpush1.bf16.msra.mxu0 %v2668
    %2726 = vmatprep.subr.bf16.mxu0 0
    %2727 = vmatpush1.bf16.msra.mxu0 %v2669
    %2728 = vmatprep.subr.bf16.mxu0 0
    %2729 = vmatpush1.bf16.msra.mxu0 %v2670
    %2730 = vmatprep.subr.bf16.mxu0 0
    %2731 = vmatpush1.bf16.msra.mxu0 %v2671
    %2732 = vmatprep.subr.bf16.mxu0 0
    %2733 = vmatpush1.bf16.msra.mxu0 %v2672
    %2734 = vmatprep.subr.bf16.mxu0 0
    %2735 = vmatpush1.bf16.msra.mxu0 %v2673
    %2736 = vmatprep.subr.bf16.mxu0 0
    %2737 = vmatpush1.bf16.msra.mxu0 %v2674
    %2738 = vmatprep.subr.bf16.mxu0 0
    %2739 = vmatpush1.bf16.msra.mxu0 %v2675
    %2740 = vmatprep.mubr.bf16.mxu0 %v1463
    %2741 = vmatmul.mubr.bf16.gmra.mrb[0].mxu0 %v1462
    %v2742 = vpop.f32.mrb[0].mxu0
    %v2743 = vadd.f32 0.0, %v2742
    %v2744 = vpop.f32.mrb[0].mxu0
    %v2745 = vpop.f32.mrb[0].mxu0
    %v2746 = vadd.f32 0.0, %v2745
    %v2747 = vpop.f32.mrb[0].mxu0
    %2748 = vdwg.mxu0
    %2749 = vmatprep.subr.bf16.mxu0 0
    %2750 = vmatpush1.bf16.msra.mxu0 %v2676
    %2751 = vmatprep.subr.bf16.mxu0 0
    %2752 = vmatpush1.bf16.msra.mxu0 %v2677
    %2753 = vmatprep.subr.bf16.mxu0 0
    %2754 = vmatpush1.bf16.msra.mxu0 %v2678
    %2755 = vmatprep.subr.bf16.mxu0 0
    %2756 = vmatpush1.bf16.msra.mxu0 %v2679
    %2757 = vmatprep.subr.bf16.mxu0 0
    %2758 = vmatpush1.bf16.msra.mxu0 %v2680
    %2759 = vmatprep.subr.bf16.mxu0 0
    %2760 = vmatpush1.bf16.msra.mxu0 %v2681
    %2761 = vmatprep.subr.bf16.mxu0 0
    %2762 = vmatpush1.bf16.msra.mxu0 %v2682
    %2763 = vmatprep.subr.bf16.mxu0 0
    %2764 = vmatpush1.bf16.msra.mxu0 %v2683
    %2765 = vmatprep.subr.bf16.mxu0 0
    %2766 = vmatpush1.bf16.msra.mxu0 0
    %2767 = vmatprep.subr.bf16.mxu0 0
    %2768 = vmatpush1.bf16.msra.mxu0 0
    %2769 = vmatprep.subr.bf16.mxu0 0
    %2770 = vmatpush1.bf16.msra.mxu0 0
    %2771 = vmatprep.subr.bf16.mxu0 0
    %2772 = vmatpush1.bf16.msra.mxu0 0
    %2773 = vmatprep.subr.bf16.mxu0 0
    %2774 = vmatpush1.bf16.msra.mxu0 0
    %2775 = vmatprep.subr.bf16.mxu0 0
    %2776 = vmatpush1.bf16.msra.mxu0 0
    %2777 = vmatprep.subr.bf16.mxu0 0
    %2778 = vmatpush1.bf16.msra.mxu0 0
    %2779 = vmatprep.subr.bf16.mxu0 0
    %2780 = vmatpush1.bf16.msra.mxu0 0
    %2781 = vmatprep.mubr.bf16.mxu0 0
    %2782 = vmatmul.mubr.bf16.gmra.mrb[0].mxu0 %v1464
    %v2783 = vpop.f32.mrb[0].mxu0
    %v2784 = vadd.f32 %v2743, %v2783
    %v2785 = vpop.f32.mrb[0].mxu0
    %v2786 = vpop.f32.mrb[0].mxu0
    %v2787 = vadd.f32 %v2746, %v2786
    %v2788 = vpop.f32.mrb[0].mxu0
    %2789 = vdwg.mxu0
    %v2888 = vunpack.c.l.b16 %v2418
    %v2889 = vunpack.c.l.b16 %v2419
    %v2890 = vunpack.c.l.b16 %v2420
    %v2891 = vunpack.c.l.b16 %v2421
    %v2892 = vunpack.c.l.b16 %v2422
    %v2893 = vunpack.c.l.b16 %v2423
    %v2894 = vunpack.c.l.b16 %v2424
    %v2895 = vunpack.c.l.b16 %v2425
    %v2896 = vunpack.c.l.b16 %v2426
    %v2897 = vunpack.c.l.b16 %v2427
    %v2898 = vunpack.c.l.b16 %v2428
    %v2899 = vunpack.c.l.b16 %v2429
    %v2900 = vunpack.c.l.b16 %v2430
    %v2901 = vunpack.c.l.b16 %v2431
    %v2902 = vunpack.c.l.b16 %v2432
    %v2903 = vunpack.c.l.b16 %v2433
    %v2904 = vunpack.c.l.b16 %v2434
    %v2905 = vunpack.c.l.b16 %v2435
    %v2906 = vunpack.c.l.b16 %v2436
    %v2907 = vunpack.c.l.b16 %v2437
    %v2908 = vunpack.c.l.b16 %v2438
    %v2909 = vunpack.c.l.b16 %v2439
    %v2910 = vunpack.c.l.b16 %v2440
    %v2911 = vunpack.c.l.b16 %v2441
    %v2912 = vunpack.c.l.b16 %v2442
    %v2913 = vunpack.c.l.b16 %v2443
    %v2914 = vunpack.c.l.b16 %v2444
    %v2915 = vunpack.c.l.b16 %v2445
    %v2916 = vunpack.c.l.b16 %v2446
    %v2917 = vunpack.c.l.b16 %v2447
    %v2918 = vunpack.c.l.b16 %v2448
    %v2919 = vunpack.c.l.b16 %v2449
    %v2920 = vunpack.c.l.b16 %v2450
    %v2921 = vunpack.c.l.b16 %v2451
    %v2922 = vunpack.c.l.b16 %v2452
    %v2923 = vunpack.c.l.b16 %v2453
    %v2924 = vunpack.c.l.b16 %v2454
    %v2925 = vunpack.c.l.b16 %v2455
    %v2926 = vunpack.c.l.b16 %v2456
    %v2927 = vunpack.c.l.b16 %v2457
    %v2928 = vunpack.c.l.b16 %v2458
    %v2929 = vunpack.c.l.b16 %v2459
    %v2930 = vunpack.c.l.b16 %v2460
    %v2931 = vunpack.c.l.b16 %v2461
    %v2932 = vunpack.c.l.b16 %v2462
    %v2933 = vunpack.c.l.b16 %v2463
    %v2934 = vunpack.c.l.b16 %v2464
    %v2935 = vunpack.c.l.b16 %v2465
    %v2936 = vunpack.c.l.b16 %v2466
    %v2937 = vunpack.c.l.b16 %v2467
    %v2938 = vunpack.c.l.b16 %v2468
    %v2939 = vunpack.c.l.b16 %v2469
    %v2940 = vunpack.c.l.b16 %v2470
    %v2941 = vunpack.c.l.b16 %v2471
    %v2942 = vunpack.c.l.b16 %v2472
    %v2943 = vunpack.c.l.b16 %v2473
    %v2944 = vunpack.c.l.b16 %v2474
    %v2945 = vunpack.c.l.b16 %v2475
    %v2946 = vunpack.c.l.b16 %v2476
    %v2947 = vunpack.c.l.b16 %v2477
    %v2948 = vunpack.c.l.b16 %v2478
    %v2949 = vunpack.c.l.b16 %v2479
    %v2950 = vunpack.c.l.b16 %v2480
    %v2951 = vunpack.c.l.b16 %v2481
    %v2952 = vunpack.c.l.b16 %v2482
    %v2953 = vunpack.c.l.b16 %v2483
    %v2954 = vunpack.c.l.b16 %v2484
    %v2955 = vunpack.c.l.b16 %v2485
    %v2956 = vunpack.c.l.b16 %v2486
    %v2957 = vunpack.c.l.b16 %v2487
    %v2958 = vunpack.c.l.b16 %v2488
    %v2959 = vunpack.c.l.b16 %v2489
    %v2960 = vunpack.c.l.b16 %v2490
    %v2961 = vunpack.c.l.b16 %v2491
    %v2962 = vunpack.c.l.b16 %v2492
    %v2963 = vunpack.c.l.b16 %v2493
    %v2964 = vunpack.c.l.b16 %v2494
    %v2965 = vunpack.c.l.b16 %v2495
    %v2966 = vunpack.c.l.b16 %v2496
    %v2967 = vunpack.c.l.b16 %v2497
    %v2968 = vunpack.c.l.b16 %v2498
    %v2969 = vunpack.c.l.b16 %v2499
    %v2970 = vunpack.c.l.b16 %v2500
    %v2971 = vunpack.c.l.b16 %v2501
    %v2972 = vunpack.c.l.b16 %v2502
    %v2973 = vunpack.c.l.b16 %v2503
    %v2974 = vunpack.c.l.b16 %v2504
    %v2975 = vunpack.c.l.b16 %v2505
    %v2976 = vunpack.c.l.b16 %v2506
    %v2977 = vunpack.c.l.b16 %v2507
    %v2978 = vunpack.c.l.b16 %v2508
    %v2979 = vunpack.c.l.b16 %v2509
    %v2980 = vunpack.c.l.b16 %v2510
    %v2981 = vunpack.c.l.b16 %v2511
    %v2982 = vunpack.c.l.b16 %v2512
    %v2983 = vunpack.c.l.b16 %v2513
    %v2984 = vunpack.c.l.b16 %v2514
    %v2985 = vunpack.c.l.b16 %v2515
    %v2986 = vpack.c.b16 %v2889, %v2888
    %v2987 = vpack.c.b16 %v2891, %v2890
    %v2988 = vpack.c.b16 %v2893, %v2892
    %v2989 = vpack.c.b16 %v2895, %v2894
    %v2990 = vpack.c.b16 %v2897, %v2896
    %v2991 = vpack.c.b16 %v2899, %v2898
    %v2992 = vpack.c.b16 %v2901, %v2900
    %v2993 = vpack.c.b16 %v2903, %v2902
    %v2994 = vpack.c.b16 %v2905, %v2904
    %v2995 = vpack.c.b16 %v2907, %v2906
    %v2996 = vpack.c.b16 %v2909, %v2908
    %v2997 = vpack.c.b16 %v2911, %v2910
    %v2998 = vpack.c.b16 %v2913, %v2912
    %v2999 = vpack.c.b16 %v2915, %v2914
    %v3000 = vpack.c.b16 %v2917, %v2916
    %v3001 = vpack.c.b16 %v2919, %v2918
    %v3002 = vpack.c.b16 %v2921, %v2920
    %v3003 = vpack.c.b16 %v2923, %v2922
    %v3004 = vpack.c.b16 %v2925, %v2924
    %v3005 = vpack.c.b16 %v2927, %v2926
    %v3006 = vpack.c.b16 %v2929, %v2928
    %v3007 = vpack.c.b16 %v2931, %v2930
    %v3008 = vpack.c.b16 %v2933, %v2932
    %v3009 = vpack.c.b16 %v2935, %v2934
    %v3010 = vpack.c.b16 %v2937, %v2936
    %v3011 = vpack.c.b16 %v2939, %v2938
    %v3012 = vpack.c.b16 %v2941, %v2940
    %v3013 = vpack.c.b16 %v2943, %v2942
    %v3014 = vpack.c.b16 %v2945, %v2944
    %v3015 = vpack.c.b16 %v2947, %v2946
    %v3016 = vpack.c.b16 %v2949, %v2948
    %v3017 = vpack.c.b16 %v2951, %v2950
    %v3018 = vpack.c.b16 %v2953, %v2952
    %v3019 = vpack.c.b16 %v2955, %v2954
    %v3020 = vpack.c.b16 %v2957, %v2956
    %v3021 = vpack.c.b16 %v2959, %v2958
    %v3022 = vpack.c.b16 %v2961, %v2960
    %v3023 = vpack.c.b16 %v2963, %v2962
    %v3024 = vpack.c.b16 %v2965, %v2964
    %v3025 = vpack.c.b16 %v2967, %v2966
    %v3026 = vpack.c.b16 %v2969, %v2968
    %v3027 = vpack.c.b16 %v2971, %v2970
    %v3028 = vpack.c.b16 %v2973, %v2972
    %v3029 = vpack.c.b16 %v2975, %v2974
    %v3030 = vpack.c.b16 %v2977, %v2976
    %v3031 = vpack.c.b16 %v2979, %v2978
    %v3032 = vpack.c.b16 %v2981, %v2980
    %v3033 = vpack.c.b16 %v2983, %v2982
    %v3034 = vpack.c.b16 %v2985, %v2984
    %3084 = vmatprep.subr.bf16.mxu0 0
    %3085 = vmatpush1.bf16.msra.mxu0 %v2986
    %3086 = vmatprep.subr.bf16.mxu0 0
    %3087 = vmatpush1.bf16.msra.mxu0 %v2987
    %3088 = vmatprep.subr.bf16.mxu0 0
    %3089 = vmatpush1.bf16.msra.mxu0 %v2988
    %3090 = vmatprep.subr.bf16.mxu0 0
    %3091 = vmatpush1.bf16.msra.mxu0 %v2989
    %3092 = vmatprep.subr.bf16.mxu0 0
    %3093 = vmatpush1.bf16.msra.mxu0 %v2990
    %3094 = vmatprep.subr.bf16.mxu0 0
    %3095 = vmatpush1.bf16.msra.mxu0 %v2991
    %3096 = vmatprep.subr.bf16.mxu0 0
    %3097 = vmatpush1.bf16.msra.mxu0 %v2992
    %3098 = vmatprep.subr.bf16.mxu0 0
    %3099 = vmatpush1.bf16.msra.mxu0 %v2993
    %3100 = vmatprep.subr.bf16.mxu0 0
    %3101 = vmatpush1.bf16.msra.mxu0 %v2994
    %3102 = vmatprep.subr.bf16.mxu0 0
    %3103 = vmatpush1.bf16.msra.mxu0 %v2995
    %3104 = vmatprep.subr.bf16.mxu0 0
    %3105 = vmatpush1.bf16.msra.mxu0 %v2996
    %3106 = vmatprep.subr.bf16.mxu0 0
    %3107 = vmatpush1.bf16.msra.mxu0 %v2997
    %3108 = vmatprep.subr.bf16.mxu0 0
    %3109 = vmatpush1.bf16.msra.mxu0 %v2998
    %3110 = vmatprep.subr.bf16.mxu0 0
    %3111 = vmatpush1.bf16.msra.mxu0 %v2999
    %3112 = vmatprep.subr.bf16.mxu0 0
    %3113 = vmatpush1.bf16.msra.mxu0 %v3000
    %3114 = vmatprep.subr.bf16.mxu0 0
    %3115 = vmatpush1.bf16.msra.mxu0 %v3001
    %3116 = vmatprep.mubr.bf16.mxu0 %v108
    %3117 = vmatmul.mubr.bf16.gmra.mrb[0].mxu0 %v107
    %v3118 = vpop.f32.mrb[0].mxu0
    %v3119 = vadd.f32 %v2784, %v3118
    %v3120 = vpop.f32.mrb[0].mxu0
    %v3121 = vpop.f32.mrb[0].mxu0
    %v3122 = vadd.f32 %v2787, %v3121
    %v3123 = vpop.f32.mrb[0].mxu0
    %3124 = vdwg.mxu0
    %3125 = vmatprep.subr.bf16.mxu0 0
    %3126 = vmatpush1.bf16.msra.mxu0 %v3002
    %3127 = vmatprep.subr.bf16.mxu0 0
    %3128 = vmatpush1.bf16.msra.mxu0 %v3003
    %3129 = vmatprep.subr.bf16.mxu0 0
    %3130 = vmatpush1.bf16.msra.mxu0 %v3004
    %3131 = vmatprep.subr.bf16.mxu0 0
    %3132 = vmatpush1.bf16.msra.mxu0 %v3005
    %3133 = vmatprep.subr.bf16.mxu0 0
    %3134 = vmatpush1.bf16.msra.mxu0 %v3006
    %3135 = vmatprep.subr.bf16.mxu0 0
    %3136 = vmatpush1.bf16.msra.mxu0 %v3007
    %3137 = vmatprep.subr.bf16.mxu0 0
    %3138 = vmatpush1.bf16.msra.mxu0 %v3008
    %3139 = vmatprep.subr.bf16.mxu0 0
    %3140 = vmatpush1.bf16.msra.mxu0 %v3009
    %3141 = vmatprep.subr.bf16.mxu0 0
    %3142 = vmatpush1.bf16.msra.mxu0 %v3010
    %3143 = vmatprep.subr.bf16.mxu0 0
    %3144 = vmatpush1.bf16.msra.mxu0 %v3011
    %3145 = vmatprep.subr.bf16.mxu0 0
    %3146 = vmatpush1.bf16.msra.mxu0 %v3012
    %3147 = vmatprep.subr.bf16.mxu0 0
    %3148 = vmatpush1.bf16.msra.mxu0 %v3013
    %3149 = vmatprep.subr.bf16.mxu0 0
    %3150 = vmatpush1.bf16.msra.mxu0 %v3014
    %3151 = vmatprep.subr.bf16.mxu0 0
    %3152 = vmatpush1.bf16.msra.mxu0 %v3015
    %3153 = vmatprep.subr.bf16.mxu0 0
    %3154 = vmatpush1.bf16.msra.mxu0 %v3016
    %3155 = vmatprep.subr.bf16.mxu0 0
    %3156 = vmatpush1.bf16.msra.mxu0 %v3017
    %3157 = vmatprep.mubr.bf16.mxu0 %v110
    %3158 = vmatmul.mubr.bf16.gmra.mrb[0].mxu0 %v109
    %v3159 = vpop.f32.mrb[0].mxu0
    %v3160 = vadd.f32 %v3119, %v3159
    %v3161 = vpop.f32.mrb[0].mxu0
    %v3162 = vpop.f32.mrb[0].mxu0
    %v3163 = vadd.f32 %v3122, %v3162
    %v3164 = vpop.f32.mrb[0].mxu0
    %3165 = vdwg.mxu0
    %3166 = vmatprep.subr.bf16.mxu0 0
    %3167 = vmatpush1.bf16.msra.mxu0 %v3018
    %3168 = vmatprep.subr.bf16.mxu0 0
    %3169 = vmatpush1.bf16.msra.mxu0 %v3019
    %3170 = vmatprep.subr.bf16.mxu0 0
    %3171 = vmatpush1.bf16.msra.mxu0 %v3020
    %3172 = vmatprep.subr.bf16.mxu0 0
    %3173 = vmatpush1.bf16.msra.mxu0 %v3021
    %3174 = vmatprep.subr.bf16.mxu0 0
    %3175 = vmatpush1.bf16.msra.mxu0 %v3022
    %3176 = vmatprep.subr.bf16.mxu0 0
    %3177 = vmatpush1.bf16.msra.mxu0 %v3023
    %3178 = vmatprep.subr.bf16.mxu0 0
    %3179 = vmatpush1.bf16.msra.mxu0 %v3024
    %3180 = vmatprep.subr.bf16.mxu0 0
    %3181 = vmatpush1.bf16.msra.mxu0 %v3025
    %3182 = vmatprep.subr.bf16.mxu0 0
    %3183 = vmatpush1.bf16.msra.mxu0 %v3026
    %3184 = vmatprep.subr.bf16.mxu0 0
    %3185 = vmatpush1.bf16.msra.mxu0 %v3027
    %3186 = vmatprep.subr.bf16.mxu0 0
    %3187 = vmatpush1.bf16.msra.mxu0 %v3028
    %3188 = vmatprep.subr.bf16.mxu0 0
    %3189 = vmatpush1.bf16.msra.mxu0 %v3029
    %3190 = vmatprep.subr.bf16.mxu0 0
    %3191 = vmatpush1.bf16.msra.mxu0 %v3030
    %3192 = vmatprep.subr.bf16.mxu0 0
    %3193 = vmatpush1.bf16.msra.mxu0 %v3031
    %3194 = vmatprep.subr.bf16.mxu0 0
    %3195 = vmatpush1.bf16.msra.mxu0 %v3032
    %3196 = vmatprep.subr.bf16.mxu0 0
    %3197 = vmatpush1.bf16.msra.mxu0 %v3033
    %3198 = vmatprep.mubr.bf16.mxu0 %v112
    %3199 = vmatmul.mubr.bf16.gmra.mrb[0].mxu0 %v111
    %v3200 = vpop.f32.mrb[0].mxu0
    %v3201 = vadd.f32 %v3160, %v3200
    %v3202 = vpop.f32.mrb[0].mxu0
    %v3203 = vpop.f32.mrb[0].mxu0
    %v3204 = vadd.f32 %v3163, %v3203
    %v3205 = vpop.f32.mrb[0].mxu0
    %3206 = vdwg.mxu0
    %3207 = vmatprep.subr.bf16.mxu0 0
    %3208 = vmatpush1.bf16.msra.mxu0 %v3034
    %3209 = vmatprep.subr.bf16.mxu0 0
    %3210 = vmatpush1.bf16.msra.mxu0 0
    %3211 = vmatprep.subr.bf16.mxu0 0
    %3212 = vmatpush1.bf16.msra.mxu0 0
    %3213 = vmatprep.subr.bf16.mxu0 0
    %3214 = vmatpush1.bf16.msra.mxu0 0
    %3215 = vmatprep.subr.bf16.mxu0 0
    %3216 = vmatpush1.bf16.msra.mxu0 0
    %3217 = vmatprep.subr.bf16.mxu0 0
    %3218 = vmatpush1.bf16.msra.mxu0 0
    %3219 = vmatprep.subr.bf16.mxu0 0
    %3220 = vmatpush1.bf16.msra.mxu0 0
    %3221 = vmatprep.subr.bf16.mxu0 0
    %3222 = vmatpush1.bf16.msra.mxu0 0
    %3223 = vmatprep.subr.bf16.mxu0 0
    %3224 = vmatpush1.bf16.msra.mxu0 0
    %3225 = vmatprep.subr.bf16.mxu0 0
    %3226 = vmatpush1.bf16.msra.mxu0 0
    %3227 = vmatprep.subr.bf16.mxu0 0
    %3228 = vmatpush1.bf16.msra.mxu0 0
    %3229 = vmatprep.subr.bf16.mxu0 0
    %3230 = vmatpush1.bf16.msra.mxu0 0
    %3231 = vmatprep.subr.bf16.mxu0 0
    %3232 = vmatpush1.bf16.msra.mxu0 0
    %3233 = vmatprep.subr.bf16.mxu0 0
    %3234 = vmatpush1.bf16.msra.mxu0 0
    %3235 = vmatprep.subr.bf16.mxu0 0
    %3236 = vmatpush1.bf16.msra.mxu0 0
    %3237 = vmatprep.subr.bf16.mxu0 0
    %3238 = vmatpush1.bf16.msra.mxu0 0
    %3239 = vmatprep.mubr.bf16.mxu0 0
    %3240 = vmatmul.mubr.bf16.gmra.mrb[0].mxu0 %v1118
    %v3241 = vpop.f32.mrb[0].mxu0
    %v3242 = vadd.f32 %v3201, %v3241
    %v3243 = vpop.f32.mrb[0].mxu0
    %v3244 = vpop.f32.mrb[0].mxu0
    %v3245 = vadd.f32 %v3204, %v3244
    %v3246 = vpop.f32.mrb[0].mxu0
    %3247 = vdwg.mxu0
    %v3248 = vld [vmem:[#allocation7] sm:$0xf]
    %v3249 = vld [vmem:[#allocation7 + $0x4] sm:$0xf]
    %v3250 = vld [vmem:[#allocation7 + $0x8] sm:$0xf]
    %v3251 = vld [vmem:[#allocation7 + $0xc] sm:$0xf]
    %v3252 = vld [vmem:[#allocation7 + $0x10] sm:$0xf]
    %v3253 = vld [vmem:[#allocation7 + $0x14] sm:$0xf]
    %v3254 = vld [vmem:[#allocation7 + $0x18] sm:$0xf]
    %v3255 = vld [vmem:[#allocation7 + $0x1c] sm:$0xf]
    %v3256 = vld [vmem:[#allocation7 + $0x20] sm:$0xf]
    %v3257 = vld [vmem:[#allocation7 + $0x24] sm:$0xf]
    %v3258 = vld [vmem:[#allocation7 + $0x28] sm:$0xf]
    %v3259 = vld [vmem:[#allocation7 + $0x2c] sm:$0xf]
    %v3260 = vld [vmem:[#allocation7 + $0x30] sm:$0xf]
    %v3261 = vld [vmem:[#allocation7 + $0x34] sm:$0xf]
    %v3262 = vld [vmem:[#allocation7 + $0x38] sm:$0xf]
    %v3263 = vld [vmem:[#allocation7 + $0x3c] sm:$0xf]
    %v3264 = vld [vmem:[#allocation7 + $0x40] sm:$0xf]
    %v3265 = vld [vmem:[#allocation7 + $0x44] sm:$0xf]
    %v3266 = vld [vmem:[#allocation7 + $0x48] sm:$0xf]
    %v3267 = vld [vmem:[#allocation7 + $0x4c] sm:$0xf]
    %v3268 = vld [vmem:[#allocation7 + $0x50] sm:$0xf]
    %v3269 = vld [vmem:[#allocation7 + $0x54] sm:$0xf]
    %v3270 = vld [vmem:[#allocation7 + $0x58] sm:$0xf]
    %v3271 = vld [vmem:[#allocation7 + $0x5c] sm:$0xf]
    %v3272 = vld [vmem:[#allocation7 + $0x60] sm:$0xf]
    %v3273 = vld [vmem:[#allocation7 + $0x64] sm:$0xf]
    %v3274 = vld [vmem:[#allocation7 + $0x68] sm:$0xf]
    %v3275 = vld [vmem:[#allocation7 + $0x6c] sm:$0xf]
    %v3276 = vld [vmem:[#allocation7 + $0x70] sm:$0xf]
    %v3277 = vld [vmem:[#allocation7 + $0x74] sm:$0xf]
    %v3278 = vld [vmem:[#allocation7 + $0x78] sm:$0xf]
    %v3279 = vld [vmem:[#allocation7 + $0x7c] sm:$0xf]
    %v3280 = vld [vmem:[#allocation7 + $0x80] sm:$0xf]
    %v3281 = vld [vmem:[#allocation7 + $0x84] sm:$0xf]
    %v3282 = vld [vmem:[#allocation7 + $0x88] sm:$0xf]
    %v3283 = vld [vmem:[#allocation7 + $0x8c] sm:$0xf]
    %v3284 = vld [vmem:[#allocation7 + $0x90] sm:$0xf]
    %v3285 = vld [vmem:[#allocation7 + $0x94] sm:$0xf]
    %v3286 = vld [vmem:[#allocation7 + $0x98] sm:$0xf]
    %v3287 = vld [vmem:[#allocation7 + $0x9c] sm:$0xf]
    %v3288 = vld [vmem:[#allocation7 + $0xa0] sm:$0xf]
    %v3289 = vld [vmem:[#allocation7 + $0xa4] sm:$0xf]
    %v3290 = vld [vmem:[#allocation7 + $0xa8] sm:$0xf]
    %v3291 = vld [vmem:[#allocation7 + $0xac] sm:$0xf]
    %v3292 = vld [vmem:[#allocation7 + $0xb0] sm:$0xf]
    %v3293 = vld [vmem:[#allocation7 + $0xb4] sm:$0xf]
    %v3294 = vld [vmem:[#allocation7 + $0xb8] sm:$0xf]
    %v3295 = vld [vmem:[#allocation7 + $0xbc] sm:$0xf]
    %v3344 = vunpack.c.l.b16 %v3248
    %v3345 = vunpack.c.l.b16 %v3249
    %v3346 = vunpack.c.l.b16 %v3250
    %v3347 = vunpack.c.l.b16 %v3251
    %v3348 = vunpack.c.l.b16 %v3252
    %v3349 = vunpack.c.l.b16 %v3253
    %v3350 = vunpack.c.l.b16 %v3254
    %v3351 = vunpack.c.l.b16 %v3255
    %v3352 = vunpack.c.l.b16 %v3256
    %v3353 = vunpack.c.l.b16 %v3257
    %v3354 = vunpack.c.l.b16 %v3258
    %v3355 = vunpack.c.l.b16 %v3259
    %v3356 = vunpack.c.l.b16 %v3260
    %v3357 = vunpack.c.l.b16 %v3261
    %v3358 = vunpack.c.l.b16 %v3262
    %v3359 = vunpack.c.l.b16 %v3263
    %v3360 = vunpack.c.l.b16 %v3264
    %v3361 = vunpack.c.l.b16 %v3265
    %v3362 = vunpack.c.l.b16 %v3266
    %v3363 = vunpack.c.l.b16 %v3267
    %v3364 = vunpack.c.l.b16 %v3268
    %v3365 = vunpack.c.l.b16 %v3269
    %v3366 = vunpack.c.l.b16 %v3270
    %v3367 = vunpack.c.l.b16 %v3271
    %v3368 = vunpack.c.l.b16 %v3272
    %v3369 = vunpack.c.l.b16 %v3273
    %v3370 = vunpack.c.l.b16 %v3274
    %v3371 = vunpack.c.l.b16 %v3275
    %v3372 = vunpack.c.l.b16 %v3276
    %v3373 = vunpack.c.l.b16 %v3277
    %v3374 = vunpack.c.l.b16 %v3278
    %v3375 = vunpack.c.l.b16 %v3279
    %v3376 = vunpack.c.l.b16 %v3280
    %v3377 = vunpack.c.l.b16 %v3281
    %v3378 = vunpack.c.l.b16 %v3282
    %v3379 = vunpack.c.l.b16 %v3283
    %v3380 = vunpack.c.l.b16 %v3284
    %v3381 = vunpack.c.l.b16 %v3285
    %v3382 = vunpack.c.l.b16 %v3286
    %v3383 = vunpack.c.l.b16 %v3287
    %v3384 = vunpack.c.l.b16 %v3288
    %v3385 = vunpack.c.l.b16 %v3289
    %v3386 = vunpack.c.l.b16 %v3290
    %v3387 = vunpack.c.l.b16 %v3291
    %v3388 = vunpack.c.l.b16 %v3292
    %v3389 = vunpack.c.l.b16 %v3293
    %v3390 = vunpack.c.l.b16 %v3294
    %v3391 = vunpack.c.l.b16 %v3295
    %v3392 = vpack.c.b16 %v3345, %v3344
    %v3393 = vpack.c.b16 %v3347, %v3346
    %v3394 = vpack.c.b16 %v3349, %v3348
    %v3395 = vpack.c.b16 %v3351, %v3350
    %v3396 = vpack.c.b16 %v3353, %v3352
    %v3397 = vpack.c.b16 %v3355, %v3354
    %v3398 = vpack.c.b16 %v3357, %v3356
    %v3399 = vpack.c.b16 %v3359, %v3358
    %v3400 = vpack.c.b16 %v3361, %v3360
    %v3401 = vpack.c.b16 %v3363, %v3362
    %v3402 = vpack.c.b16 %v3365, %v3364
    %v3403 = vpack.c.b16 %v3367, %v3366
    %v3404 = vpack.c.b16 %v3369, %v3368
    %v3405 = vpack.c.b16 %v3371, %v3370
    %v3406 = vpack.c.b16 %v3373, %v3372
    %v3407 = vpack.c.b16 %v3375, %v3374
    %v3408 = vpack.c.b16 %v3377, %v3376
    %v3409 = vpack.c.b16 %v3379, %v3378
    %v3410 = vpack.c.b16 %v3381, %v3380
    %v3411 = vpack.c.b16 %v3383, %v3382
    %v3412 = vpack.c.b16 %v3385, %v3384
    %v3413 = vpack.c.b16 %v3387, %v3386
    %v3414 = vpack.c.b16 %v3389, %v3388
    %v3415 = vpack.c.b16 %v3391, %v3390
    %3440 = vmatprep.subr.bf16.mxu0 0
    %3441 = vmatpush1.bf16.msra.mxu0 %v3392
    %3442 = vmatprep.subr.bf16.mxu0 0
    %3443 = vmatpush1.bf16.msra.mxu0 %v3393
    %3444 = vmatprep.subr.bf16.mxu0 0
    %3445 = vmatpush1.bf16.msra.mxu0 %v3394
    %3446 = vmatprep.subr.bf16.mxu0 0
    %3447 = vmatpush1.bf16.msra.mxu0 %v3395
    %3448 = vmatprep.subr.bf16.mxu0 0
    %3449 = vmatpush1.bf16.msra.mxu0 %v3396
    %3450 = vmatprep.subr.bf16.mxu0 0
    %3451 = vmatpush1.bf16.msra.mxu0 %v3397
    %3452 = vmatprep.subr.bf16.mxu0 0
    %3453 = vmatpush1.bf16.msra.mxu0 %v3398
    %3454 = vmatprep.subr.bf16.mxu0 0
    %3455 = vmatpush1.bf16.msra.mxu0 %v3399
    %3456 = vmatprep.subr.bf16.mxu0 0
    %3457 = vmatpush1.bf16.msra.mxu0 %v3400
    %3458 = vmatprep.subr.bf16.mxu0 0
    %3459 = vmatpush1.bf16.msra.mxu0 %v3401
    %3460 = vmatprep.subr.bf16.mxu0 0
    %3461 = vmatpush1.bf16.msra.mxu0 %v3402
    %3462 = vmatprep.subr.bf16.mxu0 0
    %3463 = vmatpush1.bf16.msra.mxu0 %v3403
    %3464 = vmatprep.subr.bf16.mxu0 0
    %3465 = vmatpush1.bf16.msra.mxu0 %v3404
    %3466 = vmatprep.subr.bf16.mxu0 0
    %3467 = vmatpush1.bf16.msra.mxu0 %v3405
    %3468 = vmatprep.subr.bf16.mxu0 0
    %3469 = vmatpush1.bf16.msra.mxu0 %v3406
    %3470 = vmatprep.subr.bf16.mxu0 0
    %3471 = vmatpush1.bf16.msra.mxu0 %v3407
    %3472 = vmatprep.mubr.bf16.mxu0 %v2136
    %3473 = vmatmul.mubr.bf16.gmra.mrb[0].mxu0 %v2135
    %v3474 = vpop.f32.mrb[0].mxu0
    %v3475 = vadd.f32 0.0, %v3474
    %v3476 = vpop.f32.mrb[0].mxu0
    %v3477 = vpop.f32.mrb[0].mxu0
    %v3478 = vadd.f32 0.0, %v3477
    %v3479 = vpop.f32.mrb[0].mxu0
    %3480 = vdwg.mxu0
    %3481 = vmatprep.subr.bf16.mxu0 0
    %3482 = vmatpush1.bf16.msra.mxu0 %v3408
    %3483 = vmatprep.subr.bf16.mxu0 0
    %3484 = vmatpush1.bf16.msra.mxu0 %v3409
    %3485 = vmatprep.subr.bf16.mxu0 0
    %3486 = vmatpush1.bf16.msra.mxu0 %v3410
    %3487 = vmatprep.subr.bf16.mxu0 0
    %3488 = vmatpush1.bf16.msra.mxu0 %v3411
    %3489 = vmatprep.subr.bf16.mxu0 0
    %3490 = vmatpush1.bf16.msra.mxu0 %v3412
    %3491 = vmatprep.subr.bf16.mxu0 0
    %3492 = vmatpush1.bf16.msra.mxu0 %v3413
    %3493 = vmatprep.subr.bf16.mxu0 0
    %3494 = vmatpush1.bf16.msra.mxu0 %v3414
    %3495 = vmatprep.subr.bf16.mxu0 0
    %3496 = vmatpush1.bf16.msra.mxu0 %v3415
    %3497 = vmatprep.subr.bf16.mxu0 0
    %3498 = vmatpush1.bf16.msra.mxu0 0
    %3499 = vmatprep.subr.bf16.mxu0 0
    %3500 = vmatpush1.bf16.msra.mxu0 0
    %3501 = vmatprep.subr.bf16.mxu0 0
    %3502 = vmatpush1.bf16.msra.mxu0 0
    %3503 = vmatprep.subr.bf16.mxu0 0
    %3504 = vmatpush1.bf16.msra.mxu0 0
    %3505 = vmatprep.subr.bf16.mxu0 0
    %3506 = vmatpush1.bf16.msra.mxu0 0
    %3507 = vmatprep.subr.bf16.mxu0 0
    %3508 = vmatpush1.bf16.msra.mxu0 0
    %3509 = vmatprep.subr.bf16.mxu0 0
    %3510 = vmatpush1.bf16.msra.mxu0 0
    %3511 = vmatprep.subr.bf16.mxu0 0
    %3512 = vmatpush1.bf16.msra.mxu0 0
    %3513 = vmatprep.mubr.bf16.mxu0 0
    %3514 = vmatmul.mubr.bf16.gmra.mrb[0].mxu0 %v2137
    %v3515 = vpop.f32.mrb[0].mxu0
    %v3516 = vadd.f32 %v3475, %v3515
    %v3517 = vpop.f32.mrb[0].mxu0
    %v3518 = vpop.f32.mrb[0].mxu0
    %v3519 = vadd.f32 %v3478, %v3518
    %v3520 = vpop.f32.mrb[0].mxu0
    %3521 = vdwg.mxu0
    %v3522 = vadd.f32 %v3242, %v3516
    %v3523 = vadd.f32 %v3245, %v3519
    %v3525 = vlaneseq
    %v3526 = vshrl.u32 %v3525, 7
    %v3527 = vsub.s32 0, %v3526
    %v3528 = vrot.slane %v117, %v3527
    %v3530 = vadd.f32 %v3522, %v3528
    %v3531 = vadd.f32 %v3523, %v3528
    %v3532 = vtanh.pop %v3530
    %v3533 = vtanh.pop %v3531
    %v3534 = vpack.c.bf16 %v3533, %v3532
    %v3535 = vld [vmem:[%s7] sm:$0xf]
    %v3536 = vld [vmem:[%s7 + $0x4] sm:$0xf]
    %v3537 = vld [vmem:[%s7 + $0x8] sm:$0xf]
    %v3538 = vld [vmem:[%s7 + $0xc] sm:$0xf]
    %v3539 = vld [vmem:[%s7 + $0x10] sm:$0xf]
    %v3540 = vld [vmem:[%s7 + $0x14] sm:$0xf]
    %v3541 = vld [vmem:[%s7 + $0x18] sm:$0xf]
    %v3542 = vld [vmem:[%s7 + $0x1c] sm:$0xf]
    %v3543 = vld [vmem:[%s7 + $0x20] sm:$0xf]
    %v3544 = vld [vmem:[%s7 + $0x24] sm:$0xf]
    %v3545 = vld [vmem:[%s7 + $0x28] sm:$0xf]
    %v3546 = vld [vmem:[%s7 + $0x2c] sm:$0xf]
    %v3547 = vld [vmem:[%s7 + $0x30] sm:$0xf]
    %v3548 = vld [vmem:[%s7 + $0x34] sm:$0xf]
    %v3549 = vld [vmem:[%s7 + $0x38] sm:$0xf]
    %v3550 = vld [vmem:[%s7 + $0x3c] sm:$0xf]
    %v3552 = vlaneseq
    %v3553 = vshrl.u32 %v3552, 7
    %v3554 = vsub.s32 0, %v3553
    %v3555 = vrot.slane %v118, %v3554
    %v3573 = vunpack.c.l.b16 %v3535
    %v3574 = vunpack.c.l.b16 %v3536
    %v3575 = vunpack.c.l.b16 %v3537
    %v3576 = vunpack.c.l.b16 %v3538
    %v3577 = vunpack.c.l.b16 %v3539
    %v3578 = vunpack.c.l.b16 %v3540
    %v3579 = vunpack.c.l.b16 %v3541
    %v3580 = vunpack.c.l.b16 %v3542
    %v3581 = vunpack.c.l.b16 %v3543
    %v3582 = vunpack.c.l.b16 %v3544
    %v3583 = vunpack.c.l.b16 %v3545
    %v3584 = vunpack.c.l.b16 %v3546
    %v3585 = vunpack.c.l.b16 %v3547
    %v3586 = vunpack.c.l.b16 %v3548
    %v3587 = vunpack.c.l.b16 %v3549
    %v3588 = vunpack.c.l.b16 %v3550
    %v3589 = vpack.c.b16 %v3574, %v3573
    %v3590 = vpack.c.b16 %v3576, %v3575
    %v3591 = vpack.c.b16 %v3578, %v3577
    %v3592 = vpack.c.b16 %v3580, %v3579
    %v3593 = vpack.c.b16 %v3582, %v3581
    %v3594 = vpack.c.b16 %v3584, %v3583
    %v3595 = vpack.c.b16 %v3586, %v3585
    %v3596 = vpack.c.b16 %v3588, %v3587
    %3605 = vmatprep.subr.bf16.mxu0 0
    %3606 = vmatpush1.bf16.msra.mxu0 %v3589
    %3607 = vmatprep.subr.bf16.mxu0 0
    %3608 = vmatpush1.bf16.msra.mxu0 %v3590
    %3609 = vmatprep.subr.bf16.mxu0 0
    %3610 = vmatpush1.bf16.msra.mxu0 %v3591
    %3611 = vmatprep.subr.bf16.mxu0 0
    %3612 = vmatpush1.bf16.msra.mxu0 %v3592
    %3613 = vmatprep.subr.bf16.mxu0 0
    %3614 = vmatpush1.bf16.msra.mxu0 %v3593
    %3615 = vmatprep.subr.bf16.mxu0 0
    %3616 = vmatpush1.bf16.msra.mxu0 %v3594
    %3617 = vmatprep.subr.bf16.mxu0 0
    %3618 = vmatpush1.bf16.msra.mxu0 %v3595
    %3619 = vmatprep.subr.bf16.mxu0 0
    %3620 = vmatpush1.bf16.msra.mxu0 %v3596
    %3621 = vmatprep.subr.bf16.mxu0 0
    %3622 = vmatpush1.bf16.msra.mxu0 0
    %3623 = vmatprep.subr.bf16.mxu0 0
    %3624 = vmatpush1.bf16.msra.mxu0 0
    %3625 = vmatprep.subr.bf16.mxu0 0
    %3626 = vmatpush1.bf16.msra.mxu0 0
    %3627 = vmatprep.subr.bf16.mxu0 0
    %3628 = vmatpush1.bf16.msra.mxu0 0
    %3629 = vmatprep.subr.bf16.mxu0 0
    %3630 = vmatpush1.bf16.msra.mxu0 0
    %3631 = vmatprep.subr.bf16.mxu0 0
    %3632 = vmatpush1.bf16.msra.mxu0 0
    %3633 = vmatprep.subr.bf16.mxu0 0
    %3634 = vmatpush1.bf16.msra.mxu0 0
    %3635 = vmatprep.subr.bf16.mxu0 0
    %3636 = vmatpush1.bf16.msra.mxu0 0
    %3637 = vmatprep.mubr.bf16.mxu0 0
    %3638 = vmatmul.mubr.bf16.gmra.mrb[0].mxu0 %v3534
    %v3639 = vpop.f32.mrb[0].mxu0
    %v3640 = vadd.f32 %v3555, %v3639
    %v3641 = vpop.f32.mrb[0].mxu0
    %v3642 = vpop.f32.mrb[0].mxu0
    %v3643 = vadd.f32 %v3555, %v3642
    %v3644 = vpop.f32.mrb[0].mxu0
    %3645 = vdwg.mxu0
    %v3646 = vtanh.pop %v3640
    %v3647 = vtanh.pop %v3643
    %v3648 = vpack.c.bf16 %v3647, %v3646
    %v3649 = vld [vmem:[%s8] sm:$0xf]
    %v3650 = vld [vmem:[%s8 + $0x4] sm:$0xf]
    %v3651 = vld [vmem:[%s8 + $0x8] sm:$0xf]
    %v3652 = vld [vmem:[%s8 + $0xc] sm:$0xf]
    %v3653 = vld [vmem:[%s8 + $0x10] sm:$0xf]
    %v3654 = vld [vmem:[%s8 + $0x14] sm:$0xf]
    %v3655 = vld [vmem:[%s8 + $0x18] sm:$0xf]
    %v3656 = vld [vmem:[%s8 + $0x1c] sm:$0xf]
    %v3658 = vlaneseq
    %v3659 = vshrl.u32 %v3658, 7
    %v3660 = vsub.s32 0, %v3659
    %v3661 = vrot.slane %v119, %v3660
    %v3671 = vunpack.c.l.b16 %v3649
    %v3672 = vunpack.c.l.b16 %v3650
    %v3673 = vunpack.c.l.b16 %v3651
    %v3674 = vunpack.c.l.b16 %v3652
    %v3675 = vunpack.c.l.b16 %v3653
    %v3676 = vunpack.c.l.b16 %v3654
    %v3677 = vunpack.c.l.b16 %v3655
    %v3678 = vunpack.c.l.b16 %v3656
    %v3679 = vpack.c.b16 %v3672, %v3671
    %v3680 = vpack.c.b16 %v3674, %v3673
    %v3681 = vpack.c.b16 %v3676, %v3675
    %v3682 = vpack.c.b16 %v3678, %v3677
    %vm3687 = vcmask 523264
    %v3689 = vsel %vm3687, %v3648, 0
    %3691 = vmatprep.subr.bf16.mxu0 0
    %3692 = vmatpush1.bf16.msra.mxu0 %v3679
    %3693 = vmatprep.subr.bf16.mxu0 0
    %3694 = vmatpush1.bf16.msra.mxu0 %v3680
    %3695 = vmatprep.subr.bf16.mxu0 0
    %3696 = vmatpush1.bf16.msra.mxu0 %v3681
    %3697 = vmatprep.subr.bf16.mxu0 0
    %3698 = vmatpush1.bf16.msra.mxu0 %v3682
    %3699 = vmatprep.subr.bf16.mxu0 0
    %3700 = vmatpush1.bf16.msra.mxu0 0
    %3701 = vmatprep.subr.bf16.mxu0 0
    %3702 = vmatpush1.bf16.msra.mxu0 0
    %3703 = vmatprep.subr.bf16.mxu0 0
    %3704 = vmatpush1.bf16.msra.mxu0 0
    %3705 = vmatprep.subr.bf16.mxu0 0
    %3706 = vmatpush1.bf16.msra.mxu0 0
    %3707 = vmatprep.subr.bf16.mxu0 0
    %3708 = vmatpush1.bf16.msra.mxu0 0
    %3709 = vmatprep.subr.bf16.mxu0 0
    %3710 = vmatpush1.bf16.msra.mxu0 0
    %3711 = vmatprep.subr.bf16.mxu0 0
    %3712 = vmatpush1.bf16.msra.mxu0 0
    %3713 = vmatprep.subr.bf16.mxu0 0
    %3714 = vmatpush1.bf16.msra.mxu0 0
    %3715 = vmatprep.subr.bf16.mxu0 0
    %3716 = vmatpush1.bf16.msra.mxu0 0
    %3717 = vmatprep.subr.bf16.mxu0 0
    %3718 = vmatpush1.bf16.msra.mxu0 0
    %3719 = vmatprep.subr.bf16.mxu0 0
    %3720 = vmatpush1.bf16.msra.mxu0 0
    %3721 = vmatprep.subr.bf16.mxu0 0
    %3722 = vmatpush1.bf16.msra.mxu0 0
    %3723 = vmatprep.mubr.bf16.mxu0 0
    %3724 = vmatmul.mubr.bf16.gmra.mrb[0].mxu0 %v3689
    %v3725 = vpop.f32.mrb[0].mxu0
    %v3726 = vadd.f32 %v3661, %v3725
    %v3727 = vpop.f32.mrb[0].mxu0
    %v3728 = vpop.f32.mrb[0].mxu0
    %v3729 = vadd.f32 %v3661, %v3728
    %v3730 = vpop.f32.mrb[0].mxu0
    %3731 = vdwg.mxu0
    %vm3732 = vcmask 80896
    %v3733 = vsel %vm3732, %v2412, -inf
    %3734 = vmax.xlane.f32.xlu0 %v3733
    %v3735 = vpop.xlane.xlu0 %3734
    %v3736 = vsel %vm3732, %v2415, -inf
    %3737 = vmax.xlane.f32.xlu0 %v3736
    %v3738 = vpop.xlane.xlu0 %3737
    %v3739 = vsub.f32 %v2412, %v3735
    %v3740 = vsub.f32 %v2415, %v3738
    %v3741 = vmul.f32 %v3739, 1.442695
    %v3742 = vpow.pop %v3741
    %v3743 = vmul.f32 %v3740, 1.442695
    %v3744 = vpow.pop %v3743
    %v3745 = vsel %vm3732, %v3742, 0.0
    %3746 = vadd.xlane.f32.xlu0 %v3745
    %v3747 = vpop.xlane.xlu0 %3746
    %v3748 = vsel %vm3732, %v3744, 0.0
    %3749 = vadd.xlane.f32.xlu0 %v3748
    %v3750 = vpop.xlane.xlu0 %3749
    %v3751 = vlog2.pop %v3747
    %v3752 = vmul.f32 %v3751, 0.6931472
    %v3753 = vlog2.pop %v3750
    %v3754 = vmul.f32 %v3753, 0.6931472
    %v3755 = vsub.f32 %v3739, %v3752
    %v3756 = vsub.f32 %v3740, %v3754
    %v3757 = vsel %vm3732, %v3726, -inf
    %3758 = vmax.xlane.f32.xlu0 %v3757
    %v3759 = vpop.xlane.xlu0 %3758
    %v3760 = vsel %vm3732, %v3729, -inf
    %3761 = vmax.xlane.f32.xlu0 %v3760
    %v3762 = vpop.xlane.xlu0 %3761
    %v3763 = vsub.f32 %v3726, %v3759
    %v3764 = vsub.f32 %v3729, %v3762
    %v3765 = vmul.f32 %v3763, 1.442695
    %v3766 = vpow.pop %v3765
    %v3767 = vmul.f32 %v3764, 1.442695
    %v3768 = vpow.pop %v3767
    %v3769 = vsel %vm3732, %v3766, 0.0
    %3770 = vadd.xlane.f32.xlu0 %v3769
    %v3771 = vpop.xlane.xlu0 %3770
    %v3772 = vsel %vm3732, %v3768, 0.0
    %3773 = vadd.xlane.f32.xlu0 %v3772
    %v3774 = vpop.xlane.xlu0 %3773
    %v3775 = vlog2.pop %v3771
    %v3776 = vmul.f32 %v3775, 0.6931472
    %v3777 = vlog2.pop %v3774
    %v3778 = vmul.f32 %v3777, 0.6931472
    %v3779 = vsub.f32 %v3763, %v3776
    %v3780 = vsub.f32 %v3764, %v3778
    %v3781 = vsel %vm3732, %v3755, 0.0
    %v3782 = vsel %vm3732, %v3756, 0.0
    %3783 = vst [vmem:[%s10] sm:$0xff] %v3781
    %3784 = vst [vmem:[%s10 + $0x8] sm:$0xff] %v3782
    %v3785 = vsel %vm3732, %v3779, 0.0
    %v3786 = vsel %vm3732, %v3780, 0.0
    %3787 = vst [vmem:[%s11] sm:$0xff] %v3785
    %3788 = vst [vmem:[%s11 + $0x8] sm:$0xff] %v3786
    // Predicated region
    $region58: #{sidepass_forward.1} parent=1 // pred_check
      _
    $region59: #{sidepass_forward.1} parent=1 // pred_check_branch
      %3790 = sbr.rel (0) target = $region61
    $region60: #{sidepass_forward.1} parent=1 // pred_region
      _
    $region61: #{sidepass_forward.1} parent=1 // pred_fallthru
      _
    // Predicated region
    $region62: #{sidepass_forward.1} parent=1 // pred_check
      _
    $region63: #{sidepass_forward.1} parent=1 // pred_check_branch
      %3792 = sbr.rel (0) target = $region65
    $region64: #{sidepass_forward.1} parent=1 // pred_region
      _
    $region65: #{sidepass_forward.1} parent=1 // pred_fallthru
      _
    // Predicated region
    $region66: #{sidepass_forward.1} parent=1 // pred_check
      _
    $region67: #{sidepass_forward.1} parent=1 // pred_check_branch
      %3794 = sbr.rel (0) target = $region69
    $region68: #{sidepass_forward.1} parent=1 // pred_region
      _
    $region69: #{sidepass_forward.1} parent=1 // pred_fallthru
      _
    // Predicated region
    $region70: #{sidepass_forward.1} parent=1 // pred_check
      _
    $region71: #{sidepass_forward.1} parent=1 // pred_check_branch
      %3796 = sbr.rel (0) target = $region73
    $region72: #{sidepass_forward.1} parent=1 // pred_region
      _
    $region73: #{sidepass_forward.1} parent=1 // pred_fallthru
      _
    %3797 = vsyncpa [#allocation3], 1
    %3798 = vsyncpa [#allocation5], 1
    %3799 = vsyncpa [#allocation8], 1

</llo_original>
